<compile_context>
chip_gen: v7x
topology: tpu7x:2x2x1
jax: 0.10.0
libtpu: 0.0.40
codegen_flags: <defaults>
</compile_context>

<pallas_src>
import functools

import numpy as np
import jax
import jax.numpy as jnp
from jax import lax
from jax.experimental import pallas as pl
from jax.experimental.pallas import tpu as pltpu


def _pow(x, p):
    """Integer powers via square-and-multiply (bit-identical in XLA and Mosaic)."""
    p = float(p)
    if p.is_integer() and 1 <= p <= 16:
        n = int(p)
        result = None
        base = x
        while n > 0:
            if n & 1:
                result = base if result is None else result * base
            n >>= 1
            if n:
                base = base * base
        return result
    return jnp.power(x, p)


# --------------------------------------------------------------------------- #
# Pallas kernel: one batch element per grid step.
# --------------------------------------------------------------------------- #
def _tal_kernel(pd_scores_t_ref, pd_boxes_t_ref, gt_labels_ref, gt_boxes_ref,
                gt_vals_ref, mask_gt_ref,
                tlabels_ref, tboxes_ref, tscores_ref, mask_ref,
                *, topk, num_classes, alpha, beta, eps):
    f32 = jnp.float32
    scores_t = pd_scores_t_ref[0]      # (C, A) f32
    pbt = pd_boxes_t_ref[0]            # (4, A) f32
    glab = gt_labels_ref[0]            # (G, 1) i32
    gboxes = gt_boxes_ref[0]           # (G, 4) f32
    gvals = gt_vals_ref[0]             # (5, G) f32: rows = x1,y1,x2,y2,label
    gmask = mask_gt_ref[0]             # (G, 1) f32

    C, A = scores_t.shape
    G = gboxes.shape[0]

    px1, py1, px2, py2 = pbt[0:1, :], pbt[1:2, :], pbt[2:3, :], pbt[3:4, :]          # (1, A)
    gx1, gy1, gx2, gy2 = gboxes[:, 0:1], gboxes[:, 1:2], gboxes[:, 2:3], gboxes[:, 3:4]  # (G, 1)

    # ---- iou_calculator: pairwise IoU (G, A) --------------------------------
    iw = jnp.maximum(jnp.minimum(gx2, px2) - jnp.maximum(gx1, px1), 0.0)
    ih = jnp.maximum(jnp.minimum(gy2, py2) - jnp.maximum(gy1, py1), 0.0)
    inter = iw * ih
    area_g = jnp.maximum(gx2 - gx1, 0.0) * jnp.maximum(gy2 - gy1, 0.0)               # (G, 1)
    area_p = jnp.maximum(px2 - px1, 0.0) * jnp.maximum(py2 - py1, 0.0)               # (1, A)
    overlaps = inter / (area_g + area_p - inter + eps)                               # (G, A)

    # ---- score of each gt's class at every anchor: one MXU matmul -----------
    cls_iota = lax.broadcasted_iota(jnp.int32, (G, C), 1)                            # (G, C)
    lab_oh = (cls_iota == glab).astype(f32)                                          # (G, C) one-hot
    box_scores = jnp.dot(lab_oh, scores_t,
                         preferred_element_type=f32,
                         precision=lax.Precision.HIGHEST)                            # (G, A)

    align = _pow(box_scores, alpha) * _pow(overlaps, beta)                           # (G, A)

    # ---- select_candidates_in_gts: pd-box centers inside gt boxes -----------
    cx = (px1 + px2) * 0.5
    cy = (py1 + py2) * 0.5
    d_min = jnp.minimum(jnp.minimum(cx - gx1, cy - gy1),
                        jnp.minimum(gx2 - cx, gy2 - cy))
    in_gts = (d_min > eps).astype(f32)                                               # (G, A)

    # ---- top-k anchors per gt (iterative select, unrolled) -------------------
    a_iota = lax.broadcasted_iota(jnp.int32, (G, A), 1)
    neg = f32(-1e30)

    def topk_body(_, carry):
        remaining, cand = carry
        cur_max = jnp.max(remaining, axis=1, keepdims=True)
        first = jnp.min(jnp.where(remaining >= cur_max, a_iota, A),
                        axis=1, keepdims=True)
        sel = (a_iota == first).astype(f32)
        return jnp.where(sel > 0, neg, remaining), cand + sel

    _, cand = lax.fori_loop(0, topk, topk_body,
                            (align, jnp.zeros((G, A), f32)), unroll=True)

    cand = cand * gmask * in_gts                                                     # (G, A)

    # ---- anchors matched to several gts -> keep the max-IoU gt --------------
    g_iota = lax.broadcasted_iota(jnp.int32, (G, A), 0)
    multi = (jnp.sum(cand, axis=0, keepdims=True) > 1.0).astype(f32)                 # (1, A)
    multi_iou = overlaps * multi
    cand = cand * (1.0 - multi)
    col_max = jnp.max(multi_iou, axis=0, keepdims=True)
    best_g = jnp.min(jnp.where(multi_iou >= col_max, g_iota, G), axis=0, keepdims=True)
    cand = (g_iota == best_g).astype(f32) * multi + cand                             # (G, A) in {0,1}

    # ---- get_targets: stay in (G, A), emit lane-dense (·, A) outputs ---------
    anchor_mask = jnp.sum(cand, axis=0, keepdims=True) > 0.0                         # (1, A) bool
    col_max_c = jnp.max(cand, axis=0, keepdims=True)
    assigned_g = jnp.min(jnp.where(cand >= col_max_c, g_iota, G),
                         axis=0, keepdims=True)                                      # (1, A) argmax-over-G
    assign_oh = (g_iota == assigned_g).astype(f32)                                   # (G, A)

    # gather assigned gt (x1,y1,x2,y2,label) for every anchor: one MXU matmul.
    # one-hot contraction -> single-term sums, exact in fp32.
    targets5 = jnp.dot(gvals, assign_oh,
                       preferred_element_type=f32,
                       precision=lax.Precision.HIGHEST)                              # (5, A)
    tboxes_t = targets5[0:4, :]                                                      # (4, A)
    lab_row = targets5[4:5, :]                                                       # (1, A)
    lab_row_i = jnp.round(lab_row).astype(jnp.int32)
    tlabels = jnp.where(anchor_mask, lab_row_i, num_classes)                         # (1, A), bg = C

    # target scores = one_hot(label, C+1)[:, :C]; background matches nothing.
    # Built as onehot(labels)(C,G) @ (assign_oh * fg)(G,A) -> one MXU matmul.
    lab_lane = gvals[4:5, :].astype(jnp.int32)                                       # (1, G)
    c_iota = lax.broadcasted_iota(jnp.int32, (C, G), 0)                              # (C, G)
    lab_oh_t = (c_iota == lab_lane).astype(f32)                                      # (C, G)
    fg = anchor_mask.astype(f32)                                                     # (1, A)
    tscores_t = jnp.dot(lab_oh_t, assign_oh * fg,
                        preferred_element_type=f32,
                        precision=lax.Precision.HIGHEST)                             # (C, A)

    tlabels_ref[0] = tlabels
    tboxes_ref[0] = tboxes_t
    tscores_ref[0] = tscores_t
    mask_ref[0] = anchor_mask.astype(jnp.int32)


# --------------------------------------------------------------------------- #
# Wrapper (glue: layout transposes, specs, dtype plumbing).
# --------------------------------------------------------------------------- #
def task_aligned_assigner(pd_scores, pd_boxes, gt_labels, gt_boxes, mask_gt,
                          *, topk=13, num_classes=80, alpha=1.0, beta=6.0, eps=1e-9):
    bs, A, C = pd_scores.shape
    G = gt_boxes.shape[1]

    pd_scores_t = jnp.transpose(pd_scores.astype(jnp.float32), (0, 2, 1))   # (bs, C, A)
    pd_boxes_t = jnp.transpose(pd_boxes.astype(jnp.float32), (0, 2, 1))     # (bs, 4, A)
    gt_labels_f = gt_labels.reshape(bs, G, 1).astype(jnp.float32)
    gt_labels_i = gt_labels_f.astype(jnp.int32)
    gt_boxes_f = gt_boxes.astype(jnp.float32)
    mask_gt_f = mask_gt.reshape(bs, G, 1).astype(jnp.float32)
    # lane-major (5, G): rows x1,y1,x2,y2,label -> single-matmul target gather
    gt_vals_t = jnp.concatenate(
        [jnp.transpose(gt_boxes_f, (0, 2, 1)),
         jnp.transpose(gt_labels_f, (0, 2, 1))], axis=1)                     # (bs, 5, G)

    kernel = functools.partial(_tal_kernel, topk=topk, num_classes=num_classes,
                               alpha=alpha, beta=beta, eps=eps)

    # Lane-dense outputs: last dim is always A (multiple of 128) -> unmasked vst.
    out_shape = (
        jax.ShapeDtypeStruct((bs, 1, A), jnp.int32),     # target labels (row)
        jax.ShapeDtypeStruct((bs, 4, A), jnp.float32),   # target boxes  (coord-major)
        jax.ShapeDtypeStruct((bs, C, A), jnp.float32),   # target scores (class-major)
        jax.ShapeDtypeStruct((bs, 1, A), jnp.int32),     # foreground mask (row)
    )
    in_specs = [
        pl.BlockSpec((1, C, A), lambda b: (b, 0, 0)),
        pl.BlockSpec((1, 4, A), lambda b: (b, 0, 0)),
        pl.BlockSpec((1, G, 1), lambda b: (b, 0, 0)),
        pl.BlockSpec((1, G, 4), lambda b: (b, 0, 0)),
        pl.BlockSpec((1, 5, G), lambda b: (b, 0, 0)),
        pl.BlockSpec((1, G, 1), lambda b: (b, 0, 0)),
    ]
    out_specs = (
        pl.BlockSpec((1, 1, A), lambda b: (b, 0, 0)),
        pl.BlockSpec((1, 4, A), lambda b: (b, 0, 0)),
        pl.BlockSpec((1, C, A), lambda b: (b, 0, 0)),
        pl.BlockSpec((1, 1, A), lambda b: (b, 0, 0)),
    )
    tl, tb, ts, mk = pl.pallas_call(
        kernel,
        out_shape=out_shape,
        grid=(bs,),
        in_specs=in_specs,
        out_specs=out_specs,
        compiler_params=pltpu.CompilerParams(
            dimension_semantics=("parallel",),          # batch is independent (v7x 2 TCs)
            vmem_limit_bytes=32 * 1024 * 1024,          # ample; safe on v5e/v6e/v7x
        ),
    )(pd_scores_t, pd_boxes_t, gt_labels_i, gt_boxes_f, gt_vals_t, mask_gt_f)

    target_labels = tl[:, 0, :]                                   # (bs, A) int32
    target_boxes = jnp.transpose(tb, (0, 2, 1))                   # (bs, A, 4)
    target_scores = jnp.transpose(ts, (0, 2, 1))                  # (bs, A, C)
    mask = mk[:, 0, :].astype(bool)                               # (bs, A)
    return target_labels, target_boxes, target_scores, mask


# --------------------------------------------------------------------------- #
# Pure-JAX reference (mirrors the torch code) for verification.
# --------------------------------------------------------------------------- #
def _reference(pd_scores, pd_boxes, gt_labels, gt_boxes, mask_gt,
               *, topk, num_classes, alpha, beta, eps):
    bs, A, C = pd_scores.shape
    G = gt_boxes.shape[1]
    gl = gt_labels.reshape(bs, G).astype(jnp.int32)
    mg = mask_gt.reshape(bs, G).astype(jnp.float32)

    def per_batch(ps, pb, lab, gb, m):
        g = gb[:, None, :]
        p = pb[None, :, :]
        x1 = jnp.maximum(g[..., 0:1], p[..., 0:1])
        y1 = jnp.maximum(g[..., 1:2], p[..., 1:2])
        x2 = jnp.minimum(g[..., 2:3], p[..., 2:3])
        y2 = jnp.minimum(g[..., 3:4], p[..., 3:4])
        inter = (jnp.maximum(x2 - x1, 0.0) * jnp.maximum(y2 - y1, 0.0))[..., 0]
        ag = (jnp.maximum(g[..., 2:3] - g[..., 0:1], 0.0) *
              jnp.maximum(g[..., 3:4] - g[..., 1:2], 0.0))[..., 0]
        ap = (jnp.maximum(p[..., 2:3] - p[..., 0:1], 0.0) *
              jnp.maximum(p[..., 3:4] - p[..., 1:2], 0.0))[..., 0]
        ov = inter / (ag + ap - inter + eps)                           # (G, A)

        bscore = ps[:, lab].T                                          # (G, A)
        align = _pow(bscore, alpha) * _pow(ov, beta)

        cxy = (pb[:, :2] + pb[:, 2:]) * 0.5
        lt = cxy[None, :, :] - gb[:, None, :2]
        rb = gb[:, None, 2:] - cxy[None, :, :]
        in_gts = (jnp.minimum(lt.min(-1), rb.min(-1)) > eps).astype(jnp.float32)

        _, idxs = lax.top_k(align, topk)
        cand = jax.nn.one_hot(idxs, A).sum(-2)                         # (G, A)
        cand = cand * m[:, None] * in_gts
        multi = (cand.sum(0) > 1)[None, :]
        miou = ov * multi
        cand = cand * (~multi)
        bi = jnp.argmax(miou, axis=0)
        cand = jax.nn.one_hot(bi, G).T * multi + cand

        idx = cand.T                                                   # (A, G)
        mask = idx.sum(-1) > 0
        am = jnp.argmax(idx, axis=-1)
        tl = jnp.where(mask, lab[am], num_classes)
        tb = gb[am]
        ts = jax.nn.one_hot(tl, num_classes + 1)[:, :num_classes]
        return tl.astype(jnp.int32), tb, ts, mask

    return jax.vmap(per_batch)(pd_scores.astype(jnp.float32),
                               pd_boxes.astype(jnp.float32),
                               gl, gt_boxes.astype(jnp.float32), mg)


# --------------------------------------------------------------------------- #
if __name__ == "__main__":
    bs, A, G, C = 2, 256, 8, 80
    topk = 13

    key = jax.random.PRNGKey(0)
    ks = jax.random.split(key, 6)
    pd_scores = jax.nn.sigmoid(jax.random.normal(ks[0], (bs, A, C), dtype=jnp.float32))
    p_ctr = jax.random.uniform(ks[1], (bs, A, 2), minval=2.0, maxval=30.0)
    p_wh = jax.random.uniform(ks[2], (bs, A, 2), minval=1.0, maxval=8.0)
    pd_boxes = jnp.concatenate([p_ctr - 0.5 * p_wh, p_ctr + 0.5 * p_wh], axis=-1)
    g_ctr = jax.random.uniform(ks[3], (bs, G, 2), minval=4.0, maxval=28.0)
    g_wh = jax.random.uniform(ks[4], (bs, G, 2), minval=4.0, maxval=14.0)
    gt_boxes = jnp.concatenate([g_ctr - 0.5 * g_wh, g_ctr + 0.5 * g_wh], axis=-1)
    gt_labels = jax.random.randint(ks[5], (bs, G, 1), 0, C).astype(jnp.float32)

    n_valid = 6   # last two gt slots are padding
    valid = (lax.broadcasted_iota(jnp.int32, (bs, G, 1), 1) < n_valid).astype(jnp.float32)
    mask_gt = valid
    gt_boxes = gt_boxes * valid
    gt_labels = gt_labels * valid

    out = task_aligned_assigner(pd_scores, pd_boxes, gt_labels, gt_boxes, mask_gt,
                                topk=topk, num_classes=C, alpha=1.0, beta=6.0, eps=1e-9)
    out = jax.tree_util.tree_map(jax.block_until_ready, out)
    tl_k, tb_k, ts_k, mk_k = out

    tl_r, tb_r, ts_r, mk_r = _reference(pd_scores, pd_boxes, gt_labels, gt_boxes, mask_gt,
                                        topk=topk, num_classes=C, alpha=1.0, beta=6.0,
                                        eps=1e-9)

    np.testing.assert_array_equal(np.asarray(tl_k), np.asarray(tl_r))
    np.testing.assert_array_equal(np.asarray(mk_k), np.asarray(mk_r))
    np.testing.assert_allclose(np.asarray(tb_k), np.asarray(tb_r), rtol=1e-5, atol=1e-5)
    np.testing.assert_allclose(np.asarray(ts_k), np.asarray(ts_r), rtol=1e-5, atol=1e-5)

    print("KERNEL_OK")
</pallas_src>

<mosaic_0001>
module attributes {stable_mosaic.version = 11 : i64} {
  func.func @_tal_kernel(%arg0: i32, %arg1: memref<1x80x256xf32, #tpu.memory_space<vmem>>, %arg2: memref<1x4x256xf32, #tpu.memory_space<vmem>>, %arg3: memref<1x8x1xi32, #tpu.memory_space<vmem>>, %arg4: memref<1x8x4xf32, #tpu.memory_space<vmem>>, %arg5: memref<1x5x8xf32, #tpu.memory_space<vmem>>, %arg6: memref<1x8x1xf32, #tpu.memory_space<vmem>>, %arg7: memref<1x1x256xi32, #tpu.memory_space<vmem>>, %arg8: memref<1x4x256xf32, #tpu.memory_space<vmem>>, %arg9: memref<1x80x256xf32, #tpu.memory_space<vmem>>, %arg10: memref<1x1x256xi32, #tpu.memory_space<vmem>>) attributes {dimension_semantics = [#tpu.dimension_semantics<parallel>], iteration_bounds = array<i64: 2>, scalar_prefetch = 0 : i64, scratch_operands = 0 : i64, tpu.core_type = #tpu.core_type<tc>, window_params = [{transform_indices = @transform_0, window_bounds = array<i64: 1, 80, 256>}, {transform_indices = @transform_1, window_bounds = array<i64: 1, 4, 256>}, {transform_indices = @transform_2, window_bounds = array<i64: 1, 8, 1>}, {transform_indices = @transform_3, window_bounds = array<i64: 1, 8, 4>}, {transform_indices = @transform_4, window_bounds = array<i64: 1, 5, 8>}, {transform_indices = @transform_5, window_bounds = array<i64: 1, 8, 1>}, {transform_indices = @transform_6, window_bounds = array<i64: 1, 1, 256>}, {transform_indices = @transform_7, window_bounds = array<i64: 1, 4, 256>}, {transform_indices = @transform_8, window_bounds = array<i64: 1, 80, 256>}, {transform_indices = @transform_9, window_bounds = array<i64: 1, 1, 256>}]} {
    %c0 = arith.constant 0 : index
    %c0_0 = arith.constant 0 : index
    %c0_1 = arith.constant 0 : index
    %0 = vector.load %arg1[%c0, %c0_0, %c0_1] : memref<1x80x256xf32, #tpu.memory_space<vmem>>, vector<1x80x256xf32>
    %1 = vector.shape_cast %0 : vector<1x80x256xf32> to vector<80x256xf32>
    %c0_2 = arith.constant 0 : index
    %c0_3 = arith.constant 0 : index
    %c0_4 = arith.constant 0 : index
    %2 = vector.load %arg2[%c0_2, %c0_3, %c0_4] : memref<1x4x256xf32, #tpu.memory_space<vmem>>, vector<1x4x256xf32>
    %3 = vector.shape_cast %2 : vector<1x4x256xf32> to vector<4x256xf32>
    %c0_5 = arith.constant 0 : index
    %c0_6 = arith.constant 0 : index
    %c0_7 = arith.constant 0 : index
    %4 = vector.load %arg3[%c0_5, %c0_6, %c0_7] : memref<1x8x1xi32, #tpu.memory_space<vmem>>, vector<1x8x1xi32>
    %5 = vector.shape_cast %4 : vector<1x8x1xi32> to vector<8x1xi32>
    %c0_8 = arith.constant 0 : index
    %c0_9 = arith.constant 0 : index
    %c0_10 = arith.constant 0 : index
    %6 = vector.load %arg4[%c0_8, %c0_9, %c0_10] : memref<1x8x4xf32, #tpu.memory_space<vmem>>, vector<1x8x4xf32>
    %7 = vector.shape_cast %6 : vector<1x8x4xf32> to vector<8x4xf32>
    %c0_11 = arith.constant 0 : index
    %c0_12 = arith.constant 0 : index
    %c0_13 = arith.constant 0 : index
    %8 = vector.load %arg5[%c0_11, %c0_12, %c0_13] : memref<1x5x8xf32, #tpu.memory_space<vmem>>, vector<1x5x8xf32>
    %9 = vector.shape_cast %8 : vector<1x5x8xf32> to vector<5x8xf32>
    %c0_14 = arith.constant 0 : index
    %c0_15 = arith.constant 0 : index
    %c0_16 = arith.constant 0 : index
    %10 = vector.load %arg6[%c0_14, %c0_15, %c0_16] : memref<1x8x1xf32, #tpu.memory_space<vmem>>, vector<1x8x1xf32>
    %11 = vector.shape_cast %10 : vector<1x8x1xf32> to vector<8x1xf32>
    %12 = vector.extract_strided_slice %3 {offsets = [0, 0], sizes = [1, 256], strides = [1, 1]} : vector<4x256xf32> to vector<1x256xf32>
    %13 = vector.extract_strided_slice %3 {offsets = [1, 0], sizes = [1, 256], strides = [1, 1]} : vector<4x256xf32> to vector<1x256xf32>
    %14 = vector.extract_strided_slice %3 {offsets = [2, 0], sizes = [1, 256], strides = [1, 1]} : vector<4x256xf32> to vector<1x256xf32>
    %15 = vector.extract_strided_slice %3 {offsets = [3, 0], sizes = [1, 256], strides = [1, 1]} : vector<4x256xf32> to vector<1x256xf32>
    %16 = vector.extract_strided_slice %7 {offsets = [0, 0], sizes = [8, 1], strides = [1, 1]} : vector<8x4xf32> to vector<8x1xf32>
    %17 = vector.extract_strided_slice %7 {offsets = [0, 1], sizes = [8, 1], strides = [1, 1]} : vector<8x4xf32> to vector<8x1xf32>
    %18 = vector.extract_strided_slice %7 {offsets = [0, 2], sizes = [8, 1], strides = [1, 1]} : vector<8x4xf32> to vector<8x1xf32>
    %19 = vector.extract_strided_slice %7 {offsets = [0, 3], sizes = [8, 1], strides = [1, 1]} : vector<8x4xf32> to vector<8x1xf32>
    %20 = vector.broadcast %18 : vector<8x1xf32> to vector<8x256xf32>
    %21 = vector.broadcast %14 : vector<1x256xf32> to vector<8x256xf32>
    %22 = arith.minimumf %20, %21 : vector<8x256xf32>
    %23 = vector.broadcast %16 : vector<8x1xf32> to vector<8x256xf32>
    %24 = vector.broadcast %12 : vector<1x256xf32> to vector<8x256xf32>
    %25 = arith.maximumf %23, %24 : vector<8x256xf32>
    %26 = arith.subf %22, %25 : vector<8x256xf32>
    %cst = arith.constant 0.000000e+00 : f32
    %27 = vector.broadcast %cst : f32 to vector<8x256xf32>
    %28 = arith.maximumf %26, %27 : vector<8x256xf32>
    %29 = vector.broadcast %19 : vector<8x1xf32> to vector<8x256xf32>
    %30 = vector.broadcast %15 : vector<1x256xf32> to vector<8x256xf32>
    %31 = arith.minimumf %29, %30 : vector<8x256xf32>
    %32 = vector.broadcast %17 : vector<8x1xf32> to vector<8x256xf32>
    %33 = vector.broadcast %13 : vector<1x256xf32> to vector<8x256xf32>
    %34 = arith.maximumf %32, %33 : vector<8x256xf32>
    %35 = arith.subf %31, %34 : vector<8x256xf32>
    %cst_17 = arith.constant 0.000000e+00 : f32
    %36 = vector.broadcast %cst_17 : f32 to vector<8x256xf32>
    %37 = arith.maximumf %35, %36 : vector<8x256xf32>
    %38 = arith.mulf %28, %37 : vector<8x256xf32>
    %39 = arith.subf %18, %16 : vector<8x1xf32>
    %cst_18 = arith.constant 0.000000e+00 : f32
    %40 = vector.broadcast %cst_18 : f32 to vector<8x1xf32>
    %41 = arith.maximumf %39, %40 : vector<8x1xf32>
    %42 = arith.subf %19, %17 : vector<8x1xf32>
    %cst_19 = arith.constant 0.000000e+00 : f32
    %43 = vector.broadcast %cst_19 : f32 to vector<8x1xf32>
    %44 = arith.maximumf %42, %43 : vector<8x1xf32>
    %45 = arith.mulf %41, %44 : vector<8x1xf32>
    %46 = arith.subf %14, %12 : vector<1x256xf32>
    %cst_20 = arith.constant 0.000000e+00 : f32
    %47 = vector.broadcast %cst_20 : f32 to vector<1x256xf32>
    %48 = arith.maximumf %46, %47 : vector<1x256xf32>
    %49 = arith.subf %15, %13 : vector<1x256xf32>
    %cst_21 = arith.constant 0.000000e+00 : f32
    %50 = vector.broadcast %cst_21 : f32 to vector<1x256xf32>
    %51 = arith.maximumf %49, %50 : vector<1x256xf32>
    %52 = arith.mulf %48, %51 : vector<1x256xf32>
    %53 = vector.broadcast %45 : vector<8x1xf32> to vector<8x256xf32>
    %54 = vector.broadcast %52 : vector<1x256xf32> to vector<8x256xf32>
    %55 = arith.addf %53, %54 : vector<8x256xf32>
    %56 = arith.subf %55, %38 : vector<8x256xf32>
    %cst_22 = arith.constant 9.99999971E-10 : f32
    %57 = vector.broadcast %cst_22 : f32 to vector<8x256xf32>
    %58 = arith.addf %56, %57 : vector<8x256xf32>
    %59 = arith.divf %38, %58 : vector<8x256xf32>
    %60 = tpu.iota {dimensions = array<i32: 1>} : vector<8x80xi32>
    %61 = vector.broadcast %5 : vector<8x1xi32> to vector<8x80xi32>
    %62 = arith.cmpi eq, %60, %61 : vector<8x80xi32>
    %63 = arith.extui %62 : vector<8x80xi1> to vector<8x80xi32>
    %64 = arith.sitofp %63 : vector<8x80xi32> to vector<8x80xf32>
    %cst_23 = arith.constant dense<0.000000e+00> : vector<8x256xf32>
    %65 = tpu.matmul %64, %1, %cst_23 {dimension_numbers = #tpu.dot_dimension_numbers<[1], [0], [0], [1], [0, 0, 1, 1], [], []>, precision = #tpu.contract_precision<fp32>} : vector<8x80xf32>, vector<80x256xf32>, vector<8x256xf32> -> vector<8x256xf32>
    %66 = arith.mulf %59, %59 : vector<8x256xf32>
    %67 = arith.mulf %66, %66 : vector<8x256xf32>
    %68 = arith.mulf %66, %67 : vector<8x256xf32>
    %69 = arith.mulf %65, %68 : vector<8x256xf32>
    %70 = arith.addf %12, %14 : vector<1x256xf32>
    %cst_24 = arith.constant 5.000000e-01 : f32
    %71 = vector.broadcast %cst_24 : f32 to vector<1x256xf32>
    %72 = arith.mulf %70, %71 : vector<1x256xf32>
    %73 = arith.addf %13, %15 : vector<1x256xf32>
    %cst_25 = arith.constant 5.000000e-01 : f32
    %74 = vector.broadcast %cst_25 : f32 to vector<1x256xf32>
    %75 = arith.mulf %73, %74 : vector<1x256xf32>
    %76 = vector.broadcast %72 : vector<1x256xf32> to vector<8x256xf32>
    %77 = vector.broadcast %16 : vector<8x1xf32> to vector<8x256xf32>
    %78 = arith.subf %76, %77 : vector<8x256xf32>
    %79 = vector.broadcast %75 : vector<1x256xf32> to vector<8x256xf32>
    %80 = vector.broadcast %17 : vector<8x1xf32> to vector<8x256xf32>
    %81 = arith.subf %79, %80 : vector<8x256xf32>
    %82 = arith.minimumf %78, %81 : vector<8x256xf32>
    %83 = vector.broadcast %18 : vector<8x1xf32> to vector<8x256xf32>
    %84 = vector.broadcast %72 : vector<1x256xf32> to vector<8x256xf32>
    %85 = arith.subf %83, %84 : vector<8x256xf32>
    %86 = vector.broadcast %19 : vector<8x1xf32> to vector<8x256xf32>
    %87 = vector.broadcast %75 : vector<1x256xf32> to vector<8x256xf32>
    %88 = arith.subf %86, %87 : vector<8x256xf32>
    %89 = arith.minimumf %85, %88 : vector<8x256xf32>
    %90 = arith.minimumf %82, %89 : vector<8x256xf32>
    %cst_26 = arith.constant 9.99999971E-10 : f32
    %91 = vector.broadcast %cst_26 : f32 to vector<8x256xf32>
    %92 = arith.cmpf ogt, %90, %91 : vector<8x256xf32>
    %93 = arith.extui %92 : vector<8x256xi1> to vector<8x256xi32>
    %94 = arith.sitofp %93 : vector<8x256xi32> to vector<8x256xf32>
    %95 = tpu.iota {dimensions = array<i32: 1>} : vector<8x256xi32>
    %cst_27 = arith.constant 0.000000e+00 : f32
    %96 = vector.broadcast %cst_27 : f32 to vector<8x256xf32>
    %cst_28 = arith.constant -1.000000e+30 : f32
    %c0_i32 = arith.constant 0 : i32
    %cst_29 = arith.constant dense<0xFF800000> : vector<8xf32>
    %97 = vector.multi_reduction <maximumf>, %69, %cst_29 [1] : vector<8x256xf32> to vector<8xf32>
    %98 = vector.shape_cast %97 : vector<8xf32> to vector<8x1xf32>
    %99 = vector.broadcast %98 : vector<8x1xf32> to vector<8x256xf32>
    %100 = arith.cmpf oge, %69, %99 : vector<8x256xf32>
    %c256_i32 = arith.constant 256 : i32
    %101 = vector.broadcast %c256_i32 : i32 to vector<8x256xi32>
    %102 = arith.select %100, %95, %101 : vector<8x256xi1>, vector<8x256xi32>
    %cst_30 = arith.constant dense<2147483647> : vector<8xi32>
    %103 = vector.multi_reduction <minsi>, %102, %cst_30 [1] : vector<8x256xi32> to vector<8xi32>
    %104 = vector.shape_cast %103 : vector<8xi32> to vector<8x1xi32>
    %105 = vector.broadcast %104 : vector<8x1xi32> to vector<8x256xi32>
    %106 = arith.cmpi eq, %95, %105 : vector<8x256xi32>
    %107 = arith.extui %106 : vector<8x256xi1> to vector<8x256xi32>
    %108 = arith.sitofp %107 : vector<8x256xi32> to vector<8x256xf32>
    %cst_31 = arith.constant 0.000000e+00 : f32
    %109 = vector.broadcast %cst_31 : f32 to vector<8x256xf32>
    %110 = arith.cmpf ogt, %108, %109 : vector<8x256xf32>
    %111 = vector.broadcast %cst_28 : f32 to vector<8x256xf32>
    %112 = arith.select %110, %111, %69 : vector<8x256xi1>, vector<8x256xf32>
    %113 = arith.addf %96, %108 : vector<8x256xf32>
    %c1_i32 = arith.constant 1 : i32
    %cst_32 = arith.constant dense<0xFF800000> : vector<8xf32>
    %114 = vector.multi_reduction <maximumf>, %112, %cst_32 [1] : vector<8x256xf32> to vector<8xf32>
    %115 = vector.shape_cast %114 : vector<8xf32> to vector<8x1xf32>
    %116 = vector.broadcast %115 : vector<8x1xf32> to vector<8x256xf32>
    %117 = arith.cmpf oge, %112, %116 : vector<8x256xf32>
    %c256_i32_33 = arith.constant 256 : i32
    %118 = vector.broadcast %c256_i32_33 : i32 to vector<8x256xi32>
    %119 = arith.select %117, %95, %118 : vector<8x256xi1>, vector<8x256xi32>
    %cst_34 = arith.constant dense<2147483647> : vector<8xi32>
    %120 = vector.multi_reduction <minsi>, %119, %cst_34 [1] : vector<8x256xi32> to vector<8xi32>
    %121 = vector.shape_cast %120 : vector<8xi32> to vector<8x1xi32>
    %122 = vector.broadcast %121 : vector<8x1xi32> to vector<8x256xi32>
    %123 = arith.cmpi eq, %95, %122 : vector<8x256xi32>
    %124 = arith.extui %123 : vector<8x256xi1> to vector<8x256xi32>
    %125 = arith.sitofp %124 : vector<8x256xi32> to vector<8x256xf32>
    %cst_35 = arith.constant 0.000000e+00 : f32
    %126 = vector.broadcast %cst_35 : f32 to vector<8x256xf32>
    %127 = arith.cmpf ogt, %125, %126 : vector<8x256xf32>
    %128 = vector.broadcast %cst_28 : f32 to vector<8x256xf32>
    %129 = arith.select %127, %128, %112 : vector<8x256xi1>, vector<8x256xf32>
    %130 = arith.addf %113, %125 : vector<8x256xf32>
    %c2_i32 = arith.constant 2 : i32
    %cst_36 = arith.constant dense<0xFF800000> : vector<8xf32>
    %131 = vector.multi_reduction <maximumf>, %129, %cst_36 [1] : vector<8x256xf32> to vector<8xf32>
    %132 = vector.shape_cast %131 : vector<8xf32> to vector<8x1xf32>
    %133 = vector.broadcast %132 : vector<8x1xf32> to vector<8x256xf32>
    %134 = arith.cmpf oge, %129, %133 : vector<8x256xf32>
    %c256_i32_37 = arith.constant 256 : i32
    %135 = vector.broadcast %c256_i32_37 : i32 to vector<8x256xi32>
    %136 = arith.select %134, %95, %135 : vector<8x256xi1>, vector<8x256xi32>
    %cst_38 = arith.constant dense<2147483647> : vector<8xi32>
    %137 = vector.multi_reduction <minsi>, %136, %cst_38 [1] : vector<8x256xi32> to vector<8xi32>
    %138 = vector.shape_cast %137 : vector<8xi32> to vector<8x1xi32>
    %139 = vector.broadcast %138 : vector<8x1xi32> to vector<8x256xi32>
    %140 = arith.cmpi eq, %95, %139 : vector<8x256xi32>
    %141 = arith.extui %140 : vector<8x256xi1> to vector<8x256xi32>
    %142 = arith.sitofp %141 : vector<8x256xi32> to vector<8x256xf32>
    %cst_39 = arith.constant 0.000000e+00 : f32
    %143 = vector.broadcast %cst_39 : f32 to vector<8x256xf32>
    %144 = arith.cmpf ogt, %142, %143 : vector<8x256xf32>
    %145 = vector.broadcast %cst_28 : f32 to vector<8x256xf32>
    %146 = arith.select %144, %145, %129 : vector<8x256xi1>, vector<8x256xf32>
    %147 = arith.addf %130, %142 : vector<8x256xf32>
    %c3_i32 = arith.constant 3 : i32
    %cst_40 = arith.constant dense<0xFF800000> : vector<8xf32>
    %148 = vector.multi_reduction <maximumf>, %146, %cst_40 [1] : vector<8x256xf32> to vector<8xf32>
    %149 = vector.shape_cast %148 : vector<8xf32> to vector<8x1xf32>
    %150 = vector.broadcast %149 : vector<8x1xf32> to vector<8x256xf32>
    %151 = arith.cmpf oge, %146, %150 : vector<8x256xf32>
    %c256_i32_41 = arith.constant 256 : i32
    %152 = vector.broadcast %c256_i32_41 : i32 to vector<8x256xi32>
    %153 = arith.select %151, %95, %152 : vector<8x256xi1>, vector<8x256xi32>
    %cst_42 = arith.constant dense<2147483647> : vector<8xi32>
    %154 = vector.multi_reduction <minsi>, %153, %cst_42 [1] : vector<8x256xi32> to vector<8xi32>
    %155 = vector.shape_cast %154 : vector<8xi32> to vector<8x1xi32>
    %156 = vector.broadcast %155 : vector<8x1xi32> to vector<8x256xi32>
    %157 = arith.cmpi eq, %95, %156 : vector<8x256xi32>
    %158 = arith.extui %157 : vector<8x256xi1> to vector<8x256xi32>
    %159 = arith.sitofp %158 : vector<8x256xi32> to vector<8x256xf32>
    %cst_43 = arith.constant 0.000000e+00 : f32
    %160 = vector.broadcast %cst_43 : f32 to vector<8x256xf32>
    %161 = arith.cmpf ogt, %159, %160 : vector<8x256xf32>
    %162 = vector.broadcast %cst_28 : f32 to vector<8x256xf32>
    %163 = arith.select %161, %162, %146 : vector<8x256xi1>, vector<8x256xf32>
    %164 = arith.addf %147, %159 : vector<8x256xf32>
    %c4_i32 = arith.constant 4 : i32
    %cst_44 = arith.constant dense<0xFF800000> : vector<8xf32>
    %165 = vector.multi_reduction <maximumf>, %163, %cst_44 [1] : vector<8x256xf32> to vector<8xf32>
    %166 = vector.shape_cast %165 : vector<8xf32> to vector<8x1xf32>
    %167 = vector.broadcast %166 : vector<8x1xf32> to vector<8x256xf32>
    %168 = arith.cmpf oge, %163, %167 : vector<8x256xf32>
    %c256_i32_45 = arith.constant 256 : i32
    %169 = vector.broadcast %c256_i32_45 : i32 to vector<8x256xi32>
    %170 = arith.select %168, %95, %169 : vector<8x256xi1>, vector<8x256xi32>
    %cst_46 = arith.constant dense<2147483647> : vector<8xi32>
    %171 = vector.multi_reduction <minsi>, %170, %cst_46 [1] : vector<8x256xi32> to vector<8xi32>
    %172 = vector.shape_cast %171 : vector<8xi32> to vector<8x1xi32>
    %173 = vector.broadcast %172 : vector<8x1xi32> to vector<8x256xi32>
    %174 = arith.cmpi eq, %95, %173 : vector<8x256xi32>
    %175 = arith.extui %174 : vector<8x256xi1> to vector<8x256xi32>
    %176 = arith.sitofp %175 : vector<8x256xi32> to vector<8x256xf32>
    %cst_47 = arith.constant 0.000000e+00 : f32
    %177 = vector.broadcast %cst_47 : f32 to vector<8x256xf32>
    %178 = arith.cmpf ogt, %176, %177 : vector<8x256xf32>
    %179 = vector.broadcast %cst_28 : f32 to vector<8x256xf32>
    %180 = arith.select %178, %179, %163 : vector<8x256xi1>, vector<8x256xf32>
    %181 = arith.addf %164, %176 : vector<8x256xf32>
    %c5_i32 = arith.constant 5 : i32
    %cst_48 = arith.constant dense<0xFF800000> : vector<8xf32>
    %182 = vector.multi_reduction <maximumf>, %180, %cst_48 [1] : vector<8x256xf32> to vector<8xf32>
    %183 = vector.shape_cast %182 : vector<8xf32> to vector<8x1xf32>
    %184 = vector.broadcast %183 : vector<8x1xf32> to vector<8x256xf32>
    %185 = arith.cmpf oge, %180, %184 : vector<8x256xf32>
    %c256_i32_49 = arith.constant 256 : i32
    %186 = vector.broadcast %c256_i32_49 : i32 to vector<8x256xi32>
    %187 = arith.select %185, %95, %186 : vector<8x256xi1>, vector<8x256xi32>
    %cst_50 = arith.constant dense<2147483647> : vector<8xi32>
    %188 = vector.multi_reduction <minsi>, %187, %cst_50 [1] : vector<8x256xi32> to vector<8xi32>
    %189 = vector.shape_cast %188 : vector<8xi32> to vector<8x1xi32>
    %190 = vector.broadcast %189 : vector<8x1xi32> to vector<8x256xi32>
    %191 = arith.cmpi eq, %95, %190 : vector<8x256xi32>
    %192 = arith.extui %191 : vector<8x256xi1> to vector<8x256xi32>
    %193 = arith.sitofp %192 : vector<8x256xi32> to vector<8x256xf32>
    %cst_51 = arith.constant 0.000000e+00 : f32
    %194 = vector.broadcast %cst_51 : f32 to vector<8x256xf32>
    %195 = arith.cmpf ogt, %193, %194 : vector<8x256xf32>
    %196 = vector.broadcast %cst_28 : f32 to vector<8x256xf32>
    %197 = arith.select %195, %196, %180 : vector<8x256xi1>, vector<8x256xf32>
    %198 = arith.addf %181, %193 : vector<8x256xf32>
    %c6_i32 = arith.constant 6 : i32
    %cst_52 = arith.constant dense<0xFF800000> : vector<8xf32>
    %199 = vector.multi_reduction <maximumf>, %197, %cst_52 [1] : vector<8x256xf32> to vector<8xf32>
    %200 = vector.shape_cast %199 : vector<8xf32> to vector<8x1xf32>
    %201 = vector.broadcast %200 : vector<8x1xf32> to vector<8x256xf32>
    %202 = arith.cmpf oge, %197, %201 : vector<8x256xf32>
    %c256_i32_53 = arith.constant 256 : i32
    %203 = vector.broadcast %c256_i32_53 : i32 to vector<8x256xi32>
    %204 = arith.select %202, %95, %203 : vector<8x256xi1>, vector<8x256xi32>
    %cst_54 = arith.constant dense<2147483647> : vector<8xi32>
    %205 = vector.multi_reduction <minsi>, %204, %cst_54 [1] : vector<8x256xi32> to vector<8xi32>
    %206 = vector.shape_cast %205 : vector<8xi32> to vector<8x1xi32>
    %207 = vector.broadcast %206 : vector<8x1xi32> to vector<8x256xi32>
    %208 = arith.cmpi eq, %95, %207 : vector<8x256xi32>
    %209 = arith.extui %208 : vector<8x256xi1> to vector<8x256xi32>
    %210 = arith.sitofp %209 : vector<8x256xi32> to vector<8x256xf32>
    %cst_55 = arith.constant 0.000000e+00 : f32
    %211 = vector.broadcast %cst_55 : f32 to vector<8x256xf32>
    %212 = arith.cmpf ogt, %210, %211 : vector<8x256xf32>
    %213 = vector.broadcast %cst_28 : f32 to vector<8x256xf32>
    %214 = arith.select %212, %213, %197 : vector<8x256xi1>, vector<8x256xf32>
    %215 = arith.addf %198, %210 : vector<8x256xf32>
    %c7_i32 = arith.constant 7 : i32
    %cst_56 = arith.constant dense<0xFF800000> : vector<8xf32>
    %216 = vector.multi_reduction <maximumf>, %214, %cst_56 [1] : vector<8x256xf32> to vector<8xf32>
    %217 = vector.shape_cast %216 : vector<8xf32> to vector<8x1xf32>
    %218 = vector.broadcast %217 : vector<8x1xf32> to vector<8x256xf32>
    %219 = arith.cmpf oge, %214, %218 : vector<8x256xf32>
    %c256_i32_57 = arith.constant 256 : i32
    %220 = vector.broadcast %c256_i32_57 : i32 to vector<8x256xi32>
    %221 = arith.select %219, %95, %220 : vector<8x256xi1>, vector<8x256xi32>
    %cst_58 = arith.constant dense<2147483647> : vector<8xi32>
    %222 = vector.multi_reduction <minsi>, %221, %cst_58 [1] : vector<8x256xi32> to vector<8xi32>
    %223 = vector.shape_cast %222 : vector<8xi32> to vector<8x1xi32>
    %224 = vector.broadcast %223 : vector<8x1xi32> to vector<8x256xi32>
    %225 = arith.cmpi eq, %95, %224 : vector<8x256xi32>
    %226 = arith.extui %225 : vector<8x256xi1> to vector<8x256xi32>
    %227 = arith.sitofp %226 : vector<8x256xi32> to vector<8x256xf32>
    %cst_59 = arith.constant 0.000000e+00 : f32
    %228 = vector.broadcast %cst_59 : f32 to vector<8x256xf32>
    %229 = arith.cmpf ogt, %227, %228 : vector<8x256xf32>
    %230 = vector.broadcast %cst_28 : f32 to vector<8x256xf32>
    %231 = arith.select %229, %230, %214 : vector<8x256xi1>, vector<8x256xf32>
    %232 = arith.addf %215, %227 : vector<8x256xf32>
    %c8_i32 = arith.constant 8 : i32
    %cst_60 = arith.constant dense<0xFF800000> : vector<8xf32>
    %233 = vector.multi_reduction <maximumf>, %231, %cst_60 [1] : vector<8x256xf32> to vector<8xf32>
    %234 = vector.shape_cast %233 : vector<8xf32> to vector<8x1xf32>
    %235 = vector.broadcast %234 : vector<8x1xf32> to vector<8x256xf32>
    %236 = arith.cmpf oge, %231, %235 : vector<8x256xf32>
    %c256_i32_61 = arith.constant 256 : i32
    %237 = vector.broadcast %c256_i32_61 : i32 to vector<8x256xi32>
    %238 = arith.select %236, %95, %237 : vector<8x256xi1>, vector<8x256xi32>
    %cst_62 = arith.constant dense<2147483647> : vector<8xi32>
    %239 = vector.multi_reduction <minsi>, %238, %cst_62 [1] : vector<8x256xi32> to vector<8xi32>
    %240 = vector.shape_cast %239 : vector<8xi32> to vector<8x1xi32>
    %241 = vector.broadcast %240 : vector<8x1xi32> to vector<8x256xi32>
    %242 = arith.cmpi eq, %95, %241 : vector<8x256xi32>
    %243 = arith.extui %242 : vector<8x256xi1> to vector<8x256xi32>
    %244 = arith.sitofp %243 : vector<8x256xi32> to vector<8x256xf32>
    %cst_63 = arith.constant 0.000000e+00 : f32
    %245 = vector.broadcast %cst_63 : f32 to vector<8x256xf32>
    %246 = arith.cmpf ogt, %244, %245 : vector<8x256xf32>
    %247 = vector.broadcast %cst_28 : f32 to vector<8x256xf32>
    %248 = arith.select %246, %247, %231 : vector<8x256xi1>, vector<8x256xf32>
    %249 = arith.addf %232, %244 : vector<8x256xf32>
    %c9_i32 = arith.constant 9 : i32
    %cst_64 = arith.constant dense<0xFF800000> : vector<8xf32>
    %250 = vector.multi_reduction <maximumf>, %248, %cst_64 [1] : vector<8x256xf32> to vector<8xf32>
    %251 = vector.shape_cast %250 : vector<8xf32> to vector<8x1xf32>
    %252 = vector.broadcast %251 : vector<8x1xf32> to vector<8x256xf32>
    %253 = arith.cmpf oge, %248, %252 : vector<8x256xf32>
    %c256_i32_65 = arith.constant 256 : i32
    %254 = vector.broadcast %c256_i32_65 : i32 to vector<8x256xi32>
    %255 = arith.select %253, %95, %254 : vector<8x256xi1>, vector<8x256xi32>
    %cst_66 = arith.constant dense<2147483647> : vector<8xi32>
    %256 = vector.multi_reduction <minsi>, %255, %cst_66 [1] : vector<8x256xi32> to vector<8xi32>
    %257 = vector.shape_cast %256 : vector<8xi32> to vector<8x1xi32>
    %258 = vector.broadcast %257 : vector<8x1xi32> to vector<8x256xi32>
    %259 = arith.cmpi eq, %95, %258 : vector<8x256xi32>
    %260 = arith.extui %259 : vector<8x256xi1> to vector<8x256xi32>
    %261 = arith.sitofp %260 : vector<8x256xi32> to vector<8x256xf32>
    %cst_67 = arith.constant 0.000000e+00 : f32
    %262 = vector.broadcast %cst_67 : f32 to vector<8x256xf32>
    %263 = arith.cmpf ogt, %261, %262 : vector<8x256xf32>
    %264 = vector.broadcast %cst_28 : f32 to vector<8x256xf32>
    %265 = arith.select %263, %264, %248 : vector<8x256xi1>, vector<8x256xf32>
    %266 = arith.addf %249, %261 : vector<8x256xf32>
    %c10_i32 = arith.constant 10 : i32
    %cst_68 = arith.constant dense<0xFF800000> : vector<8xf32>
    %267 = vector.multi_reduction <maximumf>, %265, %cst_68 [1] : vector<8x256xf32> to vector<8xf32>
    %268 = vector.shape_cast %267 : vector<8xf32> to vector<8x1xf32>
    %269 = vector.broadcast %268 : vector<8x1xf32> to vector<8x256xf32>
    %270 = arith.cmpf oge, %265, %269 : vector<8x256xf32>
    %c256_i32_69 = arith.constant 256 : i32
    %271 = vector.broadcast %c256_i32_69 : i32 to vector<8x256xi32>
    %272 = arith.select %270, %95, %271 : vector<8x256xi1>, vector<8x256xi32>
    %cst_70 = arith.constant dense<2147483647> : vector<8xi32>
    %273 = vector.multi_reduction <minsi>, %272, %cst_70 [1] : vector<8x256xi32> to vector<8xi32>
    %274 = vector.shape_cast %273 : vector<8xi32> to vector<8x1xi32>
    %275 = vector.broadcast %274 : vector<8x1xi32> to vector<8x256xi32>
    %276 = arith.cmpi eq, %95, %275 : vector<8x256xi32>
    %277 = arith.extui %276 : vector<8x256xi1> to vector<8x256xi32>
    %278 = arith.sitofp %277 : vector<8x256xi32> to vector<8x256xf32>
    %cst_71 = arith.constant 0.000000e+00 : f32
    %279 = vector.broadcast %cst_71 : f32 to vector<8x256xf32>
    %280 = arith.cmpf ogt, %278, %279 : vector<8x256xf32>
    %281 = vector.broadcast %cst_28 : f32 to vector<8x256xf32>
    %282 = arith.select %280, %281, %265 : vector<8x256xi1>, vector<8x256xf32>
    %283 = arith.addf %266, %278 : vector<8x256xf32>
    %c11_i32 = arith.constant 11 : i32
    %cst_72 = arith.constant dense<0xFF800000> : vector<8xf32>
    %284 = vector.multi_reduction <maximumf>, %282, %cst_72 [1] : vector<8x256xf32> to vector<8xf32>
    %285 = vector.shape_cast %284 : vector<8xf32> to vector<8x1xf32>
    %286 = vector.broadcast %285 : vector<8x1xf32> to vector<8x256xf32>
    %287 = arith.cmpf oge, %282, %286 : vector<8x256xf32>
    %c256_i32_73 = arith.constant 256 : i32
    %288 = vector.broadcast %c256_i32_73 : i32 to vector<8x256xi32>
    %289 = arith.select %287, %95, %288 : vector<8x256xi1>, vector<8x256xi32>
    %cst_74 = arith.constant dense<2147483647> : vector<8xi32>
    %290 = vector.multi_reduction <minsi>, %289, %cst_74 [1] : vector<8x256xi32> to vector<8xi32>
    %291 = vector.shape_cast %290 : vector<8xi32> to vector<8x1xi32>
    %292 = vector.broadcast %291 : vector<8x1xi32> to vector<8x256xi32>
    %293 = arith.cmpi eq, %95, %292 : vector<8x256xi32>
    %294 = arith.extui %293 : vector<8x256xi1> to vector<8x256xi32>
    %295 = arith.sitofp %294 : vector<8x256xi32> to vector<8x256xf32>
    %cst_75 = arith.constant 0.000000e+00 : f32
    %296 = vector.broadcast %cst_75 : f32 to vector<8x256xf32>
    %297 = arith.cmpf ogt, %295, %296 : vector<8x256xf32>
    %298 = vector.broadcast %cst_28 : f32 to vector<8x256xf32>
    %299 = arith.select %297, %298, %282 : vector<8x256xi1>, vector<8x256xf32>
    %300 = arith.addf %283, %295 : vector<8x256xf32>
    %c12_i32 = arith.constant 12 : i32
    %cst_76 = arith.constant dense<0xFF800000> : vector<8xf32>
    %301 = vector.multi_reduction <maximumf>, %299, %cst_76 [1] : vector<8x256xf32> to vector<8xf32>
    %302 = vector.shape_cast %301 : vector<8xf32> to vector<8x1xf32>
    %303 = vector.broadcast %302 : vector<8x1xf32> to vector<8x256xf32>
    %304 = arith.cmpf oge, %299, %303 : vector<8x256xf32>
    %c256_i32_77 = arith.constant 256 : i32
    %305 = vector.broadcast %c256_i32_77 : i32 to vector<8x256xi32>
    %306 = arith.select %304, %95, %305 : vector<8x256xi1>, vector<8x256xi32>
    %cst_78 = arith.constant dense<2147483647> : vector<8xi32>
    %307 = vector.multi_reduction <minsi>, %306, %cst_78 [1] : vector<8x256xi32> to vector<8xi32>
    %308 = vector.shape_cast %307 : vector<8xi32> to vector<8x1xi32>
    %309 = vector.broadcast %308 : vector<8x1xi32> to vector<8x256xi32>
    %310 = arith.cmpi eq, %95, %309 : vector<8x256xi32>
    %311 = arith.extui %310 : vector<8x256xi1> to vector<8x256xi32>
    %312 = arith.sitofp %311 : vector<8x256xi32> to vector<8x256xf32>
    %cst_79 = arith.constant 0.000000e+00 : f32
    %313 = vector.broadcast %cst_79 : f32 to vector<8x256xf32>
    %314 = arith.cmpf ogt, %312, %313 : vector<8x256xf32>
    %315 = vector.broadcast %cst_28 : f32 to vector<8x256xf32>
    %316 = arith.select %314, %315, %299 : vector<8x256xi1>, vector<8x256xf32>
    %317 = arith.addf %300, %312 : vector<8x256xf32>
    %318 = vector.broadcast %11 : vector<8x1xf32> to vector<8x256xf32>
    %319 = arith.mulf %317, %318 : vector<8x256xf32>
    %320 = arith.mulf %319, %94 : vector<8x256xf32>
    %321 = tpu.iota {dimensions = array<i32: 0>} : vector<8x256xi32>
    %cst_80 = arith.constant dense<0.000000e+00> : vector<256xf32>
    %322 = vector.multi_reduction <add>, %320, %cst_80 [0] : vector<8x256xf32> to vector<256xf32>
    %323 = vector.shape_cast %322 : vector<256xf32> to vector<1x256xf32>
    %cst_81 = arith.constant 1.000000e+00 : f32
    %324 = vector.broadcast %cst_81 : f32 to vector<1x256xf32>
    %325 = arith.cmpf ogt, %323, %324 : vector<1x256xf32>
    %326 = arith.extui %325 : vector<1x256xi1> to vector<1x256xi32>
    %327 = arith.sitofp %326 : vector<1x256xi32> to vector<1x256xf32>
    %328 = vector.broadcast %327 : vector<1x256xf32> to vector<8x256xf32>
    %329 = arith.mulf %59, %328 : vector<8x256xf32>
    %cst_82 = arith.constant 1.000000e+00 : f32
    %330 = vector.broadcast %cst_82 : f32 to vector<1x256xf32>
    %331 = arith.subf %330, %327 : vector<1x256xf32>
    %332 = vector.broadcast %331 : vector<1x256xf32> to vector<8x256xf32>
    %333 = arith.mulf %320, %332 : vector<8x256xf32>
    %cst_83 = arith.constant dense<0xFF800000> : vector<256xf32>
    %334 = vector.multi_reduction <maximumf>, %329, %cst_83 [0] : vector<8x256xf32> to vector<256xf32>
    %335 = vector.shape_cast %334 : vector<256xf32> to vector<1x256xf32>
    %336 = vector.broadcast %335 : vector<1x256xf32> to vector<8x256xf32>
    %337 = arith.cmpf oge, %329, %336 : vector<8x256xf32>
    %c8_i32_84 = arith.constant 8 : i32
    %338 = vector.broadcast %c8_i32_84 : i32 to vector<8x256xi32>
    %339 = arith.select %337, %321, %338 : vector<8x256xi1>, vector<8x256xi32>
    %cst_85 = arith.constant dense<2147483647> : vector<256xi32>
    %340 = vector.multi_reduction <minsi>, %339, %cst_85 [0] : vector<8x256xi32> to vector<256xi32>
    %341 = vector.shape_cast %340 : vector<256xi32> to vector<1x256xi32>
    %342 = vector.broadcast %341 : vector<1x256xi32> to vector<8x256xi32>
    %343 = arith.cmpi eq, %321, %342 : vector<8x256xi32>
    %344 = arith.extui %343 : vector<8x256xi1> to vector<8x256xi32>
    %345 = arith.sitofp %344 : vector<8x256xi32> to vector<8x256xf32>
    %346 = vector.broadcast %327 : vector<1x256xf32> to vector<8x256xf32>
    %347 = arith.mulf %345, %346 : vector<8x256xf32>
    %348 = arith.addf %347, %333 : vector<8x256xf32>
    %cst_86 = arith.constant dense<0.000000e+00> : vector<256xf32>
    %349 = vector.multi_reduction <add>, %348, %cst_86 [0] : vector<8x256xf32> to vector<256xf32>
    %350 = vector.shape_cast %349 : vector<256xf32> to vector<1x256xf32>
    %cst_87 = arith.constant 0.000000e+00 : f32
    %351 = vector.broadcast %cst_87 : f32 to vector<1x256xf32>
    %352 = arith.cmpf ogt, %350, %351 : vector<1x256xf32>
    %cst_88 = arith.constant dense<0xFF800000> : vector<256xf32>
    %353 = vector.multi_reduction <maximumf>, %348, %cst_88 [0] : vector<8x256xf32> to vector<256xf32>
    %354 = vector.shape_cast %353 : vector<256xf32> to vector<1x256xf32>
    %355 = vector.broadcast %354 : vector<1x256xf32> to vector<8x256xf32>
    %356 = arith.cmpf oge, %348, %355 : vector<8x256xf32>
    %c8_i32_89 = arith.constant 8 : i32
    %357 = vector.broadcast %c8_i32_89 : i32 to vector<8x256xi32>
    %358 = arith.select %356, %321, %357 : vector<8x256xi1>, vector<8x256xi32>
    %cst_90 = arith.constant dense<2147483647> : vector<256xi32>
    %359 = vector.multi_reduction <minsi>, %358, %cst_90 [0] : vector<8x256xi32> to vector<256xi32>
    %360 = vector.shape_cast %359 : vector<256xi32> to vector<1x256xi32>
    %361 = vector.broadcast %360 : vector<1x256xi32> to vector<8x256xi32>
    %362 = arith.cmpi eq, %321, %361 : vector<8x256xi32>
    %363 = arith.extui %362 : vector<8x256xi1> to vector<8x256xi32>
    %364 = arith.sitofp %363 : vector<8x256xi32> to vector<8x256xf32>
    %cst_91 = arith.constant dense<0.000000e+00> : vector<5x256xf32>
    %365 = tpu.matmul %9, %364, %cst_91 {dimension_numbers = #tpu.dot_dimension_numbers<[1], [0], [0], [1], [0, 0, 1, 1], [], []>, precision = #tpu.contract_precision<fp32>} : vector<5x8xf32>, vector<8x256xf32>, vector<5x256xf32> -> vector<5x256xf32>
    %366 = vector.extract_strided_slice %365 {offsets = [0, 0], sizes = [4, 256], strides = [1, 1]} : vector<5x256xf32> to vector<4x256xf32>
    %367 = vector.extract_strided_slice %365 {offsets = [4, 0], sizes = [1, 256], strides = [1, 1]} : vector<5x256xf32> to vector<1x256xf32>
    %368 = math.roundeven %367 : vector<1x256xf32>
    %369 = arith.fptosi %368 : vector<1x256xf32> to vector<1x256xi32>
    %c80_i32 = arith.constant 80 : i32
    %370 = vector.broadcast %c80_i32 : i32 to vector<1x256xi32>
    %371 = arith.select %352, %369, %370 : vector<1x256xi1>, vector<1x256xi32>
    %372 = vector.extract_strided_slice %9 {offsets = [4, 0], sizes = [1, 8], strides = [1, 1]} : vector<5x8xf32> to vector<1x8xf32>
    %373 = arith.fptosi %372 : vector<1x8xf32> to vector<1x8xi32>
    %374 = tpu.iota {dimensions = array<i32: 0>} : vector<80x8xi32>
    %375 = vector.broadcast %373 : vector<1x8xi32> to vector<80x8xi32>
    %376 = arith.cmpi eq, %374, %375 : vector<80x8xi32>
    %377 = arith.extui %376 : vector<80x8xi1> to vector<80x8xi32>
    %378 = arith.sitofp %377 : vector<80x8xi32> to vector<80x8xf32>
    %379 = arith.extui %352 : vector<1x256xi1> to vector<1x256xi32>
    %380 = arith.sitofp %379 : vector<1x256xi32> to vector<1x256xf32>
    %381 = vector.broadcast %380 : vector<1x256xf32> to vector<8x256xf32>
    %382 = arith.mulf %364, %381 : vector<8x256xf32>
    %cst_92 = arith.constant dense<0.000000e+00> : vector<80x256xf32>
    %383 = tpu.matmul %378, %382, %cst_92 {dimension_numbers = #tpu.dot_dimension_numbers<[1], [0], [0], [1], [0, 0, 1, 1], [], []>, precision = #tpu.contract_precision<fp32>} : vector<80x8xf32>, vector<8x256xf32>, vector<80x256xf32> -> vector<80x256xf32>
    %c0_93 = arith.constant 0 : index
    %c0_94 = arith.constant 0 : index
    %c0_95 = arith.constant 0 : index
    %384 = vector.load %arg7[%c0_93, %c0_94, %c0_95] : memref<1x1x256xi32, #tpu.memory_space<vmem>>, vector<1x1x256xi32>
    %385 = vector.shape_cast %384 : vector<1x1x256xi32> to vector<1x256xi32>
    %386 = vector.shape_cast %371 : vector<1x256xi32> to vector<1x1x256xi32>
    tpu.vector_store %arg7[%c0_93, %c0_94, %c0_95], %386 {strides = array<i32>} : memref<1x1x256xi32, #tpu.memory_space<vmem>>, vector<1x1x256xi32>,
    %c0_96 = arith.constant 0 : index
    %c0_97 = arith.constant 0 : index
    %c0_98 = arith.constant 0 : index
    %387 = vector.load %arg8[%c0_96, %c0_97, %c0_98] : memref<1x4x256xf32, #tpu.memory_space<vmem>>, vector<1x4x256xf32>
    %388 = vector.shape_cast %387 : vector<1x4x256xf32> to vector<4x256xf32>
    %389 = vector.shape_cast %366 : vector<4x256xf32> to vector<1x4x256xf32>
    tpu.vector_store %arg8[%c0_96, %c0_97, %c0_98], %389 {strides = array<i32>} : memref<1x4x256xf32, #tpu.memory_space<vmem>>, vector<1x4x256xf32>,
    %c0_99 = arith.constant 0 : index
    %c0_100 = arith.constant 0 : index
    %c0_101 = arith.constant 0 : index
    %390 = vector.load %arg9[%c0_99, %c0_100, %c0_101] : memref<1x80x256xf32, #tpu.memory_space<vmem>>, vector<1x80x256xf32>
    %391 = vector.shape_cast %390 : vector<1x80x256xf32> to vector<80x256xf32>
    %392 = vector.shape_cast %383 : vector<80x256xf32> to vector<1x80x256xf32>
    tpu.vector_store %arg9[%c0_99, %c0_100, %c0_101], %392 {strides = array<i32>} : memref<1x80x256xf32, #tpu.memory_space<vmem>>, vector<1x80x256xf32>,
    %393 = arith.extui %352 : vector<1x256xi1> to vector<1x256xi32>
    %c0_102 = arith.constant 0 : index
    %c0_103 = arith.constant 0 : index
    %c0_104 = arith.constant 0 : index
    %394 = vector.load %arg10[%c0_102, %c0_103, %c0_104] : memref<1x1x256xi32, #tpu.memory_space<vmem>>, vector<1x1x256xi32>
    %395 = vector.shape_cast %394 : vector<1x1x256xi32> to vector<1x256xi32>
    %396 = vector.shape_cast %393 : vector<1x256xi32> to vector<1x1x256xi32>
    tpu.vector_store %arg10[%c0_102, %c0_103, %c0_104], %396 {strides = array<i32>} : memref<1x1x256xi32, #tpu.memory_space<vmem>>, vector<1x1x256xi32>,
    return
  }
  func.func @transform_0(%arg0: i32) -> (i32, i32, i32) {
    %c0_i32 = arith.constant 0 : i32
    %c0_i32_0 = arith.constant 0 : i32
    %c0_i32_1 = arith.constant 0 : i32
    return %arg0, %c0_i32, %c0_i32_0 : i32, i32, i32
  }
  func.func @transform_1(%arg0: i32) -> (i32, i32, i32) {
    %c0_i32 = arith.constant 0 : i32
    %c0_i32_0 = arith.constant 0 : i32
    %c0_i32_1 = arith.constant 0 : i32
    return %arg0, %c0_i32, %c0_i32_0 : i32, i32, i32
  }
  func.func @transform_2(%arg0: i32) -> (i32, i32, i32) {
    %c0_i32 = arith.constant 0 : i32
    %c0_i32_0 = arith.constant 0 : i32
    %c0_i32_1 = arith.constant 0 : i32
    return %arg0, %c0_i32, %c0_i32_0 : i32, i32, i32
  }
  func.func @transform_3(%arg0: i32) -> (i32, i32, i32) {
    %c0_i32 = arith.constant 0 : i32
    %c0_i32_0 = arith.constant 0 : i32
    %c0_i32_1 = arith.constant 0 : i32
    return %arg0, %c0_i32, %c0_i32_0 : i32, i32, i32
  }
  func.func @transform_4(%arg0: i32) -> (i32, i32, i32) {
    %c0_i32 = arith.constant 0 : i32
    %c0_i32_0 = arith.constant 0 : i32
    %c0_i32_1 = arith.constant 0 : i32
    return %arg0, %c0_i32, %c0_i32_0 : i32, i32, i32
  }
  func.func @transform_5(%arg0: i32) -> (i32, i32, i32) {
    %c0_i32 = arith.constant 0 : i32
    %c0_i32_0 = arith.constant 0 : i32
    %c0_i32_1 = arith.constant 0 : i32
    return %arg0, %c0_i32, %c0_i32_0 : i32, i32, i32
  }
  func.func @transform_6(%arg0: i32) -> (i32, i32, i32) {
    %c0_i32 = arith.constant 0 : i32
    %c0_i32_0 = arith.constant 0 : i32
    %c0_i32_1 = arith.constant 0 : i32
    return %arg0, %c0_i32, %c0_i32_0 : i32, i32, i32
  }
  func.func @transform_7(%arg0: i32) -> (i32, i32, i32) {
    %c0_i32 = arith.constant 0 : i32
    %c0_i32_0 = arith.constant 0 : i32
    %c0_i32_1 = arith.constant 0 : i32
    return %arg0, %c0_i32, %c0_i32_0 : i32, i32, i32
  }
  func.func @transform_8(%arg0: i32) -> (i32, i32, i32) {
    %c0_i32 = arith.constant 0 : i32
    %c0_i32_0 = arith.constant 0 : i32
    %c0_i32_1 = arith.constant 0 : i32
    return %arg0, %c0_i32, %c0_i32_0 : i32, i32, i32
  }
  func.func @transform_9(%arg0: i32) -> (i32, i32, i32) {
    %c0_i32 = arith.constant 0 : i32
    %c0_i32_0 = arith.constant 0 : i32
    %c0_i32_1 = arith.constant 0 : i32
    return %arg0, %c0_i32, %c0_i32_0 : i32, i32, i32
  }
}

</mosaic_0001>

<llo_original>
// kernel: tpu_custom_call.1
$region0: #{tpu_custom_call.1}
  #allocation0 [shape = 'u32[]', space=smem, size = 0x4, offset = 0x4, fixed_abs, tag = 'smem constant byte address 0x4 - core index']
  #allocation1 [shape = 'u32[144,128]{1,0:T(1,128)}', space=vmem, size = 0x12000, scoped, tag = 'internal scratch']
  %s0 = inlined_call_operand.hbm [shape: f32[2,80,256], index: 0, kind: input, shape index: {}]
  %s1 = inlined_call_operand.vmem [shape: f32[2,4,256], index: 1, kind: input, shape index: {}]
  %s2 = inlined_call_operand.vmem [shape: s32[2,8,1], index: 2, kind: input, shape index: {}]
  %s3 = inlined_call_operand.vmem [shape: f32[2,8,4], index: 3, kind: input, shape index: {}]
  %s4 = inlined_call_operand.vmem [shape: f32[2,5,8], index: 4, kind: input, shape index: {}]
  %s5 = inlined_call_operand.vmem [shape: f32[2,8,1], index: 5, kind: input, shape index: {}]
  %s6 = inlined_call_operand.hbm [shape: s32[2,1,256], index: 6, kind: output, shape index: {0}]
  %s7 = inlined_call_operand.hbm [shape: f32[2,4,256], index: 7, kind: output, shape index: {1}]
  %s8 = inlined_call_operand.hbm [shape: f32[2,80,256], index: 8, kind: output, shape index: {2}]
  %s9 = inlined_call_operand.hbm [shape: s32[2,1,256], index: 9, kind: output, shape index: {3}]
  %10 = xla_tuple %s6, %s7, %s8, %s9
  %s11 = sld [smem:[#allocation0]]
  $region85: #{tpu_custom_call.1} parent=0
    _
  %s13 = ssub.s32 1, %s11
  %s14 = scalar_select 0, %s13, %s11
  $region1: #{tpu_custom_call.1} parent=0
    #allocation2 [shape = 'u8[163840]{0}', space=vmem, size = 0x28000, scoped, tag = 'input window, operand 0']
    #allocation3 [shape = 's32[2]{0}', space=sflag, size = 0x8, scoped, tag = 'scoped memory for tpu_custom_call.1']
    #allocation4 [shape = 's32[2]{0}', space=sflag, size = 0x8, scoped, tag = 'scoped memory for tpu_custom_call.1']
    #allocation5 [shape = 'u8[2048]{0}', space=vmem, size = 0x800, scoped, tag = 'output window, operand 0']
    #allocation6 [shape = 'u8[8192]{0}', space=vmem, size = 0x2000, scoped, tag = 'output window, operand 1']
    #allocation7 [shape = 's32[2]{0}', space=sflag, size = 0x8, scoped, tag = 'scoped memory for tpu_custom_call.1']
    #allocation8 [shape = 'u8[163840]{0}', space=vmem, size = 0x28000, scoped, tag = 'output window, operand 2']
    #allocation9 [shape = 'u8[2048]{0}', space=vmem, size = 0x800, scoped, tag = 'output window, operand 3']
    #allocation10 [shape = 's32[2]{0}', space=sflag, size = 0x8, scoped, tag = 'scoped memory for tpu_custom_call.1']
    %15 = vsyncpa [#allocation3], 0
    %s16 = scalar_lea.sflag [#allocation3], 1
    %17 = vsyncpa %s16, 0
    %18 = vsyncpa [#allocation4], 0
    %s19 = scalar_lea.sflag [#allocation4], 1
    %20 = vsyncpa %s19, 0
    %21 = vsyncpa [#allocation7], 0
    %s22 = scalar_lea.sflag [#allocation7], 1
    %23 = vsyncpa %s22, 0
    %24 = vsyncpa [#allocation10], 0
    %s25 = scalar_lea.sflag [#allocation10], 1
    %26 = vsyncpa %s25, 0
    loop: start=0, step=1, limit=4
    $region2: #{tpu_custom_call.1} parent=1 // loop_pre_header
      _
    $region3: #{tpu_custom_call.1} parent=1 // loop_header
      %s28 = sphi 0, %s32
      %p29 = scmp.ge.s32.totalorder %s28, 4
      %s38 = sphi 0, %s40
      %s41 = sphi 0, %s38
      %s42 = sphi 0, %s41
      %s58 = sphi 0, %s42
      %s64 = sphi 0, %s66
      %s67 = sphi 0, %s64
      %s68 = sphi 0, %s67
      %s84 = sphi 0, %s68
      %s90 = sphi 0, %s92
      %s93 = sphi 0, %s90
      %s94 = sphi 0, %s93
      %s110 = sphi 0, %s94
      %s116 = sphi 0, %s118
      %s119 = sphi 0, %s116
      %s120 = sphi 0, %s119
      %s136 = sphi 0, %s120
      %s142 = sphi 0, %s144
      %s145 = sphi 0, %s142
      %s146 = sphi 0, %s145
      %s162 = sphi 0, %s146
      %s168 = sphi 0, %s170
      %s171 = sphi 0, %s168
      %s172 = sphi 0, %s171
      %s188 = sphi 0, %s172
      %s194 = sphi 0, %s196
      %s197 = sphi 0, %s194
      %s198 = sphi 0, %s197
      %s214 = sphi 0, %s198
      %s220 = sphi 0, %s222
      %s223 = sphi 0, %s220
      %s224 = sphi 0, %s223
      %s240 = sphi 0, %s224
      %s246 = sphi 0, %s248
      %s249 = sphi 0, %s246
      %s250 = sphi 0, %s249
      %s266 = sphi 0, %s250
      %s272 = sphi 0, %s274
      %s275 = sphi 0, %s272
      %s276 = sphi 0, %s275
      %s292 = sphi 0, %s276
    $region4: #{tpu_custom_call.1} parent=1 // loop_header_branch
      %31 = sbr.rel (%p29) target = $region8
    $region5: #{tpu_custom_call.1} parent=1 // loop_body
      %s33 = ssub.s32 %s28, 1
      %s34 = ssub.s32 %s28, 2
      %s35 = sadd.s32 %s28, 1
      %s36 = ssub.s32 %s28, %s35
      %p37 = scmp.eq.s32.totalorder %s36, 0
      %s39 = sadd.s32 %s38, 1
      %s40 = scalar_select %p37, %s38, %s39
      %p43 = pneg %p37
      %p44 = scmp.eq.s32.totalorder %s28, 1
      %p45 = por %p43, %p44
      %p46 = scmp.ne.s32.totalorder %s38, %s41
      %p47 = scmp.eq.s32.totalorder %s28, 0
      %p48 = por %p46, %p47
      %p49 = scmp.ne.s32.totalorder %s38, %s41
      %p50 = scmp.eq.s32.totalorder %s33, 1
      %p51 = por %p49, %p50
      %p52 = scmp.ne.s32.totalorder %s41, %s42
      %p53 = scmp.eq.s32.totalorder %s33, 0
      %p54 = por %p52, %p53
      %p55 = scmp.ne.s32.totalorder %s41, %s42
      %p56 = scmp.eq.s32.totalorder %s34, 1
      %p57 = por %p55, %p56
      %p59 = scmp.ne.s32.totalorder %s42, %s58
      %p60 = scmp.eq.s32.totalorder %s34, 0
      %p61 = por %p59, %p60
      %s62 = ssub.s32 %s28, %s35
      %p63 = scmp.eq.s32.totalorder %s62, 0
      %s65 = sadd.s32 %s64, 1
      %s66 = scalar_select %p63, %s64, %s65
      %p69 = pneg %p63
      %p70 = scmp.eq.s32.totalorder %s28, 1
      %p71 = por %p69, %p70
      %p72 = scmp.ne.s32.totalorder %s64, %s67
      %p73 = scmp.eq.s32.totalorder %s28, 0
      %p74 = por %p72, %p73
      %p75 = scmp.ne.s32.totalorder %s64, %s67
      %p76 = scmp.eq.s32.totalorder %s33, 1
      %p77 = por %p75, %p76
      %p78 = scmp.ne.s32.totalorder %s67, %s68
      %p79 = scmp.eq.s32.totalorder %s33, 0
      %p80 = por %p78, %p79
      %p81 = scmp.ne.s32.totalorder %s67, %s68
      %p82 = scmp.eq.s32.totalorder %s34, 1
      %p83 = por %p81, %p82
      %p85 = scmp.ne.s32.totalorder %s68, %s84
      %p86 = scmp.eq.s32.totalorder %s34, 0
      %p87 = por %p85, %p86
      %s88 = ssub.s32 %s28, %s35
      %p89 = scmp.eq.s32.totalorder %s88, 0
      %s91 = sadd.s32 %s90, 1
      %s92 = scalar_select %p89, %s90, %s91
      %p95 = pneg %p89
      %p96 = scmp.eq.s32.totalorder %s28, 1
      %p97 = por %p95, %p96
      %p98 = scmp.ne.s32.totalorder %s90, %s93
      %p99 = scmp.eq.s32.totalorder %s28, 0
      %p100 = por %p98, %p99
      %p101 = scmp.ne.s32.totalorder %s90, %s93
      %p102 = scmp.eq.s32.totalorder %s33, 1
      %p103 = por %p101, %p102
      %p104 = scmp.ne.s32.totalorder %s93, %s94
      %p105 = scmp.eq.s32.totalorder %s33, 0
      %p106 = por %p104, %p105
      %p107 = scmp.ne.s32.totalorder %s93, %s94
      %p108 = scmp.eq.s32.totalorder %s34, 1
      %p109 = por %p107, %p108
      %p111 = scmp.ne.s32.totalorder %s94, %s110
      %p112 = scmp.eq.s32.totalorder %s34, 0
      %p113 = por %p111, %p112
      %s114 = ssub.s32 %s28, %s35
      %p115 = scmp.eq.s32.totalorder %s114, 0
      %s117 = sadd.s32 %s116, 1
      %s118 = scalar_select %p115, %s116, %s117
      %p121 = pneg %p115
      %p122 = scmp.eq.s32.totalorder %s28, 1
      %p123 = por %p121, %p122
      %p124 = scmp.ne.s32.totalorder %s116, %s119
      %p125 = scmp.eq.s32.totalorder %s28, 0
      %p126 = por %p124, %p125
      %p127 = scmp.ne.s32.totalorder %s116, %s119
      %p128 = scmp.eq.s32.totalorder %s33, 1
      %p129 = por %p127, %p128
      %p130 = scmp.ne.s32.totalorder %s119, %s120
      %p131 = scmp.eq.s32.totalorder %s33, 0
      %p132 = por %p130, %p131
      %p133 = scmp.ne.s32.totalorder %s119, %s120
      %p134 = scmp.eq.s32.totalorder %s34, 1
      %p135 = por %p133, %p134
      %p137 = scmp.ne.s32.totalorder %s120, %s136
      %p138 = scmp.eq.s32.totalorder %s34, 0
      %p139 = por %p137, %p138
      %s140 = ssub.s32 %s28, %s35
      %p141 = scmp.eq.s32.totalorder %s140, 0
      %s143 = sadd.s32 %s142, 1
      %s144 = scalar_select %p141, %s142, %s143
      %p147 = pneg %p141
      %p148 = scmp.eq.s32.totalorder %s28, 1
      %p149 = por %p147, %p148
      %p150 = scmp.ne.s32.totalorder %s142, %s145
      %p151 = scmp.eq.s32.totalorder %s28, 0
      %p152 = por %p150, %p151
      %p153 = scmp.ne.s32.totalorder %s142, %s145
      %p154 = scmp.eq.s32.totalorder %s33, 1
      %p155 = por %p153, %p154
      %p156 = scmp.ne.s32.totalorder %s145, %s146
      %p157 = scmp.eq.s32.totalorder %s33, 0
      %p158 = por %p156, %p157
      %p159 = scmp.ne.s32.totalorder %s145, %s146
      %p160 = scmp.eq.s32.totalorder %s34, 1
      %p161 = por %p159, %p160
      %p163 = scmp.ne.s32.totalorder %s146, %s162
      %p164 = scmp.eq.s32.totalorder %s34, 0
      %p165 = por %p163, %p164
      %s166 = ssub.s32 %s28, %s35
      %p167 = scmp.eq.s32.totalorder %s166, 0
      %s169 = sadd.s32 %s168, 1
      %s170 = scalar_select %p167, %s168, %s169
      %p173 = pneg %p167
      %p174 = scmp.eq.s32.totalorder %s28, 1
      %p175 = por %p173, %p174
      %p176 = scmp.ne.s32.totalorder %s168, %s171
      %p177 = scmp.eq.s32.totalorder %s28, 0
      %p178 = por %p176, %p177
      %p179 = scmp.ne.s32.totalorder %s168, %s171
      %p180 = scmp.eq.s32.totalorder %s33, 1
      %p181 = por %p179, %p180
      %p182 = scmp.ne.s32.totalorder %s171, %s172
      %p183 = scmp.eq.s32.totalorder %s33, 0
      %p184 = por %p182, %p183
      %p185 = scmp.ne.s32.totalorder %s171, %s172
      %p186 = scmp.eq.s32.totalorder %s34, 1
      %p187 = por %p185, %p186
      %p189 = scmp.ne.s32.totalorder %s172, %s188
      %p190 = scmp.eq.s32.totalorder %s34, 0
      %p191 = por %p189, %p190
      %s192 = ssub.s32 %s28, %s35
      %p193 = scmp.eq.s32.totalorder %s192, 0
      %s195 = sadd.s32 %s194, 1
      %s196 = scalar_select %p193, %s194, %s195
      %p199 = pneg %p193
      %p200 = scmp.eq.s32.totalorder %s28, 1
      %p201 = por %p199, %p200
      %p202 = scmp.ne.s32.totalorder %s194, %s197
      %p203 = scmp.eq.s32.totalorder %s28, 0
      %p204 = por %p202, %p203
      %p205 = scmp.ne.s32.totalorder %s194, %s197
      %p206 = scmp.eq.s32.totalorder %s33, 1
      %p207 = por %p205, %p206
      %p208 = scmp.ne.s32.totalorder %s197, %s198
      %p209 = scmp.eq.s32.totalorder %s33, 0
      %p210 = por %p208, %p209
      %p211 = scmp.ne.s32.totalorder %s197, %s198
      %p212 = scmp.eq.s32.totalorder %s34, 1
      %p213 = por %p211, %p212
      %p215 = scmp.ne.s32.totalorder %s198, %s214
      %p216 = scmp.eq.s32.totalorder %s34, 0
      %p217 = por %p215, %p216
      %s218 = ssub.s32 %s28, %s35
      %p219 = scmp.eq.s32.totalorder %s218, 0
      %s221 = sadd.s32 %s220, 1
      %s222 = scalar_select %p219, %s220, %s221
      %p225 = pneg %p219
      %p226 = scmp.eq.s32.totalorder %s28, 1
      %p227 = por %p225, %p226
      %p228 = scmp.ne.s32.totalorder %s220, %s223
      %p229 = scmp.eq.s32.totalorder %s28, 0
      %p230 = por %p228, %p229
      %p231 = scmp.ne.s32.totalorder %s220, %s223
      %p232 = scmp.eq.s32.totalorder %s33, 1
      %p233 = por %p231, %p232
      %p234 = scmp.ne.s32.totalorder %s223, %s224
      %p235 = scmp.eq.s32.totalorder %s33, 0
      %p236 = por %p234, %p235
      %p237 = scmp.ne.s32.totalorder %s223, %s224
      %p238 = scmp.eq.s32.totalorder %s34, 1
      %p239 = por %p237, %p238
      %p241 = scmp.ne.s32.totalorder %s224, %s240
      %p242 = scmp.eq.s32.totalorder %s34, 0
      %p243 = por %p241, %p242
      %s244 = ssub.s32 %s28, %s35
      %p245 = scmp.eq.s32.totalorder %s244, 0
      %s247 = sadd.s32 %s246, 1
      %s248 = scalar_select %p245, %s246, %s247
      %p251 = pneg %p245
      %p252 = scmp.eq.s32.totalorder %s28, 1
      %p253 = por %p251, %p252
      %p254 = scmp.ne.s32.totalorder %s246, %s249
      %p255 = scmp.eq.s32.totalorder %s28, 0
      %p256 = por %p254, %p255
      %p257 = scmp.ne.s32.totalorder %s246, %s249
      %p258 = scmp.eq.s32.totalorder %s33, 1
      %p259 = por %p257, %p258
      %p260 = scmp.ne.s32.totalorder %s249, %s250
      %p261 = scmp.eq.s32.totalorder %s33, 0
      %p262 = por %p260, %p261
      %p263 = scmp.ne.s32.totalorder %s249, %s250
      %p264 = scmp.eq.s32.totalorder %s34, 1
      %p265 = por %p263, %p264
      %p267 = scmp.ne.s32.totalorder %s250, %s266
      %p268 = scmp.eq.s32.totalorder %s34, 0
      %p269 = por %p267, %p268
      %s270 = ssub.s32 %s28, %s35
      %p271 = scmp.eq.s32.totalorder %s270, 0
      %s273 = sadd.s32 %s272, 1
      %s274 = scalar_select %p271, %s272, %s273
      %p277 = pneg %p271
      %p278 = scmp.eq.s32.totalorder %s28, 1
      %p279 = por %p277, %p278
      %p280 = scmp.ne.s32.totalorder %s272, %s275
      %p281 = scmp.eq.s32.totalorder %s28, 0
      %p282 = por %p280, %p281
      %p283 = scmp.ne.s32.totalorder %s272, %s275
      %p284 = scmp.eq.s32.totalorder %s33, 1
      %p285 = por %p283, %p284
      %p286 = scmp.ne.s32.totalorder %s275, %s276
      %p287 = scmp.eq.s32.totalorder %s33, 0
      %p288 = por %p286, %p287
      %p289 = scmp.ne.s32.totalorder %s275, %s276
      %p290 = scmp.eq.s32.totalorder %s34, 1
      %p291 = por %p289, %p290
      %p293 = scmp.ne.s32.totalorder %s276, %s292
      %p294 = scmp.eq.s32.totalorder %s34, 0
      %p295 = por %p293, %p294
      %p296 = scmp.le.s32.totalorder 1, %s28
      %p297 = scmp.lt.s32.totalorder %s28, 3
      %p298 = pnand %p296, %p297
      %p299 = pneg %p298
      // Predicated region
      $region9: #{tpu_custom_call.1} parent=5 // pred_check
        _
      $region10: #{tpu_custom_call.1} parent=5 // pred_check_branch
        %301 = sbr.rel (%p298) target = $region12
      $region11: #{tpu_custom_call.1} parent=5 // pred_region
        %s302 = ssub.s32 %s28, 1
      $region12: #{tpu_custom_call.1} parent=5 // pred_fallthru
        _
      %p303 = scmp.lt.s32.totalorder %s28, 2
      // Predicated region
      $region13: #{tpu_custom_call.1} parent=5 // pred_check
        %p304 = pneg %p303
      $region14: #{tpu_custom_call.1} parent=5 // pred_check_branch
        %306 = sbr.rel (%p304) target = $region16
      $region15: #{tpu_custom_call.1} parent=5 // pred_region
        // Predicated region
        $region17: #{tpu_custom_call.1} parent=15 // pred_check
          %p307 = pneg %p48
        $region18: #{tpu_custom_call.1} parent=15 // pred_check_branch
          %309 = sbr.rel (%p307) target = $region20
        $region19: #{tpu_custom_call.1} parent=15 // pred_region
          %s310 = sand.u32 %s38, 1
          %s311 = scalar_lea.sflag [#allocation3], %s310
          %s312 = sand.u32 %s38, 1
          %s313 = smul.addr %s312, 160
          %s314 = scalar_lea.vmem [#allocation2], %s313
          %s316 = ssub.s32 2560, 2560
          %317 = vsyncadd %s311, %s316
          %s318 = smul.addr %s28, 20
          %s319 = smul.addr %s318, 128
          %s320 = scalar_lea.hbm %s0, %s319
          %s321 = sshll.u32 %s314, 4
          %s322 = int_to_ptr.vmem [resolvable:$true] %s321
          %327 = dma.hbm_to_vmem [thread:$0]  %s320, 2560, %s322, %s311, 256, 256, 16
        $region20: #{tpu_custom_call.1} parent=15 // pred_fallthru
          _
        // Predicated region
        $region21: #{tpu_custom_call.1} parent=15 // pred_check
          %p328 = pneg %p74
        $region22: #{tpu_custom_call.1} parent=15 // pred_check_branch
          %330 = sbr.rel (%p328) target = $region24
        $region23: #{tpu_custom_call.1} parent=15 // pred_region
          %p331 = scmp.lt.s32.totalorder %s28, 1
          %s332 = scalar_select %p331, %s28, 1
          %s333 = smul.addr %s332, 2
          %s334 = smul.addr %s333, 4
          %s335 = scalar_lea.vmem %s1, %s334
        $region24: #{tpu_custom_call.1} parent=15 // pred_fallthru
          _
        // Predicated region
        $region25: #{tpu_custom_call.1} parent=15 // pred_check
          %p336 = pneg %p100
        $region26: #{tpu_custom_call.1} parent=15 // pred_check_branch
          %338 = sbr.rel (%p336) target = $region28
        $region27: #{tpu_custom_call.1} parent=15 // pred_region
          %p339 = scmp.lt.s32.totalorder %s28, 1
          %s340 = scalar_select %p339, %s28, 1
          %s341 = smul.addr %s340, 8
          %s342 = scalar_lea.vmem %s2, %s341
        $region28: #{tpu_custom_call.1} parent=15 // pred_fallthru
          _
        // Predicated region
        $region29: #{tpu_custom_call.1} parent=15 // pred_check
          %p343 = pneg %p126
        $region30: #{tpu_custom_call.1} parent=15 // pred_check_branch
          %345 = sbr.rel (%p343) target = $region32
        $region31: #{tpu_custom_call.1} parent=15 // pred_region
          %p346 = scmp.lt.s32.totalorder %s28, 1
          %s347 = scalar_select %p346, %s28, 1
          %s348 = smul.addr %s347, 8
          %s349 = scalar_lea.vmem %s3, %s348
        $region32: #{tpu_custom_call.1} parent=15 // pred_fallthru
          _
        // Predicated region
        $region33: #{tpu_custom_call.1} parent=15 // pred_check
          %p350 = pneg %p152
        $region34: #{tpu_custom_call.1} parent=15 // pred_check_branch
          %352 = sbr.rel (%p350) target = $region36
        $region35: #{tpu_custom_call.1} parent=15 // pred_region
          %p353 = scmp.lt.s32.totalorder %s28, 1
          %s354 = scalar_select %p353, %s28, 1
          %s355 = smul.addr %s354, 8
          %s356 = scalar_lea.vmem %s4, %s355
        $region36: #{tpu_custom_call.1} parent=15 // pred_fallthru
          _
        // Predicated region
        $region37: #{tpu_custom_call.1} parent=15 // pred_check
          %p357 = pneg %p178
        $region38: #{tpu_custom_call.1} parent=15 // pred_check_branch
          %359 = sbr.rel (%p357) target = $region40
        $region39: #{tpu_custom_call.1} parent=15 // pred_region
          %p360 = scmp.lt.s32.totalorder %s28, 1
          %s361 = scalar_select %p360, %s28, 1
          %s362 = smul.addr %s361, 8
          %s363 = scalar_lea.vmem %s5, %s362
        $region40: #{tpu_custom_call.1} parent=15 // pred_fallthru
          _
      $region16: #{tpu_custom_call.1} parent=5 // pred_fallthru
        _
      %p364 = scmp.le.s32.totalorder 1, %s28
      %p365 = scmp.lt.s32.totalorder %s28, 3
      %p366 = pnand %p364, %p365
      %p367 = pneg %p366
      // Predicated region
      $region41: #{tpu_custom_call.1} parent=5 // pred_check
        _
      $region42: #{tpu_custom_call.1} parent=5 // pred_check_branch
        %369 = sbr.rel (%p366) target = $region44
      $region43: #{tpu_custom_call.1} parent=5 // pred_region
        %s370 = ssub.s32 %s28, 1
        %s371 = sand.u32 %s41, 1
        %s372 = scalar_lea.sflag [#allocation3], %s371
        %s373 = sand.u32 %s41, 1
        %s374 = smul.addr %s373, 160
        %s375 = scalar_lea.vmem [#allocation2], %s374
        // Predicated region
        $region45: #{tpu_custom_call.1} parent=43 // pred_check
          %p376 = pneg %p54
        $region46: #{tpu_custom_call.1} parent=43 // pred_check_branch
          %378 = sbr.rel (%p376) target = $region48
        $region47: #{tpu_custom_call.1} parent=43 // pred_region
          %379 = dma.done %s372, 2560
        $region48: #{tpu_custom_call.1} parent=43 // pred_fallthru
          _
        %s380 = sand.u32 %s41, 1
        %s381 = scalar_lea.sflag [#allocation3], %s380
        %s382 = sand.u32 %s41, 1
        %s383 = smul.addr %s382, 160
        %s384 = scalar_lea.vmem [#allocation2], %s383
        %p385 = pneg %p54
        %p386 = pneg %p51
        %p387 = scmp.lt.s32.totalorder %s33, 1
        %s388 = scalar_select %p387, %s33, 1
        %s389 = smul.addr %s388, 2
        %s390 = smul.addr %s389, 4
        %s391 = scalar_lea.vmem %s1, %s390
        %p392 = pneg %p80
        %p393 = pneg %p77
        %p394 = scmp.lt.s32.totalorder %s33, 1
        %s395 = scalar_select %p394, %s33, 1
        %s396 = smul.addr %s395, 8
        %s397 = scalar_lea.vmem %s2, %s396
        %p398 = pneg %p106
        %p399 = pneg %p103
        %p400 = scmp.lt.s32.totalorder %s33, 1
        %s401 = scalar_select %p400, %s33, 1
        %s402 = smul.addr %s401, 8
        %s403 = scalar_lea.vmem %s3, %s402
        %p404 = pneg %p132
        %p405 = pneg %p129
        %p406 = scmp.lt.s32.totalorder %s33, 1
        %s407 = scalar_select %p406, %s33, 1
        %s408 = smul.addr %s407, 8
        %s409 = scalar_lea.vmem %s4, %s408
        %p410 = pneg %p158
        %p411 = pneg %p155
        %p412 = scmp.lt.s32.totalorder %s33, 1
        %s413 = scalar_select %p412, %s33, 1
        %s414 = smul.addr %s413, 8
        %s415 = scalar_lea.vmem %s5, %s414
        %p416 = pneg %p184
        %p417 = pneg %p181
        %p418 = pneg %p210
        %p419 = pneg %p207
        %s420 = sand.u32 %s197, 1
        %s421 = scalar_lea.sflag [#allocation4], %s420
        %s422 = sand.u32 %s197, 1
        %s423 = smul.addr %s422, 2
        %s424 = scalar_lea.vmem [#allocation5], %s423
        %p425 = pneg %p236
        %p426 = pneg %p233
        %s427 = sand.u32 %s33, 1
        %s428 = scalar_lea.sflag [#allocation7], %s427
        %s429 = sand.u32 %s223, 1
        %s430 = smul.addr %s429, 8
        %s431 = scalar_lea.vmem [#allocation6], %s430
        %p432 = pneg %p262
        %p433 = pneg %p259
        %s434 = sand.u32 %s33, 1
        %s435 = scalar_lea.sflag [#allocation7], %s434
        %s436 = sand.u32 %s249, 1
        %s437 = smul.addr %s436, 160
        %s438 = scalar_lea.vmem [#allocation8], %s437
        %p439 = pneg %p288
        %p440 = pneg %p285
        %s441 = sand.u32 %s275, 1
        %s442 = scalar_lea.sflag [#allocation10], %s441
        %s443 = sand.u32 %s275, 1
        %s444 = smul.addr %s443, 2
        %s445 = scalar_lea.vmem [#allocation9], %s444
        %p446 = scmp.lt.s32.totalorder %s33, 1
        %s447 = scalar_select %p446, %s33, 1
        %s448 = smul.addr %s447, 2
        %s449 = smul.addr %s448, 4
        %s450 = scalar_lea.vmem %s1, %s449
        %p451 = scmp.lt.s32.totalorder %s33, 1
        %s452 = scalar_select %p451, %s33, 1
        %s453 = smul.addr %s452, 8
        %s454 = scalar_lea.vmem %s2, %s453
        %p455 = scmp.lt.s32.totalorder %s33, 1
        %s456 = scalar_select %p455, %s33, 1
        %s457 = smul.addr %s456, 8
        %s458 = scalar_lea.vmem %s3, %s457
        %p459 = scmp.lt.s32.totalorder %s33, 1
        %s460 = scalar_select %p459, %s33, 1
        %s461 = smul.addr %s460, 8
        %s462 = scalar_lea.vmem %s4, %s461
        %p463 = scmp.lt.s32.totalorder %s33, 1
        %s464 = scalar_select %p463, %s33, 1
        %s465 = smul.addr %s464, 8
        %s466 = scalar_lea.vmem %s5, %s465
        %v467 = vld [vmem:[%s375] sm:$0xff]
        %v468 = vld [vmem:[%s375 + $0x8] sm:$0xff]
        %v469 = vld [vmem:[%s375 + $0x10] sm:$0xff]
        %v470 = vld [vmem:[%s375 + $0x18] sm:$0xff]
        %v471 = vld [vmem:[%s375 + $0x20] sm:$0xff]
        %v472 = vld [vmem:[%s375 + $0x28] sm:$0xff]
        %v473 = vld [vmem:[%s375 + $0x30] sm:$0xff]
        %v474 = vld [vmem:[%s375 + $0x38] sm:$0xff]
        %v475 = vld [vmem:[%s375 + $0x40] sm:$0xff]
        %v476 = vld [vmem:[%s375 + $0x48] sm:$0xff]
        %v477 = vld [vmem:[%s375 + $0x50] sm:$0xff]
        %v478 = vld [vmem:[%s375 + $0x58] sm:$0xff]
        %v479 = vld [vmem:[%s375 + $0x60] sm:$0xff]
        %v480 = vld [vmem:[%s375 + $0x68] sm:$0xff]
        %v481 = vld [vmem:[%s375 + $0x70] sm:$0xff]
        %v482 = vld [vmem:[%s375 + $0x78] sm:$0xff]
        %v483 = vld [vmem:[%s375 + $0x80] sm:$0xff]
        %v484 = vld [vmem:[%s375 + $0x88] sm:$0xff]
        %v485 = vld [vmem:[%s375 + $0x90] sm:$0xff]
        %v486 = vld [vmem:[%s375 + $0x98] sm:$0xff]
        %v487 = vld [vmem:[%s450] sm:$0xff]
        %v488 = vld [vmem:[%s454] sm:$0xff]
        %v489 = vld [vmem:[%s458] sm:$0xff]
        %v490 = vld [vmem:[%s462] sm:$0x1f]
        %v491 = vld [vmem:[%s466] sm:$0xff]
        %493 = vset.pattern.permute.xlu0 2
        %494 = vperm.xlu0 %493, %v489
        %v495 = vpop.permute.xlu0 %494
        %v498 = vlaneseq
        %v499 = vshrl.u32 %v498, 7
        %v500 = vsub.s32 2, %v499
        %v501 = vrot.slane %v487, %v500
        %v502 = vlaneseq
        %v503 = vshrl.u32 %v502, 7
        %v504 = vsub.s32 6, %v503
        %v505 = vrot.slane %v487, %v504
        %v508 = vlaneseq
        %v509 = vshrl.u32 %v508, 7
        %v510 = vsub.s32 2, %v509
        %v511 = vrot.slane %v501, %v510
        %v512 = vlaneseq
        %v513 = vshrl.u32 %v512, 7
        %v514 = vsub.s32 2, %v513
        %v515 = vrot.slane %v505, %v514
        %v516 = vmin.f32 %v495, %v511
        %v517 = vmin.f32 %v495, %v515
        %518 = vset.pattern.permute.xlu0 0
        %519 = vperm.xlu0 %518, %v489
        %v520 = vpop.permute.xlu0 %519
        %v522 = vlaneseq
        %v523 = vshrl.u32 %v522, 7
        %v524 = vsub.s32 0, %v523
        %v525 = vrot.slane %v487, %v524
        %v526 = vlaneseq
        %v527 = vshrl.u32 %v526, 7
        %v528 = vsub.s32 4, %v527
        %v529 = vrot.slane %v487, %v528
        %v532 = vlaneseq
        %v533 = vshrl.u32 %v532, 7
        %v534 = vsub.s32 0, %v533
        %v535 = vrot.slane %v525, %v534
        %v536 = vlaneseq
        %v537 = vshrl.u32 %v536, 7
        %v538 = vsub.s32 0, %v537
        %v539 = vrot.slane %v529, %v538
        %v540 = vmax.f32 %v520, %v535
        %v541 = vmax.f32 %v520, %v539
        %v542 = vsub.f32 %v516, %v540
        %v543 = vsub.f32 %v517, %v541
        %v544 = vmax.f32 %v542, 0.0
        %v545 = vmax.f32 %v543, 0.0
        %546 = vset.pattern.permute.xlu0 3
        %547 = vperm.xlu0 %546, %v489
        %v548 = vpop.permute.xlu0 %547
        %v550 = vlaneseq
        %v551 = vshrl.u32 %v550, 7
        %v552 = vsub.s32 3, %v551
        %v553 = vrot.slane %v487, %v552
        %v554 = vlaneseq
        %v555 = vshrl.u32 %v554, 7
        %v556 = vsub.s32 7, %v555
        %v557 = vrot.slane %v487, %v556
        %v560 = vlaneseq
        %v561 = vshrl.u32 %v560, 7
        %v562 = vsub.s32 3, %v561
        %v563 = vrot.slane %v553, %v562
        %v564 = vlaneseq
        %v565 = vshrl.u32 %v564, 7
        %v566 = vsub.s32 3, %v565
        %v567 = vrot.slane %v557, %v566
        %v568 = vmin.f32 %v548, %v563
        %v569 = vmin.f32 %v548, %v567
        %570 = vset.pattern.permute.xlu0 1
        %571 = vperm.xlu0 %570, %v489
        %v572 = vpop.permute.xlu0 %571
        %v574 = vlaneseq
        %v575 = vshrl.u32 %v574, 7
        %v576 = vsub.s32 1, %v575
        %v577 = vrot.slane %v487, %v576
        %v578 = vlaneseq
        %v579 = vshrl.u32 %v578, 7
        %v580 = vsub.s32 5, %v579
        %v581 = vrot.slane %v487, %v580
        %v584 = vlaneseq
        %v585 = vshrl.u32 %v584, 7
        %v586 = vsub.s32 1, %v585
        %v587 = vrot.slane %v577, %v586
        %v588 = vlaneseq
        %v589 = vshrl.u32 %v588, 7
        %v590 = vsub.s32 1, %v589
        %v591 = vrot.slane %v581, %v590
        %v592 = vmax.f32 %v572, %v587
        %v593 = vmax.f32 %v572, %v591
        %v594 = vsub.f32 %v568, %v592
        %v595 = vsub.f32 %v569, %v593
        %v596 = vmax.f32 %v594, 0.0
        %v597 = vmax.f32 %v595, 0.0
        %v598 = vmul.f32 %v544, %v596
        %v599 = vmul.f32 %v545, %v597
        %600 = vrot.lane.b32.xlu0 %v489, 2
        %v601 = vpop.permute.xlu0 %600
        %v603 = vsub.f32 %v489, %v601
        %v604 = vmax.f32 %v603, 0.0
        %606 = vrot.lane.b32.xlu0 %v604, 127
        %v607 = vpop.permute.xlu0 %606
        %v609 = vmul.f32 %v604, %v607
        %v610 = vrot.slane %v487, 6
        %v612 = vsub.f32 %v487, %v610
        %v613 = vmax.f32 %v612, 0.0
        %v615 = vrot.slane %v613, 5
        %v616 = vrot.slane %v615, 4
        %v618 = vmul.f32 %v613, %v616
        %620 = vset.pattern.permute.xlu0 2
        %621 = vperm.xlu0 %620, %v609
        %v622 = vpop.permute.xlu0 %621
        %v625 = vlaneseq
        %v626 = vshrl.u32 %v625, 7
        %v627 = vsub.s32 2, %v626
        %v628 = vrot.slane %v618, %v627
        %v629 = vlaneseq
        %v630 = vshrl.u32 %v629, 7
        %v631 = vsub.s32 6, %v630
        %v632 = vrot.slane %v618, %v631
        %v635 = vlaneseq
        %v636 = vshrl.u32 %v635, 7
        %v637 = vsub.s32 2, %v636
        %v638 = vrot.slane %v628, %v637
        %v639 = vlaneseq
        %v640 = vshrl.u32 %v639, 7
        %v641 = vsub.s32 2, %v640
        %v642 = vrot.slane %v632, %v641
        %v643 = vadd.f32 %v622, %v638
        %v644 = vadd.f32 %v622, %v642
        %v645 = vsub.f32 %v643, %v598
        %v646 = vsub.f32 %v644, %v599
        %v647 = vadd.f32 %v645, 1e-09
        %v648 = vadd.f32 %v646, 1e-09
        %v649 = vrcp.pop %v647
        %v650 = vmul.f32 %v598, %v649
        %v651 = vrcp.pop %v648
        %v652 = vmul.f32 %v599, %v651
        %v653 = vlaneseq
        %v654 = vand.u32 %v653, 127
        %655 = vset.pattern.permute.xlu0 0
        %656 = vperm.xlu0 %655, %v488
        %v657 = vpop.permute.xlu0 %656
        %vm658 = vcmp.eq.s32.totalorder %v654, %v657
        %v659 = vsel %vm658, 1, 0
        %v660 = vcvt.s32.f32 %v659
        %vm661 = vcmask 654336
        %v663 = vsel %vm661, %v660, 0
        %v665 = vand.u32 %v468, 4294901760
        %666 = vmatprep.subr.mxu0 %v665
        %v667 = vand.u32 %v467, 4294901760
        %668 = vmatpush1.msra.mxu0 %v667
        %v669 = vand.u32 %v470, 4294901760
        %670 = vmatprep.subr.mxu0 %v669
        %v671 = vand.u32 %v469, 4294901760
        %672 = vmatpush1.msra.mxu0 %v671
        %v673 = vand.u32 %v472, 4294901760
        %674 = vmatprep.subr.mxu0 %v673
        %v675 = vand.u32 %v471, 4294901760
        %676 = vmatpush1.msra.mxu0 %v675
        %v677 = vand.u32 %v474, 4294901760
        %678 = vmatprep.subr.mxu0 %v677
        %v679 = vand.u32 %v473, 4294901760
        %680 = vmatpush1.msra.mxu0 %v679
        %v681 = vand.u32 %v476, 4294901760
        %682 = vmatprep.subr.mxu0 %v681
        %v683 = vand.u32 %v475, 4294901760
        %684 = vmatpush1.msra.mxu0 %v683
        %v685 = vand.u32 %v478, 4294901760
        %686 = vmatprep.subr.mxu0 %v685
        %v687 = vand.u32 %v477, 4294901760
        %688 = vmatpush1.msra.mxu0 %v687
        %v689 = vand.u32 %v480, 4294901760
        %690 = vmatprep.subr.mxu0 %v689
        %v691 = vand.u32 %v479, 4294901760
        %692 = vmatpush1.msra.mxu0 %v691
        %v693 = vand.u32 %v482, 4294901760
        %694 = vmatprep.subr.mxu0 %v693
        %v695 = vand.u32 %v481, 4294901760
        %696 = vmatpush1.msra.mxu0 %v695
        %v697 = vand.u32 %v484, 4294901760
        %698 = vmatprep.subr.mxu0 %v697
        %v699 = vand.u32 %v483, 4294901760
        %700 = vmatpush1.msra.mxu0 %v699
        %v701 = vand.u32 %v486, 4294901760
        %702 = vmatprep.subr.mxu0 %v701
        %v703 = vand.u32 %v485, 4294901760
        %704 = vmatpush1.msra.mxu0 %v703
        %705 = vmatprep.subr.mxu0 0.0
        %706 = vmatpush1.msra.mxu0 0.0
        %707 = vmatprep.subr.mxu0 0.0
        %708 = vmatpush1.msra.mxu0 0.0
        %709 = vmatprep.subr.mxu0 0.0
        %710 = vmatpush1.msra.mxu0 0.0
        %711 = vmatprep.subr.mxu0 0.0
        %712 = vmatpush1.msra.mxu0 0.0
        %713 = vmatprep.subr.mxu0 0.0
        %714 = vmatpush1.msra.mxu0 0.0
        %715 = vmatprep.subr.mxu0 0.0
        %716 = vmatpush1.msra.mxu0 0.0
        %717 = vmatprep.subr.mxu0 0.0
        %718 = vmatpush1.msra.mxu0 0.0
        %719 = vmatprep.subr.mxu0 0.0
        %720 = vmatpush1.msra.mxu0 0.0
        %721 = vmatprep.subr.mxu0 0.0
        %722 = vmatpush1.msra.mxu0 0.0
        %723 = vmatprep.subr.mxu0 0.0
        %724 = vmatpush1.msra.mxu0 0.0
        %725 = vmatprep.subr.mxu0 0.0
        %726 = vmatpush1.msra.mxu0 0.0
        %727 = vmatprep.subr.mxu0 0.0
        %728 = vmatpush1.msra.mxu0 0.0
        %729 = vmatprep.subr.mxu0 0.0
        %730 = vmatpush1.msra.mxu0 0.0
        %731 = vmatprep.subr.mxu0 0.0
        %732 = vmatpush1.msra.mxu0 0.0
        %733 = vmatprep.subr.mxu0 0.0
        %734 = vmatpush1.msra.mxu0 0.0
        %735 = vmatprep.subr.mxu0 0.0
        %736 = vmatpush1.msra.mxu0 0.0
        %737 = vmatprep.subr.mxu0 0.0
        %738 = vmatpush1.msra.mxu0 0.0
        %739 = vmatprep.subr.mxu0 0.0
        %740 = vmatpush1.msra.mxu0 0.0
        %741 = vmatprep.subr.mxu0 0.0
        %742 = vmatpush1.msra.mxu0 0.0
        %743 = vmatprep.subr.mxu0 0.0
        %744 = vmatpush1.msra.mxu0 0.0
        %745 = vmatprep.subr.mxu0 0.0
        %746 = vmatpush1.msra.mxu0 0.0
        %747 = vmatprep.subr.mxu0 0.0
        %748 = vmatpush1.msra.mxu0 0.0
        %749 = vmatprep.mubr.f32.mxu0 0.0
        %v750 = vand.u32 %v663, 4294901760
        %v751 = vsub.f32 %v663, %v750
        %v752 = vand.u32 %v751, 4294901760
        %v753 = vsub.f32 %v751, %v752
        %v754 = vand.u32 %v753, 4294901760
        %755 = vmatmul.mubr.f32.gmra.mrb[0].mxu0 %v754
        %v756 = vpop.f32.mrb[0].mxu0
        %v757 = vadd.f32 0.0, %v756
        %v758 = vpop.f32.mrb[0].mxu0
        %v759 = vadd.f32 0.0, %v758
        %760 = vdwg.mxu0
        %v761 = vand.u32 %v468, 4294901760
        %v762 = vsub.f32 %v468, %v761
        %v763 = vand.u32 %v762, 4294901760
        %v764 = vsub.f32 %v762, %v763
        %v765 = vand.u32 %v764, 4294901760
        %766 = vmatprep.subr.mxu0 %v765
        %v767 = vand.u32 %v467, 4294901760
        %v768 = vsub.f32 %v467, %v767
        %v769 = vand.u32 %v768, 4294901760
        %v770 = vsub.f32 %v768, %v769
        %v771 = vand.u32 %v770, 4294901760
        %772 = vmatpush1.msra.mxu0 %v771
        %v773 = vand.u32 %v470, 4294901760
        %v774 = vsub.f32 %v470, %v773
        %v775 = vand.u32 %v774, 4294901760
        %v776 = vsub.f32 %v774, %v775
        %v777 = vand.u32 %v776, 4294901760
        %778 = vmatprep.subr.mxu0 %v777
        %v779 = vand.u32 %v469, 4294901760
        %v780 = vsub.f32 %v469, %v779
        %v781 = vand.u32 %v780, 4294901760
        %v782 = vsub.f32 %v780, %v781
        %v783 = vand.u32 %v782, 4294901760
        %784 = vmatpush1.msra.mxu0 %v783
        %v785 = vand.u32 %v472, 4294901760
        %v786 = vsub.f32 %v472, %v785
        %v787 = vand.u32 %v786, 4294901760
        %v788 = vsub.f32 %v786, %v787
        %v789 = vand.u32 %v788, 4294901760
        %790 = vmatprep.subr.mxu0 %v789
        %v791 = vand.u32 %v471, 4294901760
        %v792 = vsub.f32 %v471, %v791
        %v793 = vand.u32 %v792, 4294901760
        %v794 = vsub.f32 %v792, %v793
        %v795 = vand.u32 %v794, 4294901760
        %796 = vmatpush1.msra.mxu0 %v795
        %v797 = vand.u32 %v474, 4294901760
        %v798 = vsub.f32 %v474, %v797
        %v799 = vand.u32 %v798, 4294901760
        %v800 = vsub.f32 %v798, %v799
        %v801 = vand.u32 %v800, 4294901760
        %802 = vmatprep.subr.mxu0 %v801
        %v803 = vand.u32 %v473, 4294901760
        %v804 = vsub.f32 %v473, %v803
        %v805 = vand.u32 %v804, 4294901760
        %v806 = vsub.f32 %v804, %v805
        %v807 = vand.u32 %v806, 4294901760
        %808 = vmatpush1.msra.mxu0 %v807
        %v809 = vand.u32 %v476, 4294901760
        %v810 = vsub.f32 %v476, %v809
        %v811 = vand.u32 %v810, 4294901760
        %v812 = vsub.f32 %v810, %v811
        %v813 = vand.u32 %v812, 4294901760
        %814 = vmatprep.subr.mxu0 %v813
        %v815 = vand.u32 %v475, 4294901760
        %v816 = vsub.f32 %v475, %v815
        %v817 = vand.u32 %v816, 4294901760
        %v818 = vsub.f32 %v816, %v817
        %v819 = vand.u32 %v818, 4294901760
        %820 = vmatpush1.msra.mxu0 %v819
        %v821 = vand.u32 %v478, 4294901760
        %v822 = vsub.f32 %v478, %v821
        %v823 = vand.u32 %v822, 4294901760
        %v824 = vsub.f32 %v822, %v823
        %v825 = vand.u32 %v824, 4294901760
        %826 = vmatprep.subr.mxu0 %v825
        %v827 = vand.u32 %v477, 4294901760
        %v828 = vsub.f32 %v477, %v827
        %v829 = vand.u32 %v828, 4294901760
        %v830 = vsub.f32 %v828, %v829
        %v831 = vand.u32 %v830, 4294901760
        %832 = vmatpush1.msra.mxu0 %v831
        %v833 = vand.u32 %v480, 4294901760
        %v834 = vsub.f32 %v480, %v833
        %v835 = vand.u32 %v834, 4294901760
        %v836 = vsub.f32 %v834, %v835
        %v837 = vand.u32 %v836, 4294901760
        %838 = vmatprep.subr.mxu0 %v837
        %v839 = vand.u32 %v479, 4294901760
        %v840 = vsub.f32 %v479, %v839
        %v841 = vand.u32 %v840, 4294901760
        %v842 = vsub.f32 %v840, %v841
        %v843 = vand.u32 %v842, 4294901760
        %844 = vmatpush1.msra.mxu0 %v843
        %v845 = vand.u32 %v482, 4294901760
        %v846 = vsub.f32 %v482, %v845
        %v847 = vand.u32 %v846, 4294901760
        %v848 = vsub.f32 %v846, %v847
        %v849 = vand.u32 %v848, 4294901760
        %850 = vmatprep.subr.mxu0 %v849
        %v851 = vand.u32 %v481, 4294901760
        %v852 = vsub.f32 %v481, %v851
        %v853 = vand.u32 %v852, 4294901760
        %v854 = vsub.f32 %v852, %v853
        %v855 = vand.u32 %v854, 4294901760
        %856 = vmatpush1.msra.mxu0 %v855
        %v857 = vand.u32 %v484, 4294901760
        %v858 = vsub.f32 %v484, %v857
        %v859 = vand.u32 %v858, 4294901760
        %v860 = vsub.f32 %v858, %v859
        %v861 = vand.u32 %v860, 4294901760
        %862 = vmatprep.subr.mxu0 %v861
        %v863 = vand.u32 %v483, 4294901760
        %v864 = vsub.f32 %v483, %v863
        %v865 = vand.u32 %v864, 4294901760
        %v866 = vsub.f32 %v864, %v865
        %v867 = vand.u32 %v866, 4294901760
        %868 = vmatpush1.msra.mxu0 %v867
        %v869 = vand.u32 %v486, 4294901760
        %v870 = vsub.f32 %v486, %v869
        %v871 = vand.u32 %v870, 4294901760
        %v872 = vsub.f32 %v870, %v871
        %v873 = vand.u32 %v872, 4294901760
        %874 = vmatprep.subr.mxu0 %v873
        %v875 = vand.u32 %v485, 4294901760
        %v876 = vsub.f32 %v485, %v875
        %v877 = vand.u32 %v876, 4294901760
        %v878 = vsub.f32 %v876, %v877
        %v879 = vand.u32 %v878, 4294901760
        %880 = vmatpush1.msra.mxu0 %v879
        %881 = vmatprep.subr.mxu0 0.0
        %882 = vmatpush1.msra.mxu0 0.0
        %883 = vmatprep.subr.mxu0 0.0
        %884 = vmatpush1.msra.mxu0 0.0
        %885 = vmatprep.subr.mxu0 0.0
        %886 = vmatpush1.msra.mxu0 0.0
        %887 = vmatprep.subr.mxu0 0.0
        %888 = vmatpush1.msra.mxu0 0.0
        %889 = vmatprep.subr.mxu0 0.0
        %890 = vmatpush1.msra.mxu0 0.0
        %891 = vmatprep.subr.mxu0 0.0
        %892 = vmatpush1.msra.mxu0 0.0
        %893 = vmatprep.subr.mxu0 0.0
        %894 = vmatpush1.msra.mxu0 0.0
        %895 = vmatprep.subr.mxu0 0.0
        %896 = vmatpush1.msra.mxu0 0.0
        %897 = vmatprep.subr.mxu0 0.0
        %898 = vmatpush1.msra.mxu0 0.0
        %899 = vmatprep.subr.mxu0 0.0
        %900 = vmatpush1.msra.mxu0 0.0
        %901 = vmatprep.subr.mxu0 0.0
        %902 = vmatpush1.msra.mxu0 0.0
        %903 = vmatprep.subr.mxu0 0.0
        %904 = vmatpush1.msra.mxu0 0.0
        %905 = vmatprep.subr.mxu0 0.0
        %906 = vmatpush1.msra.mxu0 0.0
        %907 = vmatprep.subr.mxu0 0.0
        %908 = vmatpush1.msra.mxu0 0.0
        %909 = vmatprep.subr.mxu0 0.0
        %910 = vmatpush1.msra.mxu0 0.0
        %911 = vmatprep.subr.mxu0 0.0
        %912 = vmatpush1.msra.mxu0 0.0
        %913 = vmatprep.subr.mxu0 0.0
        %914 = vmatpush1.msra.mxu0 0.0
        %915 = vmatprep.subr.mxu0 0.0
        %916 = vmatpush1.msra.mxu0 0.0
        %917 = vmatprep.subr.mxu0 0.0
        %918 = vmatpush1.msra.mxu0 0.0
        %919 = vmatprep.subr.mxu0 0.0
        %920 = vmatpush1.msra.mxu0 0.0
        %921 = vmatprep.subr.mxu0 0.0
        %922 = vmatpush1.msra.mxu0 0.0
        %923 = vmatprep.subr.mxu0 0.0
        %924 = vmatpush1.msra.mxu0 0.0
        %925 = vmatprep.mubr.f32.mxu0 0.0
        %v926 = vand.u32 %v663, 4294901760
        %927 = vmatmul.mubr.f32.gmra.mrb[0].mxu0 %v926
        %v928 = vpop.f32.mrb[0].mxu0
        %v929 = vadd.f32 %v757, %v928
        %v930 = vpop.f32.mrb[0].mxu0
        %v931 = vadd.f32 %v759, %v930
        %932 = vdwg.mxu0
        %v933 = vand.u32 %v468, 4294901760
        %v934 = vsub.f32 %v468, %v933
        %935 = vmatprep.subr.mxu0 %v934
        %v936 = vand.u32 %v467, 4294901760
        %v937 = vsub.f32 %v467, %v936
        %938 = vmatpush1.msra.mxu0 %v937
        %v939 = vand.u32 %v470, 4294901760
        %v940 = vsub.f32 %v470, %v939
        %941 = vmatprep.subr.mxu0 %v940
        %v942 = vand.u32 %v469, 4294901760
        %v943 = vsub.f32 %v469, %v942
        %944 = vmatpush1.msra.mxu0 %v943
        %v945 = vand.u32 %v472, 4294901760
        %v946 = vsub.f32 %v472, %v945
        %947 = vmatprep.subr.mxu0 %v946
        %v948 = vand.u32 %v471, 4294901760
        %v949 = vsub.f32 %v471, %v948
        %950 = vmatpush1.msra.mxu0 %v949
        %v951 = vand.u32 %v474, 4294901760
        %v952 = vsub.f32 %v474, %v951
        %953 = vmatprep.subr.mxu0 %v952
        %v954 = vand.u32 %v473, 4294901760
        %v955 = vsub.f32 %v473, %v954
        %956 = vmatpush1.msra.mxu0 %v955
        %v957 = vand.u32 %v476, 4294901760
        %v958 = vsub.f32 %v476, %v957
        %959 = vmatprep.subr.mxu0 %v958
        %v960 = vand.u32 %v475, 4294901760
        %v961 = vsub.f32 %v475, %v960
        %962 = vmatpush1.msra.mxu0 %v961
        %v963 = vand.u32 %v478, 4294901760
        %v964 = vsub.f32 %v478, %v963
        %965 = vmatprep.subr.mxu0 %v964
        %v966 = vand.u32 %v477, 4294901760
        %v967 = vsub.f32 %v477, %v966
        %968 = vmatpush1.msra.mxu0 %v967
        %v969 = vand.u32 %v480, 4294901760
        %v970 = vsub.f32 %v480, %v969
        %971 = vmatprep.subr.mxu0 %v970
        %v972 = vand.u32 %v479, 4294901760
        %v973 = vsub.f32 %v479, %v972
        %974 = vmatpush1.msra.mxu0 %v973
        %v975 = vand.u32 %v482, 4294901760
        %v976 = vsub.f32 %v482, %v975
        %977 = vmatprep.subr.mxu0 %v976
        %v978 = vand.u32 %v481, 4294901760
        %v979 = vsub.f32 %v481, %v978
        %980 = vmatpush1.msra.mxu0 %v979
        %v981 = vand.u32 %v484, 4294901760
        %v982 = vsub.f32 %v484, %v981
        %983 = vmatprep.subr.mxu0 %v982
        %v984 = vand.u32 %v483, 4294901760
        %v985 = vsub.f32 %v483, %v984
        %986 = vmatpush1.msra.mxu0 %v985
        %v987 = vand.u32 %v486, 4294901760
        %v988 = vsub.f32 %v486, %v987
        %989 = vmatprep.subr.mxu0 %v988
        %v990 = vand.u32 %v485, 4294901760
        %v991 = vsub.f32 %v485, %v990
        %992 = vmatpush1.msra.mxu0 %v991
        %993 = vmatprep.subr.mxu0 0.0
        %994 = vmatpush1.msra.mxu0 0.0
        %995 = vmatprep.subr.mxu0 0.0
        %996 = vmatpush1.msra.mxu0 0.0
        %997 = vmatprep.subr.mxu0 0.0
        %998 = vmatpush1.msra.mxu0 0.0
        %999 = vmatprep.subr.mxu0 0.0
        %1000 = vmatpush1.msra.mxu0 0.0
        %1001 = vmatprep.subr.mxu0 0.0
        %1002 = vmatpush1.msra.mxu0 0.0
        %1003 = vmatprep.subr.mxu0 0.0
        %1004 = vmatpush1.msra.mxu0 0.0
        %1005 = vmatprep.subr.mxu0 0.0
        %1006 = vmatpush1.msra.mxu0 0.0
        %1007 = vmatprep.subr.mxu0 0.0
        %1008 = vmatpush1.msra.mxu0 0.0
        %1009 = vmatprep.subr.mxu0 0.0
        %1010 = vmatpush1.msra.mxu0 0.0
        %1011 = vmatprep.subr.mxu0 0.0
        %1012 = vmatpush1.msra.mxu0 0.0
        %1013 = vmatprep.subr.mxu0 0.0
        %1014 = vmatpush1.msra.mxu0 0.0
        %1015 = vmatprep.subr.mxu0 0.0
        %1016 = vmatpush1.msra.mxu0 0.0
        %1017 = vmatprep.subr.mxu0 0.0
        %1018 = vmatpush1.msra.mxu0 0.0
        %1019 = vmatprep.subr.mxu0 0.0
        %1020 = vmatpush1.msra.mxu0 0.0
        %1021 = vmatprep.subr.mxu0 0.0
        %1022 = vmatpush1.msra.mxu0 0.0
        %1023 = vmatprep.subr.mxu0 0.0
        %1024 = vmatpush1.msra.mxu0 0.0
        %1025 = vmatprep.subr.mxu0 0.0
        %1026 = vmatpush1.msra.mxu0 0.0
        %1027 = vmatprep.subr.mxu0 0.0
        %1028 = vmatpush1.msra.mxu0 0.0
        %1029 = vmatprep.subr.mxu0 0.0
        %1030 = vmatpush1.msra.mxu0 0.0
        %1031 = vmatprep.subr.mxu0 0.0
        %1032 = vmatpush1.msra.mxu0 0.0
        %1033 = vmatprep.subr.mxu0 0.0
        %1034 = vmatpush1.msra.mxu0 0.0
        %1035 = vmatprep.subr.mxu0 0.0
        %1036 = vmatpush1.msra.mxu0 0.0
        %1037 = vmatprep.mubr.f32.mxu0 0.0
        %v1038 = vand.u32 %v663, 4294901760
        %v1039 = vsub.f32 %v663, %v1038
        %1040 = vmatmul.mubr.f32.gmra.mrb[0].mxu0 %v1039
        %v1041 = vpop.f32.mrb[0].mxu0
        %v1042 = vadd.f32 %v929, %v1041
        %v1043 = vpop.f32.mrb[0].mxu0
        %v1044 = vadd.f32 %v931, %v1043
        %1045 = vdwg.mxu0
        %v1046 = vand.u32 %v468, 4294901760
        %1047 = vmatprep.subr.mxu0 %v1046
        %v1048 = vand.u32 %v467, 4294901760
        %1049 = vmatpush1.msra.mxu0 %v1048
        %v1050 = vand.u32 %v470, 4294901760
        %1051 = vmatprep.subr.mxu0 %v1050
        %v1052 = vand.u32 %v469, 4294901760
        %1053 = vmatpush1.msra.mxu0 %v1052
        %v1054 = vand.u32 %v472, 4294901760
        %1055 = vmatprep.subr.mxu0 %v1054
        %v1056 = vand.u32 %v471, 4294901760
        %1057 = vmatpush1.msra.mxu0 %v1056
        %v1058 = vand.u32 %v474, 4294901760
        %1059 = vmatprep.subr.mxu0 %v1058
        %v1060 = vand.u32 %v473, 4294901760
        %1061 = vmatpush1.msra.mxu0 %v1060
        %v1062 = vand.u32 %v476, 4294901760
        %1063 = vmatprep.subr.mxu0 %v1062
        %v1064 = vand.u32 %v475, 4294901760
        %1065 = vmatpush1.msra.mxu0 %v1064
        %v1066 = vand.u32 %v478, 4294901760
        %1067 = vmatprep.subr.mxu0 %v1066
        %v1068 = vand.u32 %v477, 4294901760
        %1069 = vmatpush1.msra.mxu0 %v1068
        %v1070 = vand.u32 %v480, 4294901760
        %1071 = vmatprep.subr.mxu0 %v1070
        %v1072 = vand.u32 %v479, 4294901760
        %1073 = vmatpush1.msra.mxu0 %v1072
        %v1074 = vand.u32 %v482, 4294901760
        %1075 = vmatprep.subr.mxu0 %v1074
        %v1076 = vand.u32 %v481, 4294901760
        %1077 = vmatpush1.msra.mxu0 %v1076
        %v1078 = vand.u32 %v484, 4294901760
        %1079 = vmatprep.subr.mxu0 %v1078
        %v1080 = vand.u32 %v483, 4294901760
        %1081 = vmatpush1.msra.mxu0 %v1080
        %v1082 = vand.u32 %v486, 4294901760
        %1083 = vmatprep.subr.mxu0 %v1082
        %v1084 = vand.u32 %v485, 4294901760
        %1085 = vmatpush1.msra.mxu0 %v1084
        %1086 = vmatprep.subr.mxu0 0.0
        %1087 = vmatpush1.msra.mxu0 0.0
        %1088 = vmatprep.subr.mxu0 0.0
        %1089 = vmatpush1.msra.mxu0 0.0
        %1090 = vmatprep.subr.mxu0 0.0
        %1091 = vmatpush1.msra.mxu0 0.0
        %1092 = vmatprep.subr.mxu0 0.0
        %1093 = vmatpush1.msra.mxu0 0.0
        %1094 = vmatprep.subr.mxu0 0.0
        %1095 = vmatpush1.msra.mxu0 0.0
        %1096 = vmatprep.subr.mxu0 0.0
        %1097 = vmatpush1.msra.mxu0 0.0
        %1098 = vmatprep.subr.mxu0 0.0
        %1099 = vmatpush1.msra.mxu0 0.0
        %1100 = vmatprep.subr.mxu0 0.0
        %1101 = vmatpush1.msra.mxu0 0.0
        %1102 = vmatprep.subr.mxu0 0.0
        %1103 = vmatpush1.msra.mxu0 0.0
        %1104 = vmatprep.subr.mxu0 0.0
        %1105 = vmatpush1.msra.mxu0 0.0
        %1106 = vmatprep.subr.mxu0 0.0
        %1107 = vmatpush1.msra.mxu0 0.0
        %1108 = vmatprep.subr.mxu0 0.0
        %1109 = vmatpush1.msra.mxu0 0.0
        %1110 = vmatprep.subr.mxu0 0.0
        %1111 = vmatpush1.msra.mxu0 0.0
        %1112 = vmatprep.subr.mxu0 0.0
        %1113 = vmatpush1.msra.mxu0 0.0
        %1114 = vmatprep.subr.mxu0 0.0
        %1115 = vmatpush1.msra.mxu0 0.0
        %1116 = vmatprep.subr.mxu0 0.0
        %1117 = vmatpush1.msra.mxu0 0.0
        %1118 = vmatprep.subr.mxu0 0.0
        %1119 = vmatpush1.msra.mxu0 0.0
        %1120 = vmatprep.subr.mxu0 0.0
        %1121 = vmatpush1.msra.mxu0 0.0
        %1122 = vmatprep.subr.mxu0 0.0
        %1123 = vmatpush1.msra.mxu0 0.0
        %1124 = vmatprep.subr.mxu0 0.0
        %1125 = vmatpush1.msra.mxu0 0.0
        %1126 = vmatprep.subr.mxu0 0.0
        %1127 = vmatpush1.msra.mxu0 0.0
        %1128 = vmatprep.subr.mxu0 0.0
        %1129 = vmatpush1.msra.mxu0 0.0
        %1130 = vmatprep.mubr.f32.mxu0 0.0
        %v1131 = vand.u32 %v663, 4294901760
        %v1132 = vsub.f32 %v663, %v1131
        %v1133 = vand.u32 %v1132, 4294901760
        %1134 = vmatmul.mubr.f32.gmra.mrb[0].mxu0 %v1133
        %v1135 = vpop.f32.mrb[0].mxu0
        %v1136 = vadd.f32 %v1042, %v1135
        %v1137 = vpop.f32.mrb[0].mxu0
        %v1138 = vadd.f32 %v1044, %v1137
        %1139 = vdwg.mxu0
        %v1140 = vand.u32 %v468, 4294901760
        %v1141 = vsub.f32 %v468, %v1140
        %v1142 = vand.u32 %v1141, 4294901760
        %1143 = vmatprep.subr.mxu0 %v1142
        %v1144 = vand.u32 %v467, 4294901760
        %v1145 = vsub.f32 %v467, %v1144
        %v1146 = vand.u32 %v1145, 4294901760
        %1147 = vmatpush1.msra.mxu0 %v1146
        %v1148 = vand.u32 %v470, 4294901760
        %v1149 = vsub.f32 %v470, %v1148
        %v1150 = vand.u32 %v1149, 4294901760
        %1151 = vmatprep.subr.mxu0 %v1150
        %v1152 = vand.u32 %v469, 4294901760
        %v1153 = vsub.f32 %v469, %v1152
        %v1154 = vand.u32 %v1153, 4294901760
        %1155 = vmatpush1.msra.mxu0 %v1154
        %v1156 = vand.u32 %v472, 4294901760
        %v1157 = vsub.f32 %v472, %v1156
        %v1158 = vand.u32 %v1157, 4294901760
        %1159 = vmatprep.subr.mxu0 %v1158
        %v1160 = vand.u32 %v471, 4294901760
        %v1161 = vsub.f32 %v471, %v1160
        %v1162 = vand.u32 %v1161, 4294901760
        %1163 = vmatpush1.msra.mxu0 %v1162
        %v1164 = vand.u32 %v474, 4294901760
        %v1165 = vsub.f32 %v474, %v1164
        %v1166 = vand.u32 %v1165, 4294901760
        %1167 = vmatprep.subr.mxu0 %v1166
        %v1168 = vand.u32 %v473, 4294901760
        %v1169 = vsub.f32 %v473, %v1168
        %v1170 = vand.u32 %v1169, 4294901760
        %1171 = vmatpush1.msra.mxu0 %v1170
        %v1172 = vand.u32 %v476, 4294901760
        %v1173 = vsub.f32 %v476, %v1172
        %v1174 = vand.u32 %v1173, 4294901760
        %1175 = vmatprep.subr.mxu0 %v1174
        %v1176 = vand.u32 %v475, 4294901760
        %v1177 = vsub.f32 %v475, %v1176
        %v1178 = vand.u32 %v1177, 4294901760
        %1179 = vmatpush1.msra.mxu0 %v1178
        %v1180 = vand.u32 %v478, 4294901760
        %v1181 = vsub.f32 %v478, %v1180
        %v1182 = vand.u32 %v1181, 4294901760
        %1183 = vmatprep.subr.mxu0 %v1182
        %v1184 = vand.u32 %v477, 4294901760
        %v1185 = vsub.f32 %v477, %v1184
        %v1186 = vand.u32 %v1185, 4294901760
        %1187 = vmatpush1.msra.mxu0 %v1186
        %v1188 = vand.u32 %v480, 4294901760
        %v1189 = vsub.f32 %v480, %v1188
        %v1190 = vand.u32 %v1189, 4294901760
        %1191 = vmatprep.subr.mxu0 %v1190
        %v1192 = vand.u32 %v479, 4294901760
        %v1193 = vsub.f32 %v479, %v1192
        %v1194 = vand.u32 %v1193, 4294901760
        %1195 = vmatpush1.msra.mxu0 %v1194
        %v1196 = vand.u32 %v482, 4294901760
        %v1197 = vsub.f32 %v482, %v1196
        %v1198 = vand.u32 %v1197, 4294901760
        %1199 = vmatprep.subr.mxu0 %v1198
        %v1200 = vand.u32 %v481, 4294901760
        %v1201 = vsub.f32 %v481, %v1200
        %v1202 = vand.u32 %v1201, 4294901760
        %1203 = vmatpush1.msra.mxu0 %v1202
        %v1204 = vand.u32 %v484, 4294901760
        %v1205 = vsub.f32 %v484, %v1204
        %v1206 = vand.u32 %v1205, 4294901760
        %1207 = vmatprep.subr.mxu0 %v1206
        %v1208 = vand.u32 %v483, 4294901760
        %v1209 = vsub.f32 %v483, %v1208
        %v1210 = vand.u32 %v1209, 4294901760
        %1211 = vmatpush1.msra.mxu0 %v1210
        %v1212 = vand.u32 %v486, 4294901760
        %v1213 = vsub.f32 %v486, %v1212
        %v1214 = vand.u32 %v1213, 4294901760
        %1215 = vmatprep.subr.mxu0 %v1214
        %v1216 = vand.u32 %v485, 4294901760
        %v1217 = vsub.f32 %v485, %v1216
        %v1218 = vand.u32 %v1217, 4294901760
        %1219 = vmatpush1.msra.mxu0 %v1218
        %1220 = vmatprep.subr.mxu0 0.0
        %1221 = vmatpush1.msra.mxu0 0.0
        %1222 = vmatprep.subr.mxu0 0.0
        %1223 = vmatpush1.msra.mxu0 0.0
        %1224 = vmatprep.subr.mxu0 0.0
        %1225 = vmatpush1.msra.mxu0 0.0
        %1226 = vmatprep.subr.mxu0 0.0
        %1227 = vmatpush1.msra.mxu0 0.0
        %1228 = vmatprep.subr.mxu0 0.0
        %1229 = vmatpush1.msra.mxu0 0.0
        %1230 = vmatprep.subr.mxu0 0.0
        %1231 = vmatpush1.msra.mxu0 0.0
        %1232 = vmatprep.subr.mxu0 0.0
        %1233 = vmatpush1.msra.mxu0 0.0
        %1234 = vmatprep.subr.mxu0 0.0
        %1235 = vmatpush1.msra.mxu0 0.0
        %1236 = vmatprep.subr.mxu0 0.0
        %1237 = vmatpush1.msra.mxu0 0.0
        %1238 = vmatprep.subr.mxu0 0.0
        %1239 = vmatpush1.msra.mxu0 0.0
        %1240 = vmatprep.subr.mxu0 0.0
        %1241 = vmatpush1.msra.mxu0 0.0
        %1242 = vmatprep.subr.mxu0 0.0
        %1243 = vmatpush1.msra.mxu0 0.0
        %1244 = vmatprep.subr.mxu0 0.0
        %1245 = vmatpush1.msra.mxu0 0.0
        %1246 = vmatprep.subr.mxu0 0.0
        %1247 = vmatpush1.msra.mxu0 0.0
        %1248 = vmatprep.subr.mxu0 0.0
        %1249 = vmatpush1.msra.mxu0 0.0
        %1250 = vmatprep.subr.mxu0 0.0
        %1251 = vmatpush1.msra.mxu0 0.0
        %1252 = vmatprep.subr.mxu0 0.0
        %1253 = vmatpush1.msra.mxu0 0.0
        %1254 = vmatprep.subr.mxu0 0.0
        %1255 = vmatpush1.msra.mxu0 0.0
        %1256 = vmatprep.subr.mxu0 0.0
        %1257 = vmatpush1.msra.mxu0 0.0
        %1258 = vmatprep.subr.mxu0 0.0
        %1259 = vmatpush1.msra.mxu0 0.0
        %1260 = vmatprep.subr.mxu0 0.0
        %1261 = vmatpush1.msra.mxu0 0.0
        %1262 = vmatprep.subr.mxu0 0.0
        %1263 = vmatpush1.msra.mxu0 0.0
        %1264 = vmatprep.mubr.f32.mxu0 0.0
        %v1265 = vand.u32 %v663, 4294901760
        %1266 = vmatmul.mubr.f32.gmra.mrb[0].mxu0 %v1265
        %v1267 = vpop.f32.mrb[0].mxu0
        %v1268 = vadd.f32 %v1136, %v1267
        %v1269 = vpop.f32.mrb[0].mxu0
        %v1270 = vadd.f32 %v1138, %v1269
        %1271 = vdwg.mxu0
        %v1272 = vand.u32 %v468, 4294901760
        %1273 = vmatprep.subr.mxu0 %v1272
        %v1274 = vand.u32 %v467, 4294901760
        %1275 = vmatpush1.msra.mxu0 %v1274
        %v1276 = vand.u32 %v470, 4294901760
        %1277 = vmatprep.subr.mxu0 %v1276
        %v1278 = vand.u32 %v469, 4294901760
        %1279 = vmatpush1.msra.mxu0 %v1278
        %v1280 = vand.u32 %v472, 4294901760
        %1281 = vmatprep.subr.mxu0 %v1280
        %v1282 = vand.u32 %v471, 4294901760
        %1283 = vmatpush1.msra.mxu0 %v1282
        %v1284 = vand.u32 %v474, 4294901760
        %1285 = vmatprep.subr.mxu0 %v1284
        %v1286 = vand.u32 %v473, 4294901760
        %1287 = vmatpush1.msra.mxu0 %v1286
        %v1288 = vand.u32 %v476, 4294901760
        %1289 = vmatprep.subr.mxu0 %v1288
        %v1290 = vand.u32 %v475, 4294901760
        %1291 = vmatpush1.msra.mxu0 %v1290
        %v1292 = vand.u32 %v478, 4294901760
        %1293 = vmatprep.subr.mxu0 %v1292
        %v1294 = vand.u32 %v477, 4294901760
        %1295 = vmatpush1.msra.mxu0 %v1294
        %v1296 = vand.u32 %v480, 4294901760
        %1297 = vmatprep.subr.mxu0 %v1296
        %v1298 = vand.u32 %v479, 4294901760
        %1299 = vmatpush1.msra.mxu0 %v1298
        %v1300 = vand.u32 %v482, 4294901760
        %1301 = vmatprep.subr.mxu0 %v1300
        %v1302 = vand.u32 %v481, 4294901760
        %1303 = vmatpush1.msra.mxu0 %v1302
        %v1304 = vand.u32 %v484, 4294901760
        %1305 = vmatprep.subr.mxu0 %v1304
        %v1306 = vand.u32 %v483, 4294901760
        %1307 = vmatpush1.msra.mxu0 %v1306
        %v1308 = vand.u32 %v486, 4294901760
        %1309 = vmatprep.subr.mxu0 %v1308
        %v1310 = vand.u32 %v485, 4294901760
        %1311 = vmatpush1.msra.mxu0 %v1310
        %1312 = vmatprep.subr.mxu0 0.0
        %1313 = vmatpush1.msra.mxu0 0.0
        %1314 = vmatprep.subr.mxu0 0.0
        %1315 = vmatpush1.msra.mxu0 0.0
        %1316 = vmatprep.subr.mxu0 0.0
        %1317 = vmatpush1.msra.mxu0 0.0
        %1318 = vmatprep.subr.mxu0 0.0
        %1319 = vmatpush1.msra.mxu0 0.0
        %1320 = vmatprep.subr.mxu0 0.0
        %1321 = vmatpush1.msra.mxu0 0.0
        %1322 = vmatprep.subr.mxu0 0.0
        %1323 = vmatpush1.msra.mxu0 0.0
        %1324 = vmatprep.subr.mxu0 0.0
        %1325 = vmatpush1.msra.mxu0 0.0
        %1326 = vmatprep.subr.mxu0 0.0
        %1327 = vmatpush1.msra.mxu0 0.0
        %1328 = vmatprep.subr.mxu0 0.0
        %1329 = vmatpush1.msra.mxu0 0.0
        %1330 = vmatprep.subr.mxu0 0.0
        %1331 = vmatpush1.msra.mxu0 0.0
        %1332 = vmatprep.subr.mxu0 0.0
        %1333 = vmatpush1.msra.mxu0 0.0
        %1334 = vmatprep.subr.mxu0 0.0
        %1335 = vmatpush1.msra.mxu0 0.0
        %1336 = vmatprep.subr.mxu0 0.0
        %1337 = vmatpush1.msra.mxu0 0.0
        %1338 = vmatprep.subr.mxu0 0.0
        %1339 = vmatpush1.msra.mxu0 0.0
        %1340 = vmatprep.subr.mxu0 0.0
        %1341 = vmatpush1.msra.mxu0 0.0
        %1342 = vmatprep.subr.mxu0 0.0
        %1343 = vmatpush1.msra.mxu0 0.0
        %1344 = vmatprep.subr.mxu0 0.0
        %1345 = vmatpush1.msra.mxu0 0.0
        %1346 = vmatprep.subr.mxu0 0.0
        %1347 = vmatpush1.msra.mxu0 0.0
        %1348 = vmatprep.subr.mxu0 0.0
        %1349 = vmatpush1.msra.mxu0 0.0
        %1350 = vmatprep.subr.mxu0 0.0
        %1351 = vmatpush1.msra.mxu0 0.0
        %1352 = vmatprep.subr.mxu0 0.0
        %1353 = vmatpush1.msra.mxu0 0.0
        %1354 = vmatprep.subr.mxu0 0.0
        %1355 = vmatpush1.msra.mxu0 0.0
        %1356 = vmatprep.mubr.f32.mxu0 0.0
        %v1357 = vand.u32 %v663, 4294901760
        %1358 = vmatmul.mubr.f32.gmra.mrb[0].mxu0 %v1357
        %v1359 = vpop.f32.mrb[0].mxu0
        %v1360 = vadd.f32 %v1268, %v1359
        %v1361 = vpop.f32.mrb[0].mxu0
        %v1362 = vadd.f32 %v1270, %v1361
        %1363 = vdwg.mxu0
        %v1364 = vmul.f32 %v650, %v650
        %v1365 = vmul.f32 %v652, %v652
        %v1366 = vmul.f32 %v1364, %v1364
        %v1367 = vmul.f32 %v1365, %v1365
        %v1368 = vmul.f32 %v1364, %v1366
        %v1369 = vmul.f32 %v1365, %v1367
        %v1370 = vmul.f32 %v1360, %v1368
        %v1371 = vmul.f32 %v1362, %v1369
        %v1372 = vrot.slane %v610, 4
        %v1374 = vadd.f32 %v487, %v1372
        %v1375 = vmul.f32 %v1374, 0.5
        %v1377 = vlaneseq
        %v1378 = vshrl.u32 %v1377, 7
        %v1379 = vsub.s32 0, %v1378
        %v1380 = vrot.slane %v1375, %v1379
        %v1381 = vlaneseq
        %v1382 = vshrl.u32 %v1381, 7
        %v1383 = vsub.s32 4, %v1382
        %v1384 = vrot.slane %v1375, %v1383
        %v1387 = vlaneseq
        %v1388 = vshrl.u32 %v1387, 7
        %v1389 = vsub.s32 0, %v1388
        %v1390 = vrot.slane %v1380, %v1389
        %v1391 = vlaneseq
        %v1392 = vshrl.u32 %v1391, 7
        %v1393 = vsub.s32 0, %v1392
        %v1394 = vrot.slane %v1384, %v1393
        %v1395 = vsub.f32 %v1390, %v520
        %v1396 = vsub.f32 %v1394, %v520
        %v1397 = vlaneseq
        %v1398 = vshrl.u32 %v1397, 7
        %v1399 = vsub.s32 1, %v1398
        %v1400 = vrot.slane %v1375, %v1399
        %v1401 = vlaneseq
        %v1402 = vshrl.u32 %v1401, 7
        %v1403 = vsub.s32 5, %v1402
        %v1404 = vrot.slane %v1375, %v1403
        %v1407 = vlaneseq
        %v1408 = vshrl.u32 %v1407, 7
        %v1409 = vsub.s32 1, %v1408
        %v1410 = vrot.slane %v1400, %v1409
        %v1411 = vlaneseq
        %v1412 = vshrl.u32 %v1411, 7
        %v1413 = vsub.s32 1, %v1412
        %v1414 = vrot.slane %v1404, %v1413
        %v1415 = vsub.f32 %v1410, %v572
        %v1416 = vsub.f32 %v1414, %v572
        %v1417 = vmin.f32 %v1395, %v1415
        %v1418 = vmin.f32 %v1396, %v1416
        %v1419 = vsub.f32 %v495, %v1390
        %v1420 = vsub.f32 %v495, %v1394
        %v1421 = vsub.f32 %v548, %v1410
        %v1422 = vsub.f32 %v548, %v1414
        %v1423 = vmin.f32 %v1419, %v1421
        %v1424 = vmin.f32 %v1420, %v1422
        %v1425 = vmin.f32 %v1417, %v1423
        %v1426 = vmin.f32 %v1418, %v1424
        %vm1427 = vcmp.gt.f32.partialorder %v1425, 1e-09
        %vm1428 = vcmp.gt.f32.partialorder %v1426, 1e-09
        %v1429 = vsel %vm1427, 1, 0
        %v1430 = vsel %vm1428, 1, 0
        %v1431 = vcvt.s32.f32 %v1429
        %v1432 = vcvt.s32.f32 %v1430
        %v1433 = vadd.s32 %v654, 128
        %v1434 = vmax.f32 %v1370, %v1371
        %1435 = vmax.xlane.f32.xlu0 %v1434
        %v1436 = vpop.xlane.xlu0 %1435
        %vm1437 = vcmp.ge.f32.partialorder %v1370, %v1436
        %vm1438 = vcmp.ge.f32.partialorder %v1371, %v1436
        %v1439 = vsel %vm1437, %v654, 256
        %v1440 = vsel %vm1438, %v1433, 256
        %vm1441 = vcmp.lt.s32.totalorder %v1439, %v1440
        %v1442 = vsel %vm1441, %v1439, %v1440
        %v1443 = vand.u32 %v1442, 65535
        %v1444 = vshra.s32 %v1442, 16
        %v1445 = vcvt.s32.f32 %v1443
        %v1446 = vcvt.s32.f32 %v1444
        %1447 = vmin.xlane.f32.xlu0 %v1446
        %v1448 = vpop.xlane.xlu0 %1447
        %vm1449 = vcmp.eq.f32.partialorder %v1446, %v1448
        %v1450 = vsel %vm1449, %v1445, inf
        %1451 = vmin.xlane.f32.xlu0 %v1450
        %v1452 = vpop.xlane.xlu0 %1451
        %v1453 = vcvt.f32.s32 %v1452
        %v1454 = vcvt.f32.s32 %v1448
        %v1455 = vshll.u32 %v1454, 16
        %v1456 = vadd.s32 %v1455, %v1453
        %vm1457 = vcmp.eq.s32.totalorder %v654, %v1456
        %vm1458 = vcmp.eq.s32.totalorder %v1433, %v1456
        %v1459 = vsel %vm1457, 1, 0
        %v1460 = vsel %vm1458, 1, 0
        %v1461 = vcvt.s32.f32 %v1459
        %v1462 = vcvt.s32.f32 %v1460
        %vm1463 = vcmp.gt.f32.partialorder %v1461, 0.0
        %vm1464 = vcmp.gt.f32.partialorder %v1462, 0.0
        %v1465 = vsel %vm1463, -1e+30, %v1370
        %v1466 = vsel %vm1464, -1e+30, %v1371
        %v1467 = vadd.f32 %v1461, 0.0
        %v1468 = vadd.f32 %v1462, 0.0
        %v1469 = vmax.f32 %v1465, %v1466
        %1470 = vmax.xlane.f32.xlu0 %v1469
        %v1471 = vpop.xlane.xlu0 %1470
        %vm1472 = vcmp.ge.f32.partialorder %v1465, %v1471
        %vm1473 = vcmp.ge.f32.partialorder %v1466, %v1471
        %v1474 = vsel %vm1472, %v654, 256
        %v1475 = vsel %vm1473, %v1433, 256
        %vm1476 = vcmp.lt.s32.totalorder %v1474, %v1475
        %v1477 = vsel %vm1476, %v1474, %v1475
        %v1478 = vand.u32 %v1477, 65535
        %v1479 = vshra.s32 %v1477, 16
        %v1480 = vcvt.s32.f32 %v1478
        %v1481 = vcvt.s32.f32 %v1479
        %1482 = vmin.xlane.f32.xlu0 %v1481
        %v1483 = vpop.xlane.xlu0 %1482
        %vm1484 = vcmp.eq.f32.partialorder %v1481, %v1483
        %v1485 = vsel %vm1484, %v1480, inf
        %1486 = vmin.xlane.f32.xlu0 %v1485
        %v1487 = vpop.xlane.xlu0 %1486
        %v1488 = vcvt.f32.s32 %v1487
        %v1489 = vcvt.f32.s32 %v1483
        %v1490 = vshll.u32 %v1489, 16
        %v1491 = vadd.s32 %v1490, %v1488
        %vm1492 = vcmp.eq.s32.totalorder %v654, %v1491
        %vm1493 = vcmp.eq.s32.totalorder %v1433, %v1491
        %v1494 = vsel %vm1492, 1, 0
        %v1495 = vsel %vm1493, 1, 0
        %v1496 = vcvt.s32.f32 %v1494
        %v1497 = vcvt.s32.f32 %v1495
        %vm1498 = vcmp.gt.f32.partialorder %v1496, 0.0
        %vm1499 = vcmp.gt.f32.partialorder %v1497, 0.0
        %v1500 = vsel %vm1498, -1e+30, %v1465
        %v1501 = vsel %vm1499, -1e+30, %v1466
        %v1502 = vadd.f32 %v1467, %v1496
        %v1503 = vadd.f32 %v1468, %v1497
        %v1504 = vmax.f32 %v1500, %v1501
        %1505 = vmax.xlane.f32.xlu0 %v1504
        %v1506 = vpop.xlane.xlu0 %1505
        %vm1507 = vcmp.ge.f32.partialorder %v1500, %v1506
        %vm1508 = vcmp.ge.f32.partialorder %v1501, %v1506
        %v1509 = vsel %vm1507, %v654, 256
        %v1510 = vsel %vm1508, %v1433, 256
        %vm1511 = vcmp.lt.s32.totalorder %v1509, %v1510
        %v1512 = vsel %vm1511, %v1509, %v1510
        %v1513 = vand.u32 %v1512, 65535
        %v1514 = vshra.s32 %v1512, 16
        %v1515 = vcvt.s32.f32 %v1513
        %v1516 = vcvt.s32.f32 %v1514
        %1517 = vmin.xlane.f32.xlu0 %v1516
        %v1518 = vpop.xlane.xlu0 %1517
        %vm1519 = vcmp.eq.f32.partialorder %v1516, %v1518
        %v1520 = vsel %vm1519, %v1515, inf
        %1521 = vmin.xlane.f32.xlu0 %v1520
        %v1522 = vpop.xlane.xlu0 %1521
        %v1523 = vcvt.f32.s32 %v1522
        %v1524 = vcvt.f32.s32 %v1518
        %v1525 = vshll.u32 %v1524, 16
        %v1526 = vadd.s32 %v1525, %v1523
        %vm1527 = vcmp.eq.s32.totalorder %v654, %v1526
        %vm1528 = vcmp.eq.s32.totalorder %v1433, %v1526
        %v1529 = vsel %vm1527, 1, 0
        %v1530 = vsel %vm1528, 1, 0
        %v1531 = vcvt.s32.f32 %v1529
        %v1532 = vcvt.s32.f32 %v1530
        %vm1533 = vcmp.gt.f32.partialorder %v1531, 0.0
        %vm1534 = vcmp.gt.f32.partialorder %v1532, 0.0
        %v1535 = vsel %vm1533, -1e+30, %v1500
        %v1536 = vsel %vm1534, -1e+30, %v1501
        %v1537 = vadd.f32 %v1502, %v1531
        %v1538 = vadd.f32 %v1503, %v1532
        %v1539 = vmax.f32 %v1535, %v1536
        %1540 = vmax.xlane.f32.xlu0 %v1539
        %v1541 = vpop.xlane.xlu0 %1540
        %vm1542 = vcmp.ge.f32.partialorder %v1535, %v1541
        %vm1543 = vcmp.ge.f32.partialorder %v1536, %v1541
        %v1544 = vsel %vm1542, %v654, 256
        %v1545 = vsel %vm1543, %v1433, 256
        %vm1546 = vcmp.lt.s32.totalorder %v1544, %v1545
        %v1547 = vsel %vm1546, %v1544, %v1545
        %v1548 = vand.u32 %v1547, 65535
        %v1549 = vshra.s32 %v1547, 16
        %v1550 = vcvt.s32.f32 %v1548
        %v1551 = vcvt.s32.f32 %v1549
        %1552 = vmin.xlane.f32.xlu0 %v1551
        %v1553 = vpop.xlane.xlu0 %1552
        %vm1554 = vcmp.eq.f32.partialorder %v1551, %v1553
        %v1555 = vsel %vm1554, %v1550, inf
        %1556 = vmin.xlane.f32.xlu0 %v1555
        %v1557 = vpop.xlane.xlu0 %1556
        %v1558 = vcvt.f32.s32 %v1557
        %v1559 = vcvt.f32.s32 %v1553
        %v1560 = vshll.u32 %v1559, 16
        %v1561 = vadd.s32 %v1560, %v1558
        %vm1562 = vcmp.eq.s32.totalorder %v654, %v1561
        %vm1563 = vcmp.eq.s32.totalorder %v1433, %v1561
        %v1564 = vsel %vm1562, 1, 0
        %v1565 = vsel %vm1563, 1, 0
        %v1566 = vcvt.s32.f32 %v1564
        %v1567 = vcvt.s32.f32 %v1565
        %vm1568 = vcmp.gt.f32.partialorder %v1566, 0.0
        %vm1569 = vcmp.gt.f32.partialorder %v1567, 0.0
        %v1570 = vsel %vm1568, -1e+30, %v1535
        %v1571 = vsel %vm1569, -1e+30, %v1536
        %v1572 = vadd.f32 %v1537, %v1566
        %v1573 = vadd.f32 %v1538, %v1567
        %v1574 = vmax.f32 %v1570, %v1571
        %1575 = vmax.xlane.f32.xlu0 %v1574
        %v1576 = vpop.xlane.xlu0 %1575
        %vm1577 = vcmp.ge.f32.partialorder %v1570, %v1576
        %vm1578 = vcmp.ge.f32.partialorder %v1571, %v1576
        %v1579 = vsel %vm1577, %v654, 256
        %v1580 = vsel %vm1578, %v1433, 256
        %vm1581 = vcmp.lt.s32.totalorder %v1579, %v1580
        %v1582 = vsel %vm1581, %v1579, %v1580
        %v1583 = vand.u32 %v1582, 65535
        %v1584 = vshra.s32 %v1582, 16
        %v1585 = vcvt.s32.f32 %v1583
        %v1586 = vcvt.s32.f32 %v1584
        %1587 = vmin.xlane.f32.xlu0 %v1586
        %v1588 = vpop.xlane.xlu0 %1587
        %vm1589 = vcmp.eq.f32.partialorder %v1586, %v1588
        %v1590 = vsel %vm1589, %v1585, inf
        %1591 = vmin.xlane.f32.xlu0 %v1590
        %v1592 = vpop.xlane.xlu0 %1591
        %v1593 = vcvt.f32.s32 %v1592
        %v1594 = vcvt.f32.s32 %v1588
        %v1595 = vshll.u32 %v1594, 16
        %v1596 = vadd.s32 %v1595, %v1593
        %vm1597 = vcmp.eq.s32.totalorder %v654, %v1596
        %vm1598 = vcmp.eq.s32.totalorder %v1433, %v1596
        %v1599 = vsel %vm1597, 1, 0
        %v1600 = vsel %vm1598, 1, 0
        %v1601 = vcvt.s32.f32 %v1599
        %v1602 = vcvt.s32.f32 %v1600
        %vm1603 = vcmp.gt.f32.partialorder %v1601, 0.0
        %vm1604 = vcmp.gt.f32.partialorder %v1602, 0.0
        %v1605 = vsel %vm1603, -1e+30, %v1570
        %v1606 = vsel %vm1604, -1e+30, %v1571
        %v1607 = vadd.f32 %v1572, %v1601
        %v1608 = vadd.f32 %v1573, %v1602
        %v1609 = vmax.f32 %v1605, %v1606
        %1610 = vmax.xlane.f32.xlu0 %v1609
        %v1611 = vpop.xlane.xlu0 %1610
        %vm1612 = vcmp.ge.f32.partialorder %v1605, %v1611
        %vm1613 = vcmp.ge.f32.partialorder %v1606, %v1611
        %v1614 = vsel %vm1612, %v654, 256
        %v1615 = vsel %vm1613, %v1433, 256
        %vm1616 = vcmp.lt.s32.totalorder %v1614, %v1615
        %v1617 = vsel %vm1616, %v1614, %v1615
        %v1618 = vand.u32 %v1617, 65535
        %v1619 = vshra.s32 %v1617, 16
        %v1620 = vcvt.s32.f32 %v1618
        %v1621 = vcvt.s32.f32 %v1619
        %1622 = vmin.xlane.f32.xlu0 %v1621
        %v1623 = vpop.xlane.xlu0 %1622
        %vm1624 = vcmp.eq.f32.partialorder %v1621, %v1623
        %v1625 = vsel %vm1624, %v1620, inf
        %1626 = vmin.xlane.f32.xlu0 %v1625
        %v1627 = vpop.xlane.xlu0 %1626
        %v1628 = vcvt.f32.s32 %v1627
        %v1629 = vcvt.f32.s32 %v1623
        %v1630 = vshll.u32 %v1629, 16
        %v1631 = vadd.s32 %v1630, %v1628
        %vm1632 = vcmp.eq.s32.totalorder %v654, %v1631
        %vm1633 = vcmp.eq.s32.totalorder %v1433, %v1631
        %v1634 = vsel %vm1632, 1, 0
        %v1635 = vsel %vm1633, 1, 0
        %v1636 = vcvt.s32.f32 %v1634
        %v1637 = vcvt.s32.f32 %v1635
        %vm1638 = vcmp.gt.f32.partialorder %v1636, 0.0
        %vm1639 = vcmp.gt.f32.partialorder %v1637, 0.0
        %v1640 = vsel %vm1638, -1e+30, %v1605
        %v1641 = vsel %vm1639, -1e+30, %v1606
        %v1642 = vadd.f32 %v1607, %v1636
        %v1643 = vadd.f32 %v1608, %v1637
        %v1644 = vmax.f32 %v1640, %v1641
        %1645 = vmax.xlane.f32.xlu0 %v1644
        %v1646 = vpop.xlane.xlu0 %1645
        %vm1647 = vcmp.ge.f32.partialorder %v1640, %v1646
        %vm1648 = vcmp.ge.f32.partialorder %v1641, %v1646
        %v1649 = vsel %vm1647, %v654, 256
        %v1650 = vsel %vm1648, %v1433, 256
        %vm1651 = vcmp.lt.s32.totalorder %v1649, %v1650
        %v1652 = vsel %vm1651, %v1649, %v1650
        %v1653 = vand.u32 %v1652, 65535
        %v1654 = vshra.s32 %v1652, 16
        %v1655 = vcvt.s32.f32 %v1653
        %v1656 = vcvt.s32.f32 %v1654
        %1657 = vmin.xlane.f32.xlu0 %v1656
        %v1658 = vpop.xlane.xlu0 %1657
        %vm1659 = vcmp.eq.f32.partialorder %v1656, %v1658
        %v1660 = vsel %vm1659, %v1655, inf
        %1661 = vmin.xlane.f32.xlu0 %v1660
        %v1662 = vpop.xlane.xlu0 %1661
        %v1663 = vcvt.f32.s32 %v1662
        %v1664 = vcvt.f32.s32 %v1658
        %v1665 = vshll.u32 %v1664, 16
        %v1666 = vadd.s32 %v1665, %v1663
        %vm1667 = vcmp.eq.s32.totalorder %v654, %v1666
        %vm1668 = vcmp.eq.s32.totalorder %v1433, %v1666
        %v1669 = vsel %vm1667, 1, 0
        %v1670 = vsel %vm1668, 1, 0
        %v1671 = vcvt.s32.f32 %v1669
        %v1672 = vcvt.s32.f32 %v1670
        %vm1673 = vcmp.gt.f32.partialorder %v1671, 0.0
        %vm1674 = vcmp.gt.f32.partialorder %v1672, 0.0
        %v1675 = vsel %vm1673, -1e+30, %v1640
        %v1676 = vsel %vm1674, -1e+30, %v1641
        %v1677 = vadd.f32 %v1642, %v1671
        %v1678 = vadd.f32 %v1643, %v1672
        %v1679 = vmax.f32 %v1675, %v1676
        %1680 = vmax.xlane.f32.xlu0 %v1679
        %v1681 = vpop.xlane.xlu0 %1680
        %vm1682 = vcmp.ge.f32.partialorder %v1675, %v1681
        %vm1683 = vcmp.ge.f32.partialorder %v1676, %v1681
        %v1684 = vsel %vm1682, %v654, 256
        %v1685 = vsel %vm1683, %v1433, 256
        %vm1686 = vcmp.lt.s32.totalorder %v1684, %v1685
        %v1687 = vsel %vm1686, %v1684, %v1685
        %v1688 = vand.u32 %v1687, 65535
        %v1689 = vshra.s32 %v1687, 16
        %v1690 = vcvt.s32.f32 %v1688
        %v1691 = vcvt.s32.f32 %v1689
        %1692 = vmin.xlane.f32.xlu0 %v1691
        %v1693 = vpop.xlane.xlu0 %1692
        %vm1694 = vcmp.eq.f32.partialorder %v1691, %v1693
        %v1695 = vsel %vm1694, %v1690, inf
        %1696 = vmin.xlane.f32.xlu0 %v1695
        %v1697 = vpop.xlane.xlu0 %1696
        %v1698 = vcvt.f32.s32 %v1697
        %v1699 = vcvt.f32.s32 %v1693
        %v1700 = vshll.u32 %v1699, 16
        %v1701 = vadd.s32 %v1700, %v1698
        %vm1702 = vcmp.eq.s32.totalorder %v654, %v1701
        %vm1703 = vcmp.eq.s32.totalorder %v1433, %v1701
        %v1704 = vsel %vm1702, 1, 0
        %v1705 = vsel %vm1703, 1, 0
        %v1706 = vcvt.s32.f32 %v1704
        %v1707 = vcvt.s32.f32 %v1705
        %vm1708 = vcmp.gt.f32.partialorder %v1706, 0.0
        %vm1709 = vcmp.gt.f32.partialorder %v1707, 0.0
        %v1710 = vsel %vm1708, -1e+30, %v1675
        %v1711 = vsel %vm1709, -1e+30, %v1676
        %v1712 = vadd.f32 %v1677, %v1706
        %v1713 = vadd.f32 %v1678, %v1707
        %v1714 = vmax.f32 %v1710, %v1711
        %1715 = vmax.xlane.f32.xlu0 %v1714
        %v1716 = vpop.xlane.xlu0 %1715
        %vm1717 = vcmp.ge.f32.partialorder %v1710, %v1716
        %vm1718 = vcmp.ge.f32.partialorder %v1711, %v1716
        %v1719 = vsel %vm1717, %v654, 256
        %v1720 = vsel %vm1718, %v1433, 256
        %vm1721 = vcmp.lt.s32.totalorder %v1719, %v1720
        %v1722 = vsel %vm1721, %v1719, %v1720
        %v1723 = vand.u32 %v1722, 65535
        %v1724 = vshra.s32 %v1722, 16
        %v1725 = vcvt.s32.f32 %v1723
        %v1726 = vcvt.s32.f32 %v1724
        %1727 = vmin.xlane.f32.xlu0 %v1726
        %v1728 = vpop.xlane.xlu0 %1727
        %vm1729 = vcmp.eq.f32.partialorder %v1726, %v1728
        %v1730 = vsel %vm1729, %v1725, inf
        %1731 = vmin.xlane.f32.xlu0 %v1730
        %v1732 = vpop.xlane.xlu0 %1731
        %v1733 = vcvt.f32.s32 %v1732
        %v1734 = vcvt.f32.s32 %v1728
        %v1735 = vshll.u32 %v1734, 16
        %v1736 = vadd.s32 %v1735, %v1733
        %vm1737 = vcmp.eq.s32.totalorder %v654, %v1736
        %vm1738 = vcmp.eq.s32.totalorder %v1433, %v1736
        %v1739 = vsel %vm1737, 1, 0
        %v1740 = vsel %vm1738, 1, 0
        %v1741 = vcvt.s32.f32 %v1739
        %v1742 = vcvt.s32.f32 %v1740
        %vm1743 = vcmp.gt.f32.partialorder %v1741, 0.0
        %vm1744 = vcmp.gt.f32.partialorder %v1742, 0.0
        %v1745 = vsel %vm1743, -1e+30, %v1710
        %v1746 = vsel %vm1744, -1e+30, %v1711
        %v1747 = vadd.f32 %v1712, %v1741
        %v1748 = vadd.f32 %v1713, %v1742
        %v1749 = vmax.f32 %v1745, %v1746
        %1750 = vmax.xlane.f32.xlu0 %v1749
        %v1751 = vpop.xlane.xlu0 %1750
        %vm1752 = vcmp.ge.f32.partialorder %v1745, %v1751
        %vm1753 = vcmp.ge.f32.partialorder %v1746, %v1751
        %v1754 = vsel %vm1752, %v654, 256
        %v1755 = vsel %vm1753, %v1433, 256
        %vm1756 = vcmp.lt.s32.totalorder %v1754, %v1755
        %v1757 = vsel %vm1756, %v1754, %v1755
        %v1758 = vand.u32 %v1757, 65535
        %v1759 = vshra.s32 %v1757, 16
        %v1760 = vcvt.s32.f32 %v1758
        %v1761 = vcvt.s32.f32 %v1759
        %1762 = vmin.xlane.f32.xlu0 %v1761
        %v1763 = vpop.xlane.xlu0 %1762
        %vm1764 = vcmp.eq.f32.partialorder %v1761, %v1763
        %v1765 = vsel %vm1764, %v1760, inf
        %1766 = vmin.xlane.f32.xlu0 %v1765
        %v1767 = vpop.xlane.xlu0 %1766
        %v1768 = vcvt.f32.s32 %v1767
        %v1769 = vcvt.f32.s32 %v1763
        %v1770 = vshll.u32 %v1769, 16
        %v1771 = vadd.s32 %v1770, %v1768
        %vm1772 = vcmp.eq.s32.totalorder %v654, %v1771
        %vm1773 = vcmp.eq.s32.totalorder %v1433, %v1771
        %v1774 = vsel %vm1772, 1, 0
        %v1775 = vsel %vm1773, 1, 0
        %v1776 = vcvt.s32.f32 %v1774
        %v1777 = vcvt.s32.f32 %v1775
        %vm1778 = vcmp.gt.f32.partialorder %v1776, 0.0
        %vm1779 = vcmp.gt.f32.partialorder %v1777, 0.0
        %v1780 = vsel %vm1778, -1e+30, %v1745
        %v1781 = vsel %vm1779, -1e+30, %v1746
        %v1782 = vadd.f32 %v1747, %v1776
        %v1783 = vadd.f32 %v1748, %v1777
        %v1784 = vmax.f32 %v1780, %v1781
        %1785 = vmax.xlane.f32.xlu0 %v1784
        %v1786 = vpop.xlane.xlu0 %1785
        %vm1787 = vcmp.ge.f32.partialorder %v1780, %v1786
        %vm1788 = vcmp.ge.f32.partialorder %v1781, %v1786
        %v1789 = vsel %vm1787, %v654, 256
        %v1790 = vsel %vm1788, %v1433, 256
        %vm1791 = vcmp.lt.s32.totalorder %v1789, %v1790
        %v1792 = vsel %vm1791, %v1789, %v1790
        %v1793 = vand.u32 %v1792, 65535
        %v1794 = vshra.s32 %v1792, 16
        %v1795 = vcvt.s32.f32 %v1793
        %v1796 = vcvt.s32.f32 %v1794
        %1797 = vmin.xlane.f32.xlu0 %v1796
        %v1798 = vpop.xlane.xlu0 %1797
        %vm1799 = vcmp.eq.f32.partialorder %v1796, %v1798
        %v1800 = vsel %vm1799, %v1795, inf
        %1801 = vmin.xlane.f32.xlu0 %v1800
        %v1802 = vpop.xlane.xlu0 %1801
        %v1803 = vcvt.f32.s32 %v1802
        %v1804 = vcvt.f32.s32 %v1798
        %v1805 = vshll.u32 %v1804, 16
        %v1806 = vadd.s32 %v1805, %v1803
        %vm1807 = vcmp.eq.s32.totalorder %v654, %v1806
        %vm1808 = vcmp.eq.s32.totalorder %v1433, %v1806
        %v1809 = vsel %vm1807, 1, 0
        %v1810 = vsel %vm1808, 1, 0
        %v1811 = vcvt.s32.f32 %v1809
        %v1812 = vcvt.s32.f32 %v1810
        %vm1813 = vcmp.gt.f32.partialorder %v1811, 0.0
        %vm1814 = vcmp.gt.f32.partialorder %v1812, 0.0
        %v1815 = vsel %vm1813, -1e+30, %v1780
        %v1816 = vsel %vm1814, -1e+30, %v1781
        %v1817 = vadd.f32 %v1782, %v1811
        %v1818 = vadd.f32 %v1783, %v1812
        %v1819 = vmax.f32 %v1815, %v1816
        %1820 = vmax.xlane.f32.xlu0 %v1819
        %v1821 = vpop.xlane.xlu0 %1820
        %vm1822 = vcmp.ge.f32.partialorder %v1815, %v1821
        %vm1823 = vcmp.ge.f32.partialorder %v1816, %v1821
        %v1824 = vsel %vm1822, %v654, 256
        %v1825 = vsel %vm1823, %v1433, 256
        %vm1826 = vcmp.lt.s32.totalorder %v1824, %v1825
        %v1827 = vsel %vm1826, %v1824, %v1825
        %v1828 = vand.u32 %v1827, 65535
        %v1829 = vshra.s32 %v1827, 16
        %v1830 = vcvt.s32.f32 %v1828
        %v1831 = vcvt.s32.f32 %v1829
        %1832 = vmin.xlane.f32.xlu0 %v1831
        %v1833 = vpop.xlane.xlu0 %1832
        %vm1834 = vcmp.eq.f32.partialorder %v1831, %v1833
        %v1835 = vsel %vm1834, %v1830, inf
        %1836 = vmin.xlane.f32.xlu0 %v1835
        %v1837 = vpop.xlane.xlu0 %1836
        %v1838 = vcvt.f32.s32 %v1837
        %v1839 = vcvt.f32.s32 %v1833
        %v1840 = vshll.u32 %v1839, 16
        %v1841 = vadd.s32 %v1840, %v1838
        %vm1842 = vcmp.eq.s32.totalorder %v654, %v1841
        %vm1843 = vcmp.eq.s32.totalorder %v1433, %v1841
        %v1844 = vsel %vm1842, 1, 0
        %v1845 = vsel %vm1843, 1, 0
        %v1846 = vcvt.s32.f32 %v1844
        %v1847 = vcvt.s32.f32 %v1845
        %vm1848 = vcmp.gt.f32.partialorder %v1846, 0.0
        %vm1849 = vcmp.gt.f32.partialorder %v1847, 0.0
        %v1850 = vsel %vm1848, -1e+30, %v1815
        %v1851 = vsel %vm1849, -1e+30, %v1816
        %v1852 = vadd.f32 %v1817, %v1846
        %v1853 = vadd.f32 %v1818, %v1847
        %v1854 = vmax.f32 %v1850, %v1851
        %1855 = vmax.xlane.f32.xlu0 %v1854
        %v1856 = vpop.xlane.xlu0 %1855
        %vm1857 = vcmp.ge.f32.partialorder %v1850, %v1856
        %vm1858 = vcmp.ge.f32.partialorder %v1851, %v1856
        %v1859 = vsel %vm1857, %v654, 256
        %v1860 = vsel %vm1858, %v1433, 256
        %vm1861 = vcmp.lt.s32.totalorder %v1859, %v1860
        %v1862 = vsel %vm1861, %v1859, %v1860
        %v1863 = vand.u32 %v1862, 65535
        %v1864 = vshra.s32 %v1862, 16
        %v1865 = vcvt.s32.f32 %v1863
        %v1866 = vcvt.s32.f32 %v1864
        %1867 = vmin.xlane.f32.xlu0 %v1866
        %v1868 = vpop.xlane.xlu0 %1867
        %vm1869 = vcmp.eq.f32.partialorder %v1866, %v1868
        %v1870 = vsel %vm1869, %v1865, inf
        %1871 = vmin.xlane.f32.xlu0 %v1870
        %v1872 = vpop.xlane.xlu0 %1871
        %v1873 = vcvt.f32.s32 %v1872
        %v1874 = vcvt.f32.s32 %v1868
        %v1875 = vshll.u32 %v1874, 16
        %v1876 = vadd.s32 %v1875, %v1873
        %vm1877 = vcmp.eq.s32.totalorder %v654, %v1876
        %vm1878 = vcmp.eq.s32.totalorder %v1433, %v1876
        %v1879 = vsel %vm1877, 1, 0
        %v1880 = vsel %vm1878, 1, 0
        %v1881 = vcvt.s32.f32 %v1879
        %v1882 = vcvt.s32.f32 %v1880
        %v1883 = vadd.f32 %v1852, %v1881
        %v1884 = vadd.f32 %v1853, %v1882
        %1886 = vset.pattern.permute.xlu0 0
        %1887 = vperm.xlu0 %1886, %v491
        %v1888 = vpop.permute.xlu0 %1887
        %v1890 = vmul.f32 %v1883, %v1888
        %v1891 = vmul.f32 %v1884, %v1888
        %v1892 = vmul.f32 %v1890, %v1431
        %v1893 = vmul.f32 %v1891, %v1432
        %v1894 = vlaneseq
        %v1895 = vshrl.u32 %v1894, 7
        %v1896 = vrot.slane %v1892, 4
        %v1897 = vadd.f32 %v1892, %v1896
        %v1898 = vrot.slane %v1897, 2
        %v1899 = vadd.f32 %v1897, %v1898
        %v1900 = vrot.slane %v1899, 1
        %v1901 = vadd.f32 %v1899, %v1900
        %v1902 = vrot.slane %v1893, 4
        %v1903 = vadd.f32 %v1893, %v1902
        %v1904 = vrot.slane %v1903, 2
        %v1905 = vadd.f32 %v1903, %v1904
        %v1906 = vrot.slane %v1905, 1
        %v1907 = vadd.f32 %v1905, %v1906
        %vm1908 = vcmp.gt.f32.partialorder %v1901, 1.0
        %vm1909 = vcmp.gt.f32.partialorder %v1907, 1.0
        %v1910 = vsel %vm1908, 1, 0
        %v1911 = vsel %vm1909, 1, 0
        %v1912 = vcvt.s32.f32 %v1910
        %v1913 = vcvt.s32.f32 %v1911
        %v1914 = vmul.f32 %v650, %v1912
        %v1915 = vmul.f32 %v652, %v1913
        %v1916 = vsub.f32 1.0, %v1912
        %v1917 = vsub.f32 1.0, %v1913
        %v1918 = vmul.f32 %v1892, %v1916
        %v1919 = vmul.f32 %v1893, %v1917
        %v1920 = vrot.slane %v1914, 4
        %v1921 = vmax.f32 %v1914, %v1920
        %v1922 = vrot.slane %v1921, 2
        %v1923 = vmax.f32 %v1921, %v1922
        %v1924 = vrot.slane %v1923, 1
        %v1925 = vmax.f32 %v1923, %v1924
        %v1926 = vrot.slane %v1915, 4
        %v1927 = vmax.f32 %v1915, %v1926
        %v1928 = vrot.slane %v1927, 2
        %v1929 = vmax.f32 %v1927, %v1928
        %v1930 = vrot.slane %v1929, 1
        %v1931 = vmax.f32 %v1929, %v1930
        %vm1932 = vcmp.ge.f32.partialorder %v1914, %v1925
        %vm1933 = vcmp.ge.f32.partialorder %v1915, %v1931
        %v1934 = vsel %vm1932, %v1895, 8
        %v1935 = vsel %vm1933, %v1895, 8
        %v1936 = vrot.slane %v1934, 4
        %vm1937 = vcmp.lt.s32.totalorder %v1934, %v1936
        %v1938 = vsel %vm1937, %v1934, %v1936
        %v1939 = vrot.slane %v1938, 2
        %vm1940 = vcmp.lt.s32.totalorder %v1938, %v1939
        %v1941 = vsel %vm1940, %v1938, %v1939
        %v1942 = vrot.slane %v1941, 1
        %vm1943 = vcmp.lt.s32.totalorder %v1941, %v1942
        %v1944 = vsel %vm1943, %v1941, %v1942
        %v1945 = vrot.slane %v1935, 4
        %vm1946 = vcmp.lt.s32.totalorder %v1935, %v1945
        %v1947 = vsel %vm1946, %v1935, %v1945
        %v1948 = vrot.slane %v1947, 2
        %vm1949 = vcmp.lt.s32.totalorder %v1947, %v1948
        %v1950 = vsel %vm1949, %v1947, %v1948
        %v1951 = vrot.slane %v1950, 1
        %vm1952 = vcmp.lt.s32.totalorder %v1950, %v1951
        %v1953 = vsel %vm1952, %v1950, %v1951
        %vm1954 = vcmp.eq.s32.totalorder %v1895, %v1944
        %vm1955 = vcmp.eq.s32.totalorder %v1895, %v1953
        %v1956 = vsel %vm1954, 1, 0
        %v1957 = vsel %vm1955, 1, 0
        %v1958 = vcvt.s32.f32 %v1956
        %v1959 = vcvt.s32.f32 %v1957
        %v1960 = vmul.f32 %v1958, %v1912
        %v1961 = vmul.f32 %v1959, %v1913
        %v1962 = vadd.f32 %v1960, %v1918
        %v1963 = vadd.f32 %v1961, %v1919
        %v1964 = vrot.slane %v1962, 4
        %v1965 = vadd.f32 %v1962, %v1964
        %v1966 = vrot.slane %v1965, 2
        %v1967 = vadd.f32 %v1965, %v1966
        %v1968 = vrot.slane %v1967, 1
        %v1969 = vadd.f32 %v1967, %v1968
        %v1970 = vrot.slane %v1963, 4
        %v1971 = vadd.f32 %v1963, %v1970
        %v1972 = vrot.slane %v1971, 2
        %v1973 = vadd.f32 %v1971, %v1972
        %v1974 = vrot.slane %v1973, 1
        %v1975 = vadd.f32 %v1973, %v1974
        %vm1976 = vcmp.gt.f32.partialorder %v1969, 0.0
        %vm1977 = vcmp.gt.f32.partialorder %v1975, 0.0
        %v1978 = vrot.slane %v1962, 4
        %v1979 = vmax.f32 %v1962, %v1978
        %v1980 = vrot.slane %v1979, 2
        %v1981 = vmax.f32 %v1979, %v1980
        %v1982 = vrot.slane %v1981, 1
        %v1983 = vmax.f32 %v1981, %v1982
        %v1984 = vrot.slane %v1963, 4
        %v1985 = vmax.f32 %v1963, %v1984
        %v1986 = vrot.slane %v1985, 2
        %v1987 = vmax.f32 %v1985, %v1986
        %v1988 = vrot.slane %v1987, 1
        %v1989 = vmax.f32 %v1987, %v1988
        %vm1990 = vcmp.ge.f32.partialorder %v1962, %v1983
        %vm1991 = vcmp.ge.f32.partialorder %v1963, %v1989
        %v1992 = vsel %vm1990, %v1895, 8
        %v1993 = vsel %vm1991, %v1895, 8
        %v1994 = vrot.slane %v1992, 4
        %vm1995 = vcmp.lt.s32.totalorder %v1992, %v1994
        %v1996 = vsel %vm1995, %v1992, %v1994
        %v1997 = vrot.slane %v1996, 2
        %vm1998 = vcmp.lt.s32.totalorder %v1996, %v1997
        %v1999 = vsel %vm1998, %v1996, %v1997
        %v2000 = vrot.slane %v1999, 1
        %vm2001 = vcmp.lt.s32.totalorder %v1999, %v2000
        %v2002 = vsel %vm2001, %v1999, %v2000
        %v2003 = vrot.slane %v1993, 4
        %vm2004 = vcmp.lt.s32.totalorder %v1993, %v2003
        %v2005 = vsel %vm2004, %v1993, %v2003
        %v2006 = vrot.slane %v2005, 2
        %vm2007 = vcmp.lt.s32.totalorder %v2005, %v2006
        %v2008 = vsel %vm2007, %v2005, %v2006
        %v2009 = vrot.slane %v2008, 1
        %vm2010 = vcmp.lt.s32.totalorder %v2008, %v2009
        %v2011 = vsel %vm2010, %v2008, %v2009
        %vm2012 = vcmp.eq.s32.totalorder %v1895, %v2002
        %vm2013 = vcmp.eq.s32.totalorder %v1895, %v2011
        %v2014 = vsel %vm2012, 1, 0
        %v2015 = vsel %vm2013, 1, 0
        %v2016 = vcvt.s32.f32 %v2014
        %v2017 = vcvt.s32.f32 %v2015
        %vm2018 = vcmask 64512
        %v2020 = vsel %vm2018, %v490, 0
        %v2022 = vand.u32 %v2017, 4294901760
        %2023 = vmatprep.subr.mxu0 %v2022
        %v2024 = vand.u32 %v2016, 4294901760
        %2025 = vmatpush1.msra.mxu0 %v2024
        %2026 = vmatprep.subr.mxu0 0.0
        %2027 = vmatpush1.msra.mxu0 0.0
        %2028 = vmatprep.subr.mxu0 0.0
        %2029 = vmatpush1.msra.mxu0 0.0
        %2030 = vmatprep.subr.mxu0 0.0
        %2031 = vmatpush1.msra.mxu0 0.0
        %2032 = vmatprep.subr.mxu0 0.0
        %2033 = vmatpush1.msra.mxu0 0.0
        %2034 = vmatprep.subr.mxu0 0.0
        %2035 = vmatpush1.msra.mxu0 0.0
        %2036 = vmatprep.subr.mxu0 0.0
        %2037 = vmatpush1.msra.mxu0 0.0
        %2038 = vmatprep.subr.mxu0 0.0
        %2039 = vmatpush1.msra.mxu0 0.0
        %2040 = vmatprep.subr.mxu0 0.0
        %2041 = vmatpush1.msra.mxu0 0.0
        %2042 = vmatprep.subr.mxu0 0.0
        %2043 = vmatpush1.msra.mxu0 0.0
        %2044 = vmatprep.subr.mxu0 0.0
        %2045 = vmatpush1.msra.mxu0 0.0
        %2046 = vmatprep.subr.mxu0 0.0
        %2047 = vmatpush1.msra.mxu0 0.0
        %2048 = vmatprep.subr.mxu0 0.0
        %2049 = vmatpush1.msra.mxu0 0.0
        %2050 = vmatprep.subr.mxu0 0.0
        %2051 = vmatpush1.msra.mxu0 0.0
        %2052 = vmatprep.subr.mxu0 0.0
        %2053 = vmatpush1.msra.mxu0 0.0
        %2054 = vmatprep.subr.mxu0 0.0
        %2055 = vmatpush1.msra.mxu0 0.0
        %2056 = vmatprep.subr.mxu0 0.0
        %2057 = vmatpush1.msra.mxu0 0.0
        %2058 = vmatprep.subr.mxu0 0.0
        %2059 = vmatpush1.msra.mxu0 0.0
        %2060 = vmatprep.subr.mxu0 0.0
        %2061 = vmatpush1.msra.mxu0 0.0
        %2062 = vmatprep.subr.mxu0 0.0
        %2063 = vmatpush1.msra.mxu0 0.0
        %2064 = vmatprep.subr.mxu0 0.0
        %2065 = vmatpush1.msra.mxu0 0.0
        %2066 = vmatprep.subr.mxu0 0.0
        %2067 = vmatpush1.msra.mxu0 0.0
        %2068 = vmatprep.subr.mxu0 0.0
        %2069 = vmatpush1.msra.mxu0 0.0
        %2070 = vmatprep.subr.mxu0 0.0
        %2071 = vmatpush1.msra.mxu0 0.0
        %2072 = vmatprep.subr.mxu0 0.0
        %2073 = vmatpush1.msra.mxu0 0.0
        %2074 = vmatprep.subr.mxu0 0.0
        %2075 = vmatpush1.msra.mxu0 0.0
        %2076 = vmatprep.subr.mxu0 0.0
        %2077 = vmatpush1.msra.mxu0 0.0
        %2078 = vmatprep.subr.mxu0 0.0
        %2079 = vmatpush1.msra.mxu0 0.0
        %2080 = vmatprep.subr.mxu0 0.0
        %2081 = vmatpush1.msra.mxu0 0.0
        %2082 = vmatprep.subr.mxu0 0.0
        %2083 = vmatpush1.msra.mxu0 0.0
        %2084 = vmatprep.subr.mxu0 0.0
        %2085 = vmatpush1.msra.mxu0 0.0
        %2086 = vmatprep.subr.mxu0 0.0
        %2087 = vmatpush1.msra.mxu0 0.0
        %2088 = vmatprep.mubr.f32.mxu0 0.0
        %v2089 = vand.u32 %v2020, 4294901760
        %v2090 = vsub.f32 %v2020, %v2089
        %v2091 = vand.u32 %v2090, 4294901760
        %v2092 = vsub.f32 %v2090, %v2091
        %v2093 = vand.u32 %v2092, 4294901760
        %2094 = vmatmul.mubr.f32.gmra.mrb[0].mxu0 %v2093
        %v2095 = vpop.f32.mrb[0].mxu0
        %v2096 = vadd.f32 0.0, %v2095
        %v2097 = vpop.f32.mrb[0].mxu0
        %v2098 = vadd.f32 0.0, %v2097
        %2099 = vdwg.mxu0
        %v2100 = vand.u32 %v2017, 4294901760
        %v2101 = vsub.f32 %v2017, %v2100
        %v2102 = vand.u32 %v2101, 4294901760
        %v2103 = vsub.f32 %v2101, %v2102
        %v2104 = vand.u32 %v2103, 4294901760
        %2105 = vmatprep.subr.mxu0 %v2104
        %v2106 = vand.u32 %v2016, 4294901760
        %v2107 = vsub.f32 %v2016, %v2106
        %v2108 = vand.u32 %v2107, 4294901760
        %v2109 = vsub.f32 %v2107, %v2108
        %v2110 = vand.u32 %v2109, 4294901760
        %2111 = vmatpush1.msra.mxu0 %v2110
        %2112 = vmatprep.subr.mxu0 0.0
        %2113 = vmatpush1.msra.mxu0 0.0
        %2114 = vmatprep.subr.mxu0 0.0
        %2115 = vmatpush1.msra.mxu0 0.0
        %2116 = vmatprep.subr.mxu0 0.0
        %2117 = vmatpush1.msra.mxu0 0.0
        %2118 = vmatprep.subr.mxu0 0.0
        %2119 = vmatpush1.msra.mxu0 0.0
        %2120 = vmatprep.subr.mxu0 0.0
        %2121 = vmatpush1.msra.mxu0 0.0
        %2122 = vmatprep.subr.mxu0 0.0
        %2123 = vmatpush1.msra.mxu0 0.0
        %2124 = vmatprep.subr.mxu0 0.0
        %2125 = vmatpush1.msra.mxu0 0.0
        %2126 = vmatprep.subr.mxu0 0.0
        %2127 = vmatpush1.msra.mxu0 0.0
        %2128 = vmatprep.subr.mxu0 0.0
        %2129 = vmatpush1.msra.mxu0 0.0
        %2130 = vmatprep.subr.mxu0 0.0
        %2131 = vmatpush1.msra.mxu0 0.0
        %2132 = vmatprep.subr.mxu0 0.0
        %2133 = vmatpush1.msra.mxu0 0.0
        %2134 = vmatprep.subr.mxu0 0.0
        %2135 = vmatpush1.msra.mxu0 0.0
        %2136 = vmatprep.subr.mxu0 0.0
        %2137 = vmatpush1.msra.mxu0 0.0
        %2138 = vmatprep.subr.mxu0 0.0
        %2139 = vmatpush1.msra.mxu0 0.0
        %2140 = vmatprep.subr.mxu0 0.0
        %2141 = vmatpush1.msra.mxu0 0.0
        %2142 = vmatprep.subr.mxu0 0.0
        %2143 = vmatpush1.msra.mxu0 0.0
        %2144 = vmatprep.subr.mxu0 0.0
        %2145 = vmatpush1.msra.mxu0 0.0
        %2146 = vmatprep.subr.mxu0 0.0
        %2147 = vmatpush1.msra.mxu0 0.0
        %2148 = vmatprep.subr.mxu0 0.0
        %2149 = vmatpush1.msra.mxu0 0.0
        %2150 = vmatprep.subr.mxu0 0.0
        %2151 = vmatpush1.msra.mxu0 0.0
        %2152 = vmatprep.subr.mxu0 0.0
        %2153 = vmatpush1.msra.mxu0 0.0
        %2154 = vmatprep.subr.mxu0 0.0
        %2155 = vmatpush1.msra.mxu0 0.0
        %2156 = vmatprep.subr.mxu0 0.0
        %2157 = vmatpush1.msra.mxu0 0.0
        %2158 = vmatprep.subr.mxu0 0.0
        %2159 = vmatpush1.msra.mxu0 0.0
        %2160 = vmatprep.subr.mxu0 0.0
        %2161 = vmatpush1.msra.mxu0 0.0
        %2162 = vmatprep.subr.mxu0 0.0
        %2163 = vmatpush1.msra.mxu0 0.0
        %2164 = vmatprep.subr.mxu0 0.0
        %2165 = vmatpush1.msra.mxu0 0.0
        %2166 = vmatprep.subr.mxu0 0.0
        %2167 = vmatpush1.msra.mxu0 0.0
        %2168 = vmatprep.subr.mxu0 0.0
        %2169 = vmatpush1.msra.mxu0 0.0
        %2170 = vmatprep.subr.mxu0 0.0
        %2171 = vmatpush1.msra.mxu0 0.0
        %2172 = vmatprep.subr.mxu0 0.0
        %2173 = vmatpush1.msra.mxu0 0.0
        %2174 = vmatprep.mubr.f32.mxu0 0.0
        %v2175 = vand.u32 %v2020, 4294901760
        %2176 = vmatmul.mubr.f32.gmra.mrb[0].mxu0 %v2175
        %v2177 = vpop.f32.mrb[0].mxu0
        %v2178 = vadd.f32 %v2096, %v2177
        %v2179 = vpop.f32.mrb[0].mxu0
        %v2180 = vadd.f32 %v2098, %v2179
        %2181 = vdwg.mxu0
        %v2182 = vand.u32 %v2017, 4294901760
        %v2183 = vsub.f32 %v2017, %v2182
        %2184 = vmatprep.subr.mxu0 %v2183
        %v2185 = vand.u32 %v2016, 4294901760
        %v2186 = vsub.f32 %v2016, %v2185
        %2187 = vmatpush1.msra.mxu0 %v2186
        %2188 = vmatprep.subr.mxu0 0.0
        %2189 = vmatpush1.msra.mxu0 0.0
        %2190 = vmatprep.subr.mxu0 0.0
        %2191 = vmatpush1.msra.mxu0 0.0
        %2192 = vmatprep.subr.mxu0 0.0
        %2193 = vmatpush1.msra.mxu0 0.0
        %2194 = vmatprep.subr.mxu0 0.0
        %2195 = vmatpush1.msra.mxu0 0.0
        %2196 = vmatprep.subr.mxu0 0.0
        %2197 = vmatpush1.msra.mxu0 0.0
        %2198 = vmatprep.subr.mxu0 0.0
        %2199 = vmatpush1.msra.mxu0 0.0
        %2200 = vmatprep.subr.mxu0 0.0
        %2201 = vmatpush1.msra.mxu0 0.0
        %2202 = vmatprep.subr.mxu0 0.0
        %2203 = vmatpush1.msra.mxu0 0.0
        %2204 = vmatprep.subr.mxu0 0.0
        %2205 = vmatpush1.msra.mxu0 0.0
        %2206 = vmatprep.subr.mxu0 0.0
        %2207 = vmatpush1.msra.mxu0 0.0
        %2208 = vmatprep.subr.mxu0 0.0
        %2209 = vmatpush1.msra.mxu0 0.0
        %2210 = vmatprep.subr.mxu0 0.0
        %2211 = vmatpush1.msra.mxu0 0.0
        %2212 = vmatprep.subr.mxu0 0.0
        %2213 = vmatpush1.msra.mxu0 0.0
        %2214 = vmatprep.subr.mxu0 0.0
        %2215 = vmatpush1.msra.mxu0 0.0
        %2216 = vmatprep.subr.mxu0 0.0
        %2217 = vmatpush1.msra.mxu0 0.0
        %2218 = vmatprep.subr.mxu0 0.0
        %2219 = vmatpush1.msra.mxu0 0.0
        %2220 = vmatprep.subr.mxu0 0.0
        %2221 = vmatpush1.msra.mxu0 0.0
        %2222 = vmatprep.subr.mxu0 0.0
        %2223 = vmatpush1.msra.mxu0 0.0
        %2224 = vmatprep.subr.mxu0 0.0
        %2225 = vmatpush1.msra.mxu0 0.0
        %2226 = vmatprep.subr.mxu0 0.0
        %2227 = vmatpush1.msra.mxu0 0.0
        %2228 = vmatprep.subr.mxu0 0.0
        %2229 = vmatpush1.msra.mxu0 0.0
        %2230 = vmatprep.subr.mxu0 0.0
        %2231 = vmatpush1.msra.mxu0 0.0
        %2232 = vmatprep.subr.mxu0 0.0
        %2233 = vmatpush1.msra.mxu0 0.0
        %2234 = vmatprep.subr.mxu0 0.0
        %2235 = vmatpush1.msra.mxu0 0.0
        %2236 = vmatprep.subr.mxu0 0.0
        %2237 = vmatpush1.msra.mxu0 0.0
        %2238 = vmatprep.subr.mxu0 0.0
        %2239 = vmatpush1.msra.mxu0 0.0
        %2240 = vmatprep.subr.mxu0 0.0
        %2241 = vmatpush1.msra.mxu0 0.0
        %2242 = vmatprep.subr.mxu0 0.0
        %2243 = vmatpush1.msra.mxu0 0.0
        %2244 = vmatprep.subr.mxu0 0.0
        %2245 = vmatpush1.msra.mxu0 0.0
        %2246 = vmatprep.subr.mxu0 0.0
        %2247 = vmatpush1.msra.mxu0 0.0
        %2248 = vmatprep.subr.mxu0 0.0
        %2249 = vmatpush1.msra.mxu0 0.0
        %2250 = vmatprep.mubr.f32.mxu0 0.0
        %v2251 = vand.u32 %v2020, 4294901760
        %v2252 = vsub.f32 %v2020, %v2251
        %2253 = vmatmul.mubr.f32.gmra.mrb[0].mxu0 %v2252
        %v2254 = vpop.f32.mrb[0].mxu0
        %v2255 = vadd.f32 %v2178, %v2254
        %v2256 = vpop.f32.mrb[0].mxu0
        %v2257 = vadd.f32 %v2180, %v2256
        %2258 = vdwg.mxu0
        %v2259 = vand.u32 %v2017, 4294901760
        %2260 = vmatprep.subr.mxu0 %v2259
        %v2261 = vand.u32 %v2016, 4294901760
        %2262 = vmatpush1.msra.mxu0 %v2261
        %2263 = vmatprep.subr.mxu0 0.0
        %2264 = vmatpush1.msra.mxu0 0.0
        %2265 = vmatprep.subr.mxu0 0.0
        %2266 = vmatpush1.msra.mxu0 0.0
        %2267 = vmatprep.subr.mxu0 0.0
        %2268 = vmatpush1.msra.mxu0 0.0
        %2269 = vmatprep.subr.mxu0 0.0
        %2270 = vmatpush1.msra.mxu0 0.0
        %2271 = vmatprep.subr.mxu0 0.0
        %2272 = vmatpush1.msra.mxu0 0.0
        %2273 = vmatprep.subr.mxu0 0.0
        %2274 = vmatpush1.msra.mxu0 0.0
        %2275 = vmatprep.subr.mxu0 0.0
        %2276 = vmatpush1.msra.mxu0 0.0
        %2277 = vmatprep.subr.mxu0 0.0
        %2278 = vmatpush1.msra.mxu0 0.0
        %2279 = vmatprep.subr.mxu0 0.0
        %2280 = vmatpush1.msra.mxu0 0.0
        %2281 = vmatprep.subr.mxu0 0.0
        %2282 = vmatpush1.msra.mxu0 0.0
        %2283 = vmatprep.subr.mxu0 0.0
        %2284 = vmatpush1.msra.mxu0 0.0
        %2285 = vmatprep.subr.mxu0 0.0
        %2286 = vmatpush1.msra.mxu0 0.0
        %2287 = vmatprep.subr.mxu0 0.0
        %2288 = vmatpush1.msra.mxu0 0.0
        %2289 = vmatprep.subr.mxu0 0.0
        %2290 = vmatpush1.msra.mxu0 0.0
        %2291 = vmatprep.subr.mxu0 0.0
        %2292 = vmatpush1.msra.mxu0 0.0
        %2293 = vmatprep.subr.mxu0 0.0
        %2294 = vmatpush1.msra.mxu0 0.0
        %2295 = vmatprep.subr.mxu0 0.0
        %2296 = vmatpush1.msra.mxu0 0.0
        %2297 = vmatprep.subr.mxu0 0.0
        %2298 = vmatpush1.msra.mxu0 0.0
        %2299 = vmatprep.subr.mxu0 0.0
        %2300 = vmatpush1.msra.mxu0 0.0
        %2301 = vmatprep.subr.mxu0 0.0
        %2302 = vmatpush1.msra.mxu0 0.0
        %2303 = vmatprep.subr.mxu0 0.0
        %2304 = vmatpush1.msra.mxu0 0.0
        %2305 = vmatprep.subr.mxu0 0.0
        %2306 = vmatpush1.msra.mxu0 0.0
        %2307 = vmatprep.subr.mxu0 0.0
        %2308 = vmatpush1.msra.mxu0 0.0
        %2309 = vmatprep.subr.mxu0 0.0
        %2310 = vmatpush1.msra.mxu0 0.0
        %2311 = vmatprep.subr.mxu0 0.0
        %2312 = vmatpush1.msra.mxu0 0.0
        %2313 = vmatprep.subr.mxu0 0.0
        %2314 = vmatpush1.msra.mxu0 0.0
        %2315 = vmatprep.subr.mxu0 0.0
        %2316 = vmatpush1.msra.mxu0 0.0
        %2317 = vmatprep.subr.mxu0 0.0
        %2318 = vmatpush1.msra.mxu0 0.0
        %2319 = vmatprep.subr.mxu0 0.0
        %2320 = vmatpush1.msra.mxu0 0.0
        %2321 = vmatprep.subr.mxu0 0.0
        %2322 = vmatpush1.msra.mxu0 0.0
        %2323 = vmatprep.subr.mxu0 0.0
        %2324 = vmatpush1.msra.mxu0 0.0
        %2325 = vmatprep.mubr.f32.mxu0 0.0
        %v2326 = vand.u32 %v2020, 4294901760
        %v2327 = vsub.f32 %v2020, %v2326
        %v2328 = vand.u32 %v2327, 4294901760
        %2329 = vmatmul.mubr.f32.gmra.mrb[0].mxu0 %v2328
        %v2330 = vpop.f32.mrb[0].mxu0
        %v2331 = vadd.f32 %v2255, %v2330
        %v2332 = vpop.f32.mrb[0].mxu0
        %v2333 = vadd.f32 %v2257, %v2332
        %2334 = vdwg.mxu0
        %v2335 = vand.u32 %v2017, 4294901760
        %v2336 = vsub.f32 %v2017, %v2335
        %v2337 = vand.u32 %v2336, 4294901760
        %2338 = vmatprep.subr.mxu0 %v2337
        %v2339 = vand.u32 %v2016, 4294901760
        %v2340 = vsub.f32 %v2016, %v2339
        %v2341 = vand.u32 %v2340, 4294901760
        %2342 = vmatpush1.msra.mxu0 %v2341
        %2343 = vmatprep.subr.mxu0 0.0
        %2344 = vmatpush1.msra.mxu0 0.0
        %2345 = vmatprep.subr.mxu0 0.0
        %2346 = vmatpush1.msra.mxu0 0.0
        %2347 = vmatprep.subr.mxu0 0.0
        %2348 = vmatpush1.msra.mxu0 0.0
        %2349 = vmatprep.subr.mxu0 0.0
        %2350 = vmatpush1.msra.mxu0 0.0
        %2351 = vmatprep.subr.mxu0 0.0
        %2352 = vmatpush1.msra.mxu0 0.0
        %2353 = vmatprep.subr.mxu0 0.0
        %2354 = vmatpush1.msra.mxu0 0.0
        %2355 = vmatprep.subr.mxu0 0.0
        %2356 = vmatpush1.msra.mxu0 0.0
        %2357 = vmatprep.subr.mxu0 0.0
        %2358 = vmatpush1.msra.mxu0 0.0
        %2359 = vmatprep.subr.mxu0 0.0
        %2360 = vmatpush1.msra.mxu0 0.0
        %2361 = vmatprep.subr.mxu0 0.0
        %2362 = vmatpush1.msra.mxu0 0.0
        %2363 = vmatprep.subr.mxu0 0.0
        %2364 = vmatpush1.msra.mxu0 0.0
        %2365 = vmatprep.subr.mxu0 0.0
        %2366 = vmatpush1.msra.mxu0 0.0
        %2367 = vmatprep.subr.mxu0 0.0
        %2368 = vmatpush1.msra.mxu0 0.0
        %2369 = vmatprep.subr.mxu0 0.0
        %2370 = vmatpush1.msra.mxu0 0.0
        %2371 = vmatprep.subr.mxu0 0.0
        %2372 = vmatpush1.msra.mxu0 0.0
        %2373 = vmatprep.subr.mxu0 0.0
        %2374 = vmatpush1.msra.mxu0 0.0
        %2375 = vmatprep.subr.mxu0 0.0
        %2376 = vmatpush1.msra.mxu0 0.0
        %2377 = vmatprep.subr.mxu0 0.0
        %2378 = vmatpush1.msra.mxu0 0.0
        %2379 = vmatprep.subr.mxu0 0.0
        %2380 = vmatpush1.msra.mxu0 0.0
        %2381 = vmatprep.subr.mxu0 0.0
        %2382 = vmatpush1.msra.mxu0 0.0
        %2383 = vmatprep.subr.mxu0 0.0
        %2384 = vmatpush1.msra.mxu0 0.0
        %2385 = vmatprep.subr.mxu0 0.0
        %2386 = vmatpush1.msra.mxu0 0.0
        %2387 = vmatprep.subr.mxu0 0.0
        %2388 = vmatpush1.msra.mxu0 0.0
        %2389 = vmatprep.subr.mxu0 0.0
        %2390 = vmatpush1.msra.mxu0 0.0
        %2391 = vmatprep.subr.mxu0 0.0
        %2392 = vmatpush1.msra.mxu0 0.0
        %2393 = vmatprep.subr.mxu0 0.0
        %2394 = vmatpush1.msra.mxu0 0.0
        %2395 = vmatprep.subr.mxu0 0.0
        %2396 = vmatpush1.msra.mxu0 0.0
        %2397 = vmatprep.subr.mxu0 0.0
        %2398 = vmatpush1.msra.mxu0 0.0
        %2399 = vmatprep.subr.mxu0 0.0
        %2400 = vmatpush1.msra.mxu0 0.0
        %2401 = vmatprep.subr.mxu0 0.0
        %2402 = vmatpush1.msra.mxu0 0.0
        %2403 = vmatprep.subr.mxu0 0.0
        %2404 = vmatpush1.msra.mxu0 0.0
        %2405 = vmatprep.mubr.f32.mxu0 0.0
        %v2406 = vand.u32 %v2020, 4294901760
        %2407 = vmatmul.mubr.f32.gmra.mrb[0].mxu0 %v2406
        %v2408 = vpop.f32.mrb[0].mxu0
        %v2409 = vadd.f32 %v2331, %v2408
        %v2410 = vpop.f32.mrb[0].mxu0
        %v2411 = vadd.f32 %v2333, %v2410
        %2412 = vdwg.mxu0
        %v2413 = vand.u32 %v2017, 4294901760
        %2414 = vmatprep.subr.mxu0 %v2413
        %v2415 = vand.u32 %v2016, 4294901760
        %2416 = vmatpush1.msra.mxu0 %v2415
        %2417 = vmatprep.subr.mxu0 0.0
        %2418 = vmatpush1.msra.mxu0 0.0
        %2419 = vmatprep.subr.mxu0 0.0
        %2420 = vmatpush1.msra.mxu0 0.0
        %2421 = vmatprep.subr.mxu0 0.0
        %2422 = vmatpush1.msra.mxu0 0.0
        %2423 = vmatprep.subr.mxu0 0.0
        %2424 = vmatpush1.msra.mxu0 0.0
        %2425 = vmatprep.subr.mxu0 0.0
        %2426 = vmatpush1.msra.mxu0 0.0
        %2427 = vmatprep.subr.mxu0 0.0
        %2428 = vmatpush1.msra.mxu0 0.0
        %2429 = vmatprep.subr.mxu0 0.0
        %2430 = vmatpush1.msra.mxu0 0.0
        %2431 = vmatprep.subr.mxu0 0.0
        %2432 = vmatpush1.msra.mxu0 0.0
        %2433 = vmatprep.subr.mxu0 0.0
        %2434 = vmatpush1.msra.mxu0 0.0
        %2435 = vmatprep.subr.mxu0 0.0
        %2436 = vmatpush1.msra.mxu0 0.0
        %2437 = vmatprep.subr.mxu0 0.0
        %2438 = vmatpush1.msra.mxu0 0.0
        %2439 = vmatprep.subr.mxu0 0.0
        %2440 = vmatpush1.msra.mxu0 0.0
        %2441 = vmatprep.subr.mxu0 0.0
        %2442 = vmatpush1.msra.mxu0 0.0
        %2443 = vmatprep.subr.mxu0 0.0
        %2444 = vmatpush1.msra.mxu0 0.0
        %2445 = vmatprep.subr.mxu0 0.0
        %2446 = vmatpush1.msra.mxu0 0.0
        %2447 = vmatprep.subr.mxu0 0.0
        %2448 = vmatpush1.msra.mxu0 0.0
        %2449 = vmatprep.subr.mxu0 0.0
        %2450 = vmatpush1.msra.mxu0 0.0
        %2451 = vmatprep.subr.mxu0 0.0
        %2452 = vmatpush1.msra.mxu0 0.0
        %2453 = vmatprep.subr.mxu0 0.0
        %2454 = vmatpush1.msra.mxu0 0.0
        %2455 = vmatprep.subr.mxu0 0.0
        %2456 = vmatpush1.msra.mxu0 0.0
        %2457 = vmatprep.subr.mxu0 0.0
        %2458 = vmatpush1.msra.mxu0 0.0
        %2459 = vmatprep.subr.mxu0 0.0
        %2460 = vmatpush1.msra.mxu0 0.0
        %2461 = vmatprep.subr.mxu0 0.0
        %2462 = vmatpush1.msra.mxu0 0.0
        %2463 = vmatprep.subr.mxu0 0.0
        %2464 = vmatpush1.msra.mxu0 0.0
        %2465 = vmatprep.subr.mxu0 0.0
        %2466 = vmatpush1.msra.mxu0 0.0
        %2467 = vmatprep.subr.mxu0 0.0
        %2468 = vmatpush1.msra.mxu0 0.0
        %2469 = vmatprep.subr.mxu0 0.0
        %2470 = vmatpush1.msra.mxu0 0.0
        %2471 = vmatprep.subr.mxu0 0.0
        %2472 = vmatpush1.msra.mxu0 0.0
        %2473 = vmatprep.subr.mxu0 0.0
        %2474 = vmatpush1.msra.mxu0 0.0
        %2475 = vmatprep.subr.mxu0 0.0
        %2476 = vmatpush1.msra.mxu0 0.0
        %2477 = vmatprep.subr.mxu0 0.0
        %2478 = vmatpush1.msra.mxu0 0.0
        %2479 = vmatprep.mubr.f32.mxu0 0.0
        %v2480 = vand.u32 %v2020, 4294901760
        %2481 = vmatmul.mubr.f32.gmra.mrb[0].mxu0 %v2480
        %v2482 = vpop.f32.mrb[0].mxu0
        %v2483 = vadd.f32 %v2409, %v2482
        %v2484 = vpop.f32.mrb[0].mxu0
        %v2485 = vadd.f32 %v2411, %v2484
        %2486 = vdwg.mxu0
        %v2487 = vcvt.f32.s32.ties.to.even %v2483
        %v2488 = vcvt.f32.s32.ties.to.even %v2485
        %v2489 = vsel %vm1976, %v2487, 80
        %v2490 = vsel %vm1977, %v2488, 80
        %v2491 = vcvt.f32.s32.to.zero.pseudo %v490
        %v2492 = vadd.s32 %v1895, 8
        %v2493 = vadd.s32 %v1895, 16
        %v2494 = vadd.s32 %v1895, 24
        %v2495 = vadd.s32 %v1895, 32
        %v2496 = vadd.s32 %v1895, 40
        %v2497 = vadd.s32 %v1895, 48
        %v2498 = vadd.s32 %v1895, 56
        %v2499 = vadd.s32 %v1895, 64
        %v2500 = vadd.s32 %v1895, 72
        %v2501 = vlaneseq
        %v2502 = vshrl.u32 %v2501, 7
        %v2503 = vsub.s32 4, %v2502
        %v2504 = vrot.slane %v2491, %v2503
        %vm2505 = vcmp.eq.s32.totalorder %v1895, %v2504
        %vm2506 = vcmp.eq.s32.totalorder %v2492, %v2504
        %vm2507 = vcmp.eq.s32.totalorder %v2493, %v2504
        %vm2508 = vcmp.eq.s32.totalorder %v2494, %v2504
        %vm2509 = vcmp.eq.s32.totalorder %v2495, %v2504
        %vm2510 = vcmp.eq.s32.totalorder %v2496, %v2504
        %vm2511 = vcmp.eq.s32.totalorder %v2497, %v2504
        %vm2512 = vcmp.eq.s32.totalorder %v2498, %v2504
        %vm2513 = vcmp.eq.s32.totalorder %v2499, %v2504
        %vm2514 = vcmp.eq.s32.totalorder %v2500, %v2504
        %v2515 = vsel %vm2505, 1, 0
        %v2516 = vsel %vm2506, 1, 0
        %v2517 = vsel %vm2507, 1, 0
        %v2518 = vsel %vm2508, 1, 0
        %v2519 = vsel %vm2509, 1, 0
        %v2520 = vsel %vm2510, 1, 0
        %v2521 = vsel %vm2511, 1, 0
        %v2522 = vsel %vm2512, 1, 0
        %v2523 = vsel %vm2513, 1, 0
        %v2524 = vsel %vm2514, 1, 0
        %v2525 = vcvt.s32.f32 %v2515
        %v2526 = vcvt.s32.f32 %v2516
        %v2527 = vcvt.s32.f32 %v2517
        %v2528 = vcvt.s32.f32 %v2518
        %v2529 = vcvt.s32.f32 %v2519
        %v2530 = vcvt.s32.f32 %v2520
        %v2531 = vcvt.s32.f32 %v2521
        %v2532 = vcvt.s32.f32 %v2522
        %v2533 = vcvt.s32.f32 %v2523
        %v2534 = vcvt.s32.f32 %v2524
        %v2535 = vsel %vm1976, 1, 0
        %v2536 = vsel %vm1977, 1, 0
        %v2537 = vcvt.s32.f32 %v2535
        %v2538 = vcvt.s32.f32 %v2536
        %v2539 = vmul.f32 %v2016, %v2537
        %v2540 = vmul.f32 %v2017, %v2538
        %v2542 = vsel %vm2018, %v2525, 0
        %v2545 = vsel %vm2018, %v2526, 0
        %v2548 = vsel %vm2018, %v2527, 0
        %v2551 = vsel %vm2018, %v2528, 0
        %v2554 = vsel %vm2018, %v2529, 0
        %v2557 = vsel %vm2018, %v2530, 0
        %v2560 = vsel %vm2018, %v2531, 0
        %v2563 = vsel %vm2018, %v2532, 0
        %v2566 = vsel %vm2018, %v2533, 0
        %v2569 = vsel %vm2018, %v2534, 0
        %v2571 = vand.u32 %v2540, 4294901760
        %2572 = vmatprep.subr.mxu0 %v2571
        %v2573 = vand.u32 %v2539, 4294901760
        %2574 = vmatpush1.msra.mxu0 %v2573
        %2575 = vmatprep.subr.mxu0 0.0
        %2576 = vmatpush1.msra.mxu0 0.0
        %2577 = vmatprep.subr.mxu0 0.0
        %2578 = vmatpush1.msra.mxu0 0.0
        %2579 = vmatprep.subr.mxu0 0.0
        %2580 = vmatpush1.msra.mxu0 0.0
        %2581 = vmatprep.subr.mxu0 0.0
        %2582 = vmatpush1.msra.mxu0 0.0
        %2583 = vmatprep.subr.mxu0 0.0
        %2584 = vmatpush1.msra.mxu0 0.0
        %2585 = vmatprep.subr.mxu0 0.0
        %2586 = vmatpush1.msra.mxu0 0.0
        %2587 = vmatprep.subr.mxu0 0.0
        %2588 = vmatpush1.msra.mxu0 0.0
        %2589 = vmatprep.subr.mxu0 0.0
        %2590 = vmatpush1.msra.mxu0 0.0
        %2591 = vmatprep.subr.mxu0 0.0
        %2592 = vmatpush1.msra.mxu0 0.0
        %2593 = vmatprep.subr.mxu0 0.0
        %2594 = vmatpush1.msra.mxu0 0.0
        %2595 = vmatprep.subr.mxu0 0.0
        %2596 = vmatpush1.msra.mxu0 0.0
        %2597 = vmatprep.subr.mxu0 0.0
        %2598 = vmatpush1.msra.mxu0 0.0
        %2599 = vmatprep.subr.mxu0 0.0
        %2600 = vmatpush1.msra.mxu0 0.0
        %2601 = vmatprep.subr.mxu0 0.0
        %2602 = vmatpush1.msra.mxu0 0.0
        %2603 = vmatprep.subr.mxu0 0.0
        %2604 = vmatpush1.msra.mxu0 0.0
        %2605 = vmatprep.subr.mxu0 0.0
        %2606 = vmatpush1.msra.mxu0 0.0
        %2607 = vmatprep.subr.mxu0 0.0
        %2608 = vmatpush1.msra.mxu0 0.0
        %2609 = vmatprep.subr.mxu0 0.0
        %2610 = vmatpush1.msra.mxu0 0.0
        %2611 = vmatprep.subr.mxu0 0.0
        %2612 = vmatpush1.msra.mxu0 0.0
        %2613 = vmatprep.subr.mxu0 0.0
        %2614 = vmatpush1.msra.mxu0 0.0
        %2615 = vmatprep.subr.mxu0 0.0
        %2616 = vmatpush1.msra.mxu0 0.0
        %2617 = vmatprep.subr.mxu0 0.0
        %2618 = vmatpush1.msra.mxu0 0.0
        %2619 = vmatprep.subr.mxu0 0.0
        %2620 = vmatpush1.msra.mxu0 0.0
        %2621 = vmatprep.subr.mxu0 0.0
        %2622 = vmatpush1.msra.mxu0 0.0
        %2623 = vmatprep.subr.mxu0 0.0
        %2624 = vmatpush1.msra.mxu0 0.0
        %2625 = vmatprep.subr.mxu0 0.0
        %2626 = vmatpush1.msra.mxu0 0.0
        %2627 = vmatprep.subr.mxu0 0.0
        %2628 = vmatpush1.msra.mxu0 0.0
        %2629 = vmatprep.subr.mxu0 0.0
        %2630 = vmatpush1.msra.mxu0 0.0
        %2631 = vmatprep.subr.mxu0 0.0
        %2632 = vmatpush1.msra.mxu0 0.0
        %2633 = vmatprep.subr.mxu0 0.0
        %2634 = vmatpush1.msra.mxu0 0.0
        %2635 = vmatprep.subr.mxu0 0.0
        %2636 = vmatpush1.msra.mxu0 0.0
        %2637 = vmatprep.mubr.f32.mxu0 0.0
        %v2638 = vand.u32 %v2542, 4294901760
        %v2639 = vsub.f32 %v2542, %v2638
        %v2640 = vand.u32 %v2639, 4294901760
        %v2641 = vsub.f32 %v2639, %v2640
        %v2642 = vand.u32 %v2641, 4294901760
        %2643 = vmatmul.mubr.f32.gmra.mrb[0].mxu0 %v2642
        %v2644 = vpop.f32.mrb[0].mxu0
        %v2645 = vadd.f32 0.0, %v2644
        %v2646 = vpop.f32.mrb[0].mxu0
        %v2647 = vadd.f32 0.0, %v2646
        %2648 = vmatprep.mubr.f32.mxu0 0.0
        %v2649 = vand.u32 %v2545, 4294901760
        %v2650 = vsub.f32 %v2545, %v2649
        %v2651 = vand.u32 %v2650, 4294901760
        %v2652 = vsub.f32 %v2650, %v2651
        %v2653 = vand.u32 %v2652, 4294901760
        %2654 = vmatmul.mubr.f32.gmra.mrb[0].mxu0 %v2653
        %v2655 = vpop.f32.mrb[0].mxu0
        %v2656 = vadd.f32 0.0, %v2655
        %v2657 = vpop.f32.mrb[0].mxu0
        %v2658 = vadd.f32 0.0, %v2657
        %2659 = vmatprep.mubr.f32.mxu0 0.0
        %v2660 = vand.u32 %v2548, 4294901760
        %v2661 = vsub.f32 %v2548, %v2660
        %v2662 = vand.u32 %v2661, 4294901760
        %v2663 = vsub.f32 %v2661, %v2662
        %v2664 = vand.u32 %v2663, 4294901760
        %2665 = vmatmul.mubr.f32.gmra.mrb[0].mxu0 %v2664
        %v2666 = vpop.f32.mrb[0].mxu0
        %v2667 = vadd.f32 0.0, %v2666
        %v2668 = vpop.f32.mrb[0].mxu0
        %v2669 = vadd.f32 0.0, %v2668
        %2670 = vmatprep.mubr.f32.mxu0 0.0
        %v2671 = vand.u32 %v2551, 4294901760
        %v2672 = vsub.f32 %v2551, %v2671
        %v2673 = vand.u32 %v2672, 4294901760
        %v2674 = vsub.f32 %v2672, %v2673
        %v2675 = vand.u32 %v2674, 4294901760
        %2676 = vmatmul.mubr.f32.gmra.mrb[0].mxu0 %v2675
        %v2677 = vpop.f32.mrb[0].mxu0
        %v2678 = vadd.f32 0.0, %v2677
        %v2679 = vpop.f32.mrb[0].mxu0
        %v2680 = vadd.f32 0.0, %v2679
        %2681 = vmatprep.mubr.f32.mxu0 0.0
        %v2682 = vand.u32 %v2554, 4294901760
        %v2683 = vsub.f32 %v2554, %v2682
        %v2684 = vand.u32 %v2683, 4294901760
        %v2685 = vsub.f32 %v2683, %v2684
        %v2686 = vand.u32 %v2685, 4294901760
        %2687 = vmatmul.mubr.f32.gmra.mrb[0].mxu0 %v2686
        %v2688 = vpop.f32.mrb[0].mxu0
        %v2689 = vadd.f32 0.0, %v2688
        %v2690 = vpop.f32.mrb[0].mxu0
        %v2691 = vadd.f32 0.0, %v2690
        %2692 = vmatprep.mubr.f32.mxu0 0.0
        %v2693 = vand.u32 %v2557, 4294901760
        %v2694 = vsub.f32 %v2557, %v2693
        %v2695 = vand.u32 %v2694, 4294901760
        %v2696 = vsub.f32 %v2694, %v2695
        %v2697 = vand.u32 %v2696, 4294901760
        %2698 = vmatmul.mubr.f32.gmra.mrb[0].mxu0 %v2697
        %v2699 = vpop.f32.mrb[0].mxu0
        %v2700 = vadd.f32 0.0, %v2699
        %v2701 = vpop.f32.mrb[0].mxu0
        %v2702 = vadd.f32 0.0, %v2701
        %2703 = vmatprep.mubr.f32.mxu0 0.0
        %v2704 = vand.u32 %v2560, 4294901760
        %v2705 = vsub.f32 %v2560, %v2704
        %v2706 = vand.u32 %v2705, 4294901760
        %v2707 = vsub.f32 %v2705, %v2706
        %v2708 = vand.u32 %v2707, 4294901760
        %2709 = vmatmul.mubr.f32.gmra.mrb[0].mxu0 %v2708
        %v2710 = vpop.f32.mrb[0].mxu0
        %v2711 = vadd.f32 0.0, %v2710
        %v2712 = vpop.f32.mrb[0].mxu0
        %v2713 = vadd.f32 0.0, %v2712
        %2714 = vmatprep.mubr.f32.mxu0 0.0
        %v2715 = vand.u32 %v2563, 4294901760
        %v2716 = vsub.f32 %v2563, %v2715
        %v2717 = vand.u32 %v2716, 4294901760
        %v2718 = vsub.f32 %v2716, %v2717
        %v2719 = vand.u32 %v2718, 4294901760
        %2720 = vmatmul.mubr.f32.gmra.mrb[0].mxu0 %v2719
        %v2721 = vpop.f32.mrb[0].mxu0
        %v2722 = vadd.f32 0.0, %v2721
        %v2723 = vpop.f32.mrb[0].mxu0
        %v2724 = vadd.f32 0.0, %v2723
        %2725 = vmatprep.mubr.f32.mxu0 0.0
        %v2726 = vand.u32 %v2566, 4294901760
        %v2727 = vsub.f32 %v2566, %v2726
        %v2728 = vand.u32 %v2727, 4294901760
        %v2729 = vsub.f32 %v2727, %v2728
        %v2730 = vand.u32 %v2729, 4294901760
        %2731 = vmatmul.mubr.f32.gmra.mrb[0].mxu0 %v2730
        %v2732 = vpop.f32.mrb[0].mxu0
        %v2733 = vadd.f32 0.0, %v2732
        %v2734 = vpop.f32.mrb[0].mxu0
        %v2735 = vadd.f32 0.0, %v2734
        %2736 = vmatprep.mubr.f32.mxu0 0.0
        %v2737 = vand.u32 %v2569, 4294901760
        %v2738 = vsub.f32 %v2569, %v2737
        %v2739 = vand.u32 %v2738, 4294901760
        %v2740 = vsub.f32 %v2738, %v2739
        %v2741 = vand.u32 %v2740, 4294901760
        %2742 = vmatmul.mubr.f32.gmra.mrb[0].mxu0 %v2741
        %v2743 = vpop.f32.mrb[0].mxu0
        %v2744 = vadd.f32 0.0, %v2743
        %v2745 = vpop.f32.mrb[0].mxu0
        %v2746 = vadd.f32 0.0, %v2745
        %2747 = vdwg.mxu0
        %v2748 = vand.u32 %v2540, 4294901760
        %v2749 = vsub.f32 %v2540, %v2748
        %v2750 = vand.u32 %v2749, 4294901760
        %v2751 = vsub.f32 %v2749, %v2750
        %v2752 = vand.u32 %v2751, 4294901760
        %2753 = vmatprep.subr.mxu0 %v2752
        %v2754 = vand.u32 %v2539, 4294901760
        %v2755 = vsub.f32 %v2539, %v2754
        %v2756 = vand.u32 %v2755, 4294901760
        %v2757 = vsub.f32 %v2755, %v2756
        %v2758 = vand.u32 %v2757, 4294901760
        %2759 = vmatpush1.msra.mxu0 %v2758
        %2760 = vmatprep.subr.mxu0 0.0
        %2761 = vmatpush1.msra.mxu0 0.0
        %2762 = vmatprep.subr.mxu0 0.0
        %2763 = vmatpush1.msra.mxu0 0.0
        %2764 = vmatprep.subr.mxu0 0.0
        %2765 = vmatpush1.msra.mxu0 0.0
        %2766 = vmatprep.subr.mxu0 0.0
        %2767 = vmatpush1.msra.mxu0 0.0
        %2768 = vmatprep.subr.mxu0 0.0
        %2769 = vmatpush1.msra.mxu0 0.0
        %2770 = vmatprep.subr.mxu0 0.0
        %2771 = vmatpush1.msra.mxu0 0.0
        %2772 = vmatprep.subr.mxu0 0.0
        %2773 = vmatpush1.msra.mxu0 0.0
        %2774 = vmatprep.subr.mxu0 0.0
        %2775 = vmatpush1.msra.mxu0 0.0
        %2776 = vmatprep.subr.mxu0 0.0
        %2777 = vmatpush1.msra.mxu0 0.0
        %2778 = vmatprep.subr.mxu0 0.0
        %2779 = vmatpush1.msra.mxu0 0.0
        %2780 = vmatprep.subr.mxu0 0.0
        %2781 = vmatpush1.msra.mxu0 0.0
        %2782 = vmatprep.subr.mxu0 0.0
        %2783 = vmatpush1.msra.mxu0 0.0
        %2784 = vmatprep.subr.mxu0 0.0
        %2785 = vmatpush1.msra.mxu0 0.0
        %2786 = vmatprep.subr.mxu0 0.0
        %2787 = vmatpush1.msra.mxu0 0.0
        %2788 = vmatprep.subr.mxu0 0.0
        %2789 = vmatpush1.msra.mxu0 0.0
        %2790 = vmatprep.subr.mxu0 0.0
        %2791 = vmatpush1.msra.mxu0 0.0
        %2792 = vmatprep.subr.mxu0 0.0
        %2793 = vmatpush1.msra.mxu0 0.0
        %2794 = vmatprep.subr.mxu0 0.0
        %2795 = vmatpush1.msra.mxu0 0.0
        %2796 = vmatprep.subr.mxu0 0.0
        %2797 = vmatpush1.msra.mxu0 0.0
        %2798 = vmatprep.subr.mxu0 0.0
        %2799 = vmatpush1.msra.mxu0 0.0
        %2800 = vmatprep.subr.mxu0 0.0
        %2801 = vmatpush1.msra.mxu0 0.0
        %2802 = vmatprep.subr.mxu0 0.0
        %2803 = vmatpush1.msra.mxu0 0.0
        %2804 = vmatprep.subr.mxu0 0.0
        %2805 = vmatpush1.msra.mxu0 0.0
        %2806 = vmatprep.subr.mxu0 0.0
        %2807 = vmatpush1.msra.mxu0 0.0
        %2808 = vmatprep.subr.mxu0 0.0
        %2809 = vmatpush1.msra.mxu0 0.0
        %2810 = vmatprep.subr.mxu0 0.0
        %2811 = vmatpush1.msra.mxu0 0.0
        %2812 = vmatprep.subr.mxu0 0.0
        %2813 = vmatpush1.msra.mxu0 0.0
        %2814 = vmatprep.subr.mxu0 0.0
        %2815 = vmatpush1.msra.mxu0 0.0
        %2816 = vmatprep.subr.mxu0 0.0
        %2817 = vmatpush1.msra.mxu0 0.0
        %2818 = vmatprep.subr.mxu0 0.0
        %2819 = vmatpush1.msra.mxu0 0.0
        %2820 = vmatprep.subr.mxu0 0.0
        %2821 = vmatpush1.msra.mxu0 0.0
        %2822 = vmatprep.mubr.f32.mxu0 0.0
        %v2823 = vand.u32 %v2542, 4294901760
        %2824 = vmatmul.mubr.f32.gmra.mrb[0].mxu0 %v2823
        %v2825 = vpop.f32.mrb[0].mxu0
        %v2826 = vadd.f32 %v2645, %v2825
        %v2827 = vpop.f32.mrb[0].mxu0
        %v2828 = vadd.f32 %v2647, %v2827
        %2829 = vmatprep.mubr.f32.mxu0 0.0
        %v2830 = vand.u32 %v2545, 4294901760
        %2831 = vmatmul.mubr.f32.gmra.mrb[0].mxu0 %v2830
        %v2832 = vpop.f32.mrb[0].mxu0
        %v2833 = vadd.f32 %v2656, %v2832
        %v2834 = vpop.f32.mrb[0].mxu0
        %v2835 = vadd.f32 %v2658, %v2834
        %2836 = vmatprep.mubr.f32.mxu0 0.0
        %v2837 = vand.u32 %v2548, 4294901760
        %2838 = vmatmul.mubr.f32.gmra.mrb[0].mxu0 %v2837
        %v2839 = vpop.f32.mrb[0].mxu0
        %v2840 = vadd.f32 %v2667, %v2839
        %v2841 = vpop.f32.mrb[0].mxu0
        %v2842 = vadd.f32 %v2669, %v2841
        %2843 = vmatprep.mubr.f32.mxu0 0.0
        %v2844 = vand.u32 %v2551, 4294901760
        %2845 = vmatmul.mubr.f32.gmra.mrb[0].mxu0 %v2844
        %v2846 = vpop.f32.mrb[0].mxu0
        %v2847 = vadd.f32 %v2678, %v2846
        %v2848 = vpop.f32.mrb[0].mxu0
        %v2849 = vadd.f32 %v2680, %v2848
        %2850 = vmatprep.mubr.f32.mxu0 0.0
        %v2851 = vand.u32 %v2554, 4294901760
        %2852 = vmatmul.mubr.f32.gmra.mrb[0].mxu0 %v2851
        %v2853 = vpop.f32.mrb[0].mxu0
        %v2854 = vadd.f32 %v2689, %v2853
        %v2855 = vpop.f32.mrb[0].mxu0
        %v2856 = vadd.f32 %v2691, %v2855
        %2857 = vmatprep.mubr.f32.mxu0 0.0
        %v2858 = vand.u32 %v2557, 4294901760
        %2859 = vmatmul.mubr.f32.gmra.mrb[0].mxu0 %v2858
        %v2860 = vpop.f32.mrb[0].mxu0
        %v2861 = vadd.f32 %v2700, %v2860
        %v2862 = vpop.f32.mrb[0].mxu0
        %v2863 = vadd.f32 %v2702, %v2862
        %2864 = vmatprep.mubr.f32.mxu0 0.0
        %v2865 = vand.u32 %v2560, 4294901760
        %2866 = vmatmul.mubr.f32.gmra.mrb[0].mxu0 %v2865
        %v2867 = vpop.f32.mrb[0].mxu0
        %v2868 = vadd.f32 %v2711, %v2867
        %v2869 = vpop.f32.mrb[0].mxu0
        %v2870 = vadd.f32 %v2713, %v2869
        %2871 = vmatprep.mubr.f32.mxu0 0.0
        %v2872 = vand.u32 %v2563, 4294901760
        %2873 = vmatmul.mubr.f32.gmra.mrb[0].mxu0 %v2872
        %v2874 = vpop.f32.mrb[0].mxu0
        %v2875 = vadd.f32 %v2722, %v2874
        %v2876 = vpop.f32.mrb[0].mxu0
        %v2877 = vadd.f32 %v2724, %v2876
        %2878 = vmatprep.mubr.f32.mxu0 0.0
        %v2879 = vand.u32 %v2566, 4294901760
        %2880 = vmatmul.mubr.f32.gmra.mrb[0].mxu0 %v2879
        %v2881 = vpop.f32.mrb[0].mxu0
        %v2882 = vadd.f32 %v2733, %v2881
        %v2883 = vpop.f32.mrb[0].mxu0
        %v2884 = vadd.f32 %v2735, %v2883
        %2885 = vmatprep.mubr.f32.mxu0 0.0
        %v2886 = vand.u32 %v2569, 4294901760
        %2887 = vmatmul.mubr.f32.gmra.mrb[0].mxu0 %v2886
        %v2888 = vpop.f32.mrb[0].mxu0
        %v2889 = vadd.f32 %v2744, %v2888
        %v2890 = vpop.f32.mrb[0].mxu0
        %v2891 = vadd.f32 %v2746, %v2890
        %2892 = vdwg.mxu0
        %v2893 = vand.u32 %v2540, 4294901760
        %v2894 = vsub.f32 %v2540, %v2893
        %2895 = vmatprep.subr.mxu0 %v2894
        %v2896 = vand.u32 %v2539, 4294901760
        %v2897 = vsub.f32 %v2539, %v2896
        %2898 = vmatpush1.msra.mxu0 %v2897
        %2899 = vmatprep.subr.mxu0 0.0
        %2900 = vmatpush1.msra.mxu0 0.0
        %2901 = vmatprep.subr.mxu0 0.0
        %2902 = vmatpush1.msra.mxu0 0.0
        %2903 = vmatprep.subr.mxu0 0.0
        %2904 = vmatpush1.msra.mxu0 0.0
        %2905 = vmatprep.subr.mxu0 0.0
        %2906 = vmatpush1.msra.mxu0 0.0
        %2907 = vmatprep.subr.mxu0 0.0
        %2908 = vmatpush1.msra.mxu0 0.0
        %2909 = vmatprep.subr.mxu0 0.0
        %2910 = vmatpush1.msra.mxu0 0.0
        %2911 = vmatprep.subr.mxu0 0.0
        %2912 = vmatpush1.msra.mxu0 0.0
        %2913 = vmatprep.subr.mxu0 0.0
        %2914 = vmatpush1.msra.mxu0 0.0
        %2915 = vmatprep.subr.mxu0 0.0
        %2916 = vmatpush1.msra.mxu0 0.0
        %2917 = vmatprep.subr.mxu0 0.0
        %2918 = vmatpush1.msra.mxu0 0.0
        %2919 = vmatprep.subr.mxu0 0.0
        %2920 = vmatpush1.msra.mxu0 0.0
        %2921 = vmatprep.subr.mxu0 0.0
        %2922 = vmatpush1.msra.mxu0 0.0
        %2923 = vmatprep.subr.mxu0 0.0
        %2924 = vmatpush1.msra.mxu0 0.0
        %2925 = vmatprep.subr.mxu0 0.0
        %2926 = vmatpush1.msra.mxu0 0.0
        %2927 = vmatprep.subr.mxu0 0.0
        %2928 = vmatpush1.msra.mxu0 0.0
        %2929 = vmatprep.subr.mxu0 0.0
        %2930 = vmatpush1.msra.mxu0 0.0
        %2931 = vmatprep.subr.mxu0 0.0
        %2932 = vmatpush1.msra.mxu0 0.0
        %2933 = vmatprep.subr.mxu0 0.0
        %2934 = vmatpush1.msra.mxu0 0.0
        %2935 = vmatprep.subr.mxu0 0.0
        %2936 = vmatpush1.msra.mxu0 0.0
        %2937 = vmatprep.subr.mxu0 0.0
        %2938 = vmatpush1.msra.mxu0 0.0
        %2939 = vmatprep.subr.mxu0 0.0
        %2940 = vmatpush1.msra.mxu0 0.0
        %2941 = vmatprep.subr.mxu0 0.0
        %2942 = vmatpush1.msra.mxu0 0.0
        %2943 = vmatprep.subr.mxu0 0.0
        %2944 = vmatpush1.msra.mxu0 0.0
        %2945 = vmatprep.subr.mxu0 0.0
        %2946 = vmatpush1.msra.mxu0 0.0
        %2947 = vmatprep.subr.mxu0 0.0
        %2948 = vmatpush1.msra.mxu0 0.0
        %2949 = vmatprep.subr.mxu0 0.0
        %2950 = vmatpush1.msra.mxu0 0.0
        %2951 = vmatprep.subr.mxu0 0.0
        %2952 = vmatpush1.msra.mxu0 0.0
        %2953 = vmatprep.subr.mxu0 0.0
        %2954 = vmatpush1.msra.mxu0 0.0
        %2955 = vmatprep.subr.mxu0 0.0
        %2956 = vmatpush1.msra.mxu0 0.0
        %2957 = vmatprep.subr.mxu0 0.0
        %2958 = vmatpush1.msra.mxu0 0.0
        %2959 = vmatprep.subr.mxu0 0.0
        %2960 = vmatpush1.msra.mxu0 0.0
        %2961 = vmatprep.mubr.f32.mxu0 0.0
        %v2962 = vand.u32 %v2542, 4294901760
        %v2963 = vsub.f32 %v2542, %v2962
        %2964 = vmatmul.mubr.f32.gmra.mrb[0].mxu0 %v2963
        %v2965 = vpop.f32.mrb[0].mxu0
        %v2966 = vadd.f32 %v2826, %v2965
        %v2967 = vpop.f32.mrb[0].mxu0
        %v2968 = vadd.f32 %v2828, %v2967
        %2969 = vmatprep.mubr.f32.mxu0 0.0
        %v2970 = vand.u32 %v2545, 4294901760
        %v2971 = vsub.f32 %v2545, %v2970
        %2972 = vmatmul.mubr.f32.gmra.mrb[0].mxu0 %v2971
        %v2973 = vpop.f32.mrb[0].mxu0
        %v2974 = vadd.f32 %v2833, %v2973
        %v2975 = vpop.f32.mrb[0].mxu0
        %v2976 = vadd.f32 %v2835, %v2975
        %2977 = vmatprep.mubr.f32.mxu0 0.0
        %v2978 = vand.u32 %v2548, 4294901760
        %v2979 = vsub.f32 %v2548, %v2978
        %2980 = vmatmul.mubr.f32.gmra.mrb[0].mxu0 %v2979
        %v2981 = vpop.f32.mrb[0].mxu0
        %v2982 = vadd.f32 %v2840, %v2981
        %v2983 = vpop.f32.mrb[0].mxu0
        %v2984 = vadd.f32 %v2842, %v2983
        %2985 = vmatprep.mubr.f32.mxu0 0.0
        %v2986 = vand.u32 %v2551, 4294901760
        %v2987 = vsub.f32 %v2551, %v2986
        %2988 = vmatmul.mubr.f32.gmra.mrb[0].mxu0 %v2987
        %v2989 = vpop.f32.mrb[0].mxu0
        %v2990 = vadd.f32 %v2847, %v2989
        %v2991 = vpop.f32.mrb[0].mxu0
        %v2992 = vadd.f32 %v2849, %v2991
        %2993 = vmatprep.mubr.f32.mxu0 0.0
        %v2994 = vand.u32 %v2554, 4294901760
        %v2995 = vsub.f32 %v2554, %v2994
        %2996 = vmatmul.mubr.f32.gmra.mrb[0].mxu0 %v2995
        %v2997 = vpop.f32.mrb[0].mxu0
        %v2998 = vadd.f32 %v2854, %v2997
        %v2999 = vpop.f32.mrb[0].mxu0
        %v3000 = vadd.f32 %v2856, %v2999
        %3001 = vmatprep.mubr.f32.mxu0 0.0
        %v3002 = vand.u32 %v2557, 4294901760
        %v3003 = vsub.f32 %v2557, %v3002
        %3004 = vmatmul.mubr.f32.gmra.mrb[0].mxu0 %v3003
        %v3005 = vpop.f32.mrb[0].mxu0
        %v3006 = vadd.f32 %v2861, %v3005
        %v3007 = vpop.f32.mrb[0].mxu0
        %v3008 = vadd.f32 %v2863, %v3007
        %3009 = vmatprep.mubr.f32.mxu0 0.0
        %v3010 = vand.u32 %v2560, 4294901760
        %v3011 = vsub.f32 %v2560, %v3010
        %3012 = vmatmul.mubr.f32.gmra.mrb[0].mxu0 %v3011
        %v3013 = vpop.f32.mrb[0].mxu0
        %v3014 = vadd.f32 %v2868, %v3013
        %v3015 = vpop.f32.mrb[0].mxu0
        %v3016 = vadd.f32 %v2870, %v3015
        %3017 = vmatprep.mubr.f32.mxu0 0.0
        %v3018 = vand.u32 %v2563, 4294901760
        %v3019 = vsub.f32 %v2563, %v3018
        %3020 = vmatmul.mubr.f32.gmra.mrb[0].mxu0 %v3019
        %v3021 = vpop.f32.mrb[0].mxu0
        %v3022 = vadd.f32 %v2875, %v3021
        %v3023 = vpop.f32.mrb[0].mxu0
        %v3024 = vadd.f32 %v2877, %v3023
        %3025 = vmatprep.mubr.f32.mxu0 0.0
        %v3026 = vand.u32 %v2566, 4294901760
        %v3027 = vsub.f32 %v2566, %v3026
        %3028 = vmatmul.mubr.f32.gmra.mrb[0].mxu0 %v3027
        %v3029 = vpop.f32.mrb[0].mxu0
        %v3030 = vadd.f32 %v2882, %v3029
        %v3031 = vpop.f32.mrb[0].mxu0
        %v3032 = vadd.f32 %v2884, %v3031
        %3033 = vmatprep.mubr.f32.mxu0 0.0
        %v3034 = vand.u32 %v2569, 4294901760
        %v3035 = vsub.f32 %v2569, %v3034
        %3036 = vmatmul.mubr.f32.gmra.mrb[0].mxu0 %v3035
        %v3037 = vpop.f32.mrb[0].mxu0
        %v3038 = vadd.f32 %v2889, %v3037
        %v3039 = vpop.f32.mrb[0].mxu0
        %v3040 = vadd.f32 %v2891, %v3039
        %3041 = vdwg.mxu0
        %v3042 = vand.u32 %v2540, 4294901760
        %3043 = vmatprep.subr.mxu0 %v3042
        %v3044 = vand.u32 %v2539, 4294901760
        %3045 = vmatpush1.msra.mxu0 %v3044
        %3046 = vmatprep.subr.mxu0 0.0
        %3047 = vmatpush1.msra.mxu0 0.0
        %3048 = vmatprep.subr.mxu0 0.0
        %3049 = vmatpush1.msra.mxu0 0.0
        %3050 = vmatprep.subr.mxu0 0.0
        %3051 = vmatpush1.msra.mxu0 0.0
        %3052 = vmatprep.subr.mxu0 0.0
        %3053 = vmatpush1.msra.mxu0 0.0
        %3054 = vmatprep.subr.mxu0 0.0
        %3055 = vmatpush1.msra.mxu0 0.0
        %3056 = vmatprep.subr.mxu0 0.0
        %3057 = vmatpush1.msra.mxu0 0.0
        %3058 = vmatprep.subr.mxu0 0.0
        %3059 = vmatpush1.msra.mxu0 0.0
        %3060 = vmatprep.subr.mxu0 0.0
        %3061 = vmatpush1.msra.mxu0 0.0
        %3062 = vmatprep.subr.mxu0 0.0
        %3063 = vmatpush1.msra.mxu0 0.0
        %3064 = vmatprep.subr.mxu0 0.0
        %3065 = vmatpush1.msra.mxu0 0.0
        %3066 = vmatprep.subr.mxu0 0.0
        %3067 = vmatpush1.msra.mxu0 0.0
        %3068 = vmatprep.subr.mxu0 0.0
        %3069 = vmatpush1.msra.mxu0 0.0
        %3070 = vmatprep.subr.mxu0 0.0
        %3071 = vmatpush1.msra.mxu0 0.0
        %3072 = vmatprep.subr.mxu0 0.0
        %3073 = vmatpush1.msra.mxu0 0.0
        %3074 = vmatprep.subr.mxu0 0.0
        %3075 = vmatpush1.msra.mxu0 0.0
        %3076 = vmatprep.subr.mxu0 0.0
        %3077 = vmatpush1.msra.mxu0 0.0
        %3078 = vmatprep.subr.mxu0 0.0
        %3079 = vmatpush1.msra.mxu0 0.0
        %3080 = vmatprep.subr.mxu0 0.0
        %3081 = vmatpush1.msra.mxu0 0.0
        %3082 = vmatprep.subr.mxu0 0.0
        %3083 = vmatpush1.msra.mxu0 0.0
        %3084 = vmatprep.subr.mxu0 0.0
        %3085 = vmatpush1.msra.mxu0 0.0
        %3086 = vmatprep.subr.mxu0 0.0
        %3087 = vmatpush1.msra.mxu0 0.0
        %3088 = vmatprep.subr.mxu0 0.0
        %3089 = vmatpush1.msra.mxu0 0.0
        %3090 = vmatprep.subr.mxu0 0.0
        %3091 = vmatpush1.msra.mxu0 0.0
        %3092 = vmatprep.subr.mxu0 0.0
        %3093 = vmatpush1.msra.mxu0 0.0
        %3094 = vmatprep.subr.mxu0 0.0
        %3095 = vmatpush1.msra.mxu0 0.0
        %3096 = vmatprep.subr.mxu0 0.0
        %3097 = vmatpush1.msra.mxu0 0.0
        %3098 = vmatprep.subr.mxu0 0.0
        %3099 = vmatpush1.msra.mxu0 0.0
        %3100 = vmatprep.subr.mxu0 0.0
        %3101 = vmatpush1.msra.mxu0 0.0
        %3102 = vmatprep.subr.mxu0 0.0
        %3103 = vmatpush1.msra.mxu0 0.0
        %3104 = vmatprep.subr.mxu0 0.0
        %3105 = vmatpush1.msra.mxu0 0.0
        %3106 = vmatprep.subr.mxu0 0.0
        %3107 = vmatpush1.msra.mxu0 0.0
        %3108 = vmatprep.mubr.f32.mxu0 0.0
        %v3109 = vand.u32 %v2542, 4294901760
        %v3110 = vsub.f32 %v2542, %v3109
        %v3111 = vand.u32 %v3110, 4294901760
        %3112 = vmatmul.mubr.f32.gmra.mrb[0].mxu0 %v3111
        %v3113 = vpop.f32.mrb[0].mxu0
        %v3114 = vadd.f32 %v2966, %v3113
        %v3115 = vpop.f32.mrb[0].mxu0
        %v3116 = vadd.f32 %v2968, %v3115
        %3117 = vmatprep.mubr.f32.mxu0 0.0
        %v3118 = vand.u32 %v2545, 4294901760
        %v3119 = vsub.f32 %v2545, %v3118
        %v3120 = vand.u32 %v3119, 4294901760
        %3121 = vmatmul.mubr.f32.gmra.mrb[0].mxu0 %v3120
        %v3122 = vpop.f32.mrb[0].mxu0
        %v3123 = vadd.f32 %v2974, %v3122
        %v3124 = vpop.f32.mrb[0].mxu0
        %v3125 = vadd.f32 %v2976, %v3124
        %3126 = vmatprep.mubr.f32.mxu0 0.0
        %v3127 = vand.u32 %v2548, 4294901760
        %v3128 = vsub.f32 %v2548, %v3127
        %v3129 = vand.u32 %v3128, 4294901760
        %3130 = vmatmul.mubr.f32.gmra.mrb[0].mxu0 %v3129
        %v3131 = vpop.f32.mrb[0].mxu0
        %v3132 = vadd.f32 %v2982, %v3131
        %v3133 = vpop.f32.mrb[0].mxu0
        %v3134 = vadd.f32 %v2984, %v3133
        %3135 = vmatprep.mubr.f32.mxu0 0.0
        %v3136 = vand.u32 %v2551, 4294901760
        %v3137 = vsub.f32 %v2551, %v3136
        %v3138 = vand.u32 %v3137, 4294901760
        %3139 = vmatmul.mubr.f32.gmra.mrb[0].mxu0 %v3138
        %v3140 = vpop.f32.mrb[0].mxu0
        %v3141 = vadd.f32 %v2990, %v3140
        %v3142 = vpop.f32.mrb[0].mxu0
        %v3143 = vadd.f32 %v2992, %v3142
        %3144 = vmatprep.mubr.f32.mxu0 0.0
        %v3145 = vand.u32 %v2554, 4294901760
        %v3146 = vsub.f32 %v2554, %v3145
        %v3147 = vand.u32 %v3146, 4294901760
        %3148 = vmatmul.mubr.f32.gmra.mrb[0].mxu0 %v3147
        %v3149 = vpop.f32.mrb[0].mxu0
        %v3150 = vadd.f32 %v2998, %v3149
        %v3151 = vpop.f32.mrb[0].mxu0
        %v3152 = vadd.f32 %v3000, %v3151
        %3153 = vmatprep.mubr.f32.mxu0 0.0
        %v3154 = vand.u32 %v2557, 4294901760
        %v3155 = vsub.f32 %v2557, %v3154
        %v3156 = vand.u32 %v3155, 4294901760
        %3157 = vmatmul.mubr.f32.gmra.mrb[0].mxu0 %v3156
        %v3158 = vpop.f32.mrb[0].mxu0
        %v3159 = vadd.f32 %v3006, %v3158
        %v3160 = vpop.f32.mrb[0].mxu0
        %v3161 = vadd.f32 %v3008, %v3160
        %3162 = vmatprep.mubr.f32.mxu0 0.0
        %v3163 = vand.u32 %v2560, 4294901760
        %v3164 = vsub.f32 %v2560, %v3163
        %v3165 = vand.u32 %v3164, 4294901760
        %3166 = vmatmul.mubr.f32.gmra.mrb[0].mxu0 %v3165
        %v3167 = vpop.f32.mrb[0].mxu0
        %v3168 = vadd.f32 %v3014, %v3167
        %v3169 = vpop.f32.mrb[0].mxu0
        %v3170 = vadd.f32 %v3016, %v3169
        %3171 = vmatprep.mubr.f32.mxu0 0.0
        %v3172 = vand.u32 %v2563, 4294901760
        %v3173 = vsub.f32 %v2563, %v3172
        %v3174 = vand.u32 %v3173, 4294901760
        %3175 = vmatmul.mubr.f32.gmra.mrb[0].mxu0 %v3174
        %v3176 = vpop.f32.mrb[0].mxu0
        %v3177 = vadd.f32 %v3022, %v3176
        %v3178 = vpop.f32.mrb[0].mxu0
        %v3179 = vadd.f32 %v3024, %v3178
        %3180 = vmatprep.mubr.f32.mxu0 0.0
        %v3181 = vand.u32 %v2566, 4294901760
        %v3182 = vsub.f32 %v2566, %v3181
        %v3183 = vand.u32 %v3182, 4294901760
        %3184 = vmatmul.mubr.f32.gmra.mrb[0].mxu0 %v3183
        %v3185 = vpop.f32.mrb[0].mxu0
        %v3186 = vadd.f32 %v3030, %v3185
        %v3187 = vpop.f32.mrb[0].mxu0
        %v3188 = vadd.f32 %v3032, %v3187
        %3189 = vmatprep.mubr.f32.mxu0 0.0
        %v3190 = vand.u32 %v2569, 4294901760
        %v3191 = vsub.f32 %v2569, %v3190
        %v3192 = vand.u32 %v3191, 4294901760
        %3193 = vmatmul.mubr.f32.gmra.mrb[0].mxu0 %v3192
        %v3194 = vpop.f32.mrb[0].mxu0
        %v3195 = vadd.f32 %v3038, %v3194
        %v3196 = vpop.f32.mrb[0].mxu0
        %v3197 = vadd.f32 %v3040, %v3196
        %3198 = vdwg.mxu0
        %v3199 = vand.u32 %v2540, 4294901760
        %v3200 = vsub.f32 %v2540, %v3199
        %v3201 = vand.u32 %v3200, 4294901760
        %3202 = vmatprep.subr.mxu0 %v3201
        %v3203 = vand.u32 %v2539, 4294901760
        %v3204 = vsub.f32 %v2539, %v3203
        %v3205 = vand.u32 %v3204, 4294901760
        %3206 = vmatpush1.msra.mxu0 %v3205
        %3207 = vmatprep.subr.mxu0 0.0
        %3208 = vmatpush1.msra.mxu0 0.0
        %3209 = vmatprep.subr.mxu0 0.0
        %3210 = vmatpush1.msra.mxu0 0.0
        %3211 = vmatprep.subr.mxu0 0.0
        %3212 = vmatpush1.msra.mxu0 0.0
        %3213 = vmatprep.subr.mxu0 0.0
        %3214 = vmatpush1.msra.mxu0 0.0
        %3215 = vmatprep.subr.mxu0 0.0
        %3216 = vmatpush1.msra.mxu0 0.0
        %3217 = vmatprep.subr.mxu0 0.0
        %3218 = vmatpush1.msra.mxu0 0.0
        %3219 = vmatprep.subr.mxu0 0.0
        %3220 = vmatpush1.msra.mxu0 0.0
        %3221 = vmatprep.subr.mxu0 0.0
        %3222 = vmatpush1.msra.mxu0 0.0
        %3223 = vmatprep.subr.mxu0 0.0
        %3224 = vmatpush1.msra.mxu0 0.0
        %3225 = vmatprep.subr.mxu0 0.0
        %3226 = vmatpush1.msra.mxu0 0.0
        %3227 = vmatprep.subr.mxu0 0.0
        %3228 = vmatpush1.msra.mxu0 0.0
        %3229 = vmatprep.subr.mxu0 0.0
        %3230 = vmatpush1.msra.mxu0 0.0
        %3231 = vmatprep.subr.mxu0 0.0
        %3232 = vmatpush1.msra.mxu0 0.0
        %3233 = vmatprep.subr.mxu0 0.0
        %3234 = vmatpush1.msra.mxu0 0.0
        %3235 = vmatprep.subr.mxu0 0.0
        %3236 = vmatpush1.msra.mxu0 0.0
        %3237 = vmatprep.subr.mxu0 0.0
        %3238 = vmatpush1.msra.mxu0 0.0
        %3239 = vmatprep.subr.mxu0 0.0
        %3240 = vmatpush1.msra.mxu0 0.0
        %3241 = vmatprep.subr.mxu0 0.0
        %3242 = vmatpush1.msra.mxu0 0.0
        %3243 = vmatprep.subr.mxu0 0.0
        %3244 = vmatpush1.msra.mxu0 0.0
        %3245 = vmatprep.subr.mxu0 0.0
        %3246 = vmatpush1.msra.mxu0 0.0
        %3247 = vmatprep.subr.mxu0 0.0
        %3248 = vmatpush1.msra.mxu0 0.0
        %3249 = vmatprep.subr.mxu0 0.0
        %3250 = vmatpush1.msra.mxu0 0.0
        %3251 = vmatprep.subr.mxu0 0.0
        %3252 = vmatpush1.msra.mxu0 0.0
        %3253 = vmatprep.subr.mxu0 0.0
        %3254 = vmatpush1.msra.mxu0 0.0
        %3255 = vmatprep.subr.mxu0 0.0
        %3256 = vmatpush1.msra.mxu0 0.0
        %3257 = vmatprep.subr.mxu0 0.0
        %3258 = vmatpush1.msra.mxu0 0.0
        %3259 = vmatprep.subr.mxu0 0.0
        %3260 = vmatpush1.msra.mxu0 0.0
        %3261 = vmatprep.subr.mxu0 0.0
        %3262 = vmatpush1.msra.mxu0 0.0
        %3263 = vmatprep.subr.mxu0 0.0
        %3264 = vmatpush1.msra.mxu0 0.0
        %3265 = vmatprep.subr.mxu0 0.0
        %3266 = vmatpush1.msra.mxu0 0.0
        %3267 = vmatprep.subr.mxu0 0.0
        %3268 = vmatpush1.msra.mxu0 0.0
        %3269 = vmatprep.mubr.f32.mxu0 0.0
        %v3270 = vand.u32 %v2542, 4294901760
        %3271 = vmatmul.mubr.f32.gmra.mrb[0].mxu0 %v3270
        %v3272 = vpop.f32.mrb[0].mxu0
        %v3273 = vadd.f32 %v3114, %v3272
        %v3274 = vpop.f32.mrb[0].mxu0
        %v3275 = vadd.f32 %v3116, %v3274
        %3276 = vmatprep.mubr.f32.mxu0 0.0
        %v3277 = vand.u32 %v2545, 4294901760
        %3278 = vmatmul.mubr.f32.gmra.mrb[0].mxu0 %v3277
        %v3279 = vpop.f32.mrb[0].mxu0
        %v3280 = vadd.f32 %v3123, %v3279
        %v3281 = vpop.f32.mrb[0].mxu0
        %v3282 = vadd.f32 %v3125, %v3281
        %3283 = vmatprep.mubr.f32.mxu0 0.0
        %v3284 = vand.u32 %v2548, 4294901760
        %3285 = vmatmul.mubr.f32.gmra.mrb[0].mxu0 %v3284
        %v3286 = vpop.f32.mrb[0].mxu0
        %v3287 = vadd.f32 %v3132, %v3286
        %v3288 = vpop.f32.mrb[0].mxu0
        %v3289 = vadd.f32 %v3134, %v3288
        %3290 = vmatprep.mubr.f32.mxu0 0.0
        %v3291 = vand.u32 %v2551, 4294901760
        %3292 = vmatmul.mubr.f32.gmra.mrb[0].mxu0 %v3291
        %v3293 = vpop.f32.mrb[0].mxu0
        %v3294 = vadd.f32 %v3141, %v3293
        %v3295 = vpop.f32.mrb[0].mxu0
        %v3296 = vadd.f32 %v3143, %v3295
        %3297 = vmatprep.mubr.f32.mxu0 0.0
        %v3298 = vand.u32 %v2554, 4294901760
        %3299 = vmatmul.mubr.f32.gmra.mrb[0].mxu0 %v3298
        %v3300 = vpop.f32.mrb[0].mxu0
        %v3301 = vadd.f32 %v3150, %v3300
        %v3302 = vpop.f32.mrb[0].mxu0
        %v3303 = vadd.f32 %v3152, %v3302
        %3304 = vmatprep.mubr.f32.mxu0 0.0
        %v3305 = vand.u32 %v2557, 4294901760
        %3306 = vmatmul.mubr.f32.gmra.mrb[0].mxu0 %v3305
        %v3307 = vpop.f32.mrb[0].mxu0
        %v3308 = vadd.f32 %v3159, %v3307
        %v3309 = vpop.f32.mrb[0].mxu0
        %v3310 = vadd.f32 %v3161, %v3309
        %3311 = vmatprep.mubr.f32.mxu0 0.0
        %v3312 = vand.u32 %v2560, 4294901760
        %3313 = vmatmul.mubr.f32.gmra.mrb[0].mxu0 %v3312
        %v3314 = vpop.f32.mrb[0].mxu0
        %v3315 = vadd.f32 %v3168, %v3314
        %v3316 = vpop.f32.mrb[0].mxu0
        %v3317 = vadd.f32 %v3170, %v3316
        %3318 = vmatprep.mubr.f32.mxu0 0.0
        %v3319 = vand.u32 %v2563, 4294901760
        %3320 = vmatmul.mubr.f32.gmra.mrb[0].mxu0 %v3319
        %v3321 = vpop.f32.mrb[0].mxu0
        %v3322 = vadd.f32 %v3177, %v3321
        %v3323 = vpop.f32.mrb[0].mxu0
        %v3324 = vadd.f32 %v3179, %v3323
        %3325 = vmatprep.mubr.f32.mxu0 0.0
        %v3326 = vand.u32 %v2566, 4294901760
        %3327 = vmatmul.mubr.f32.gmra.mrb[0].mxu0 %v3326
        %v3328 = vpop.f32.mrb[0].mxu0
        %v3329 = vadd.f32 %v3186, %v3328
        %v3330 = vpop.f32.mrb[0].mxu0
        %v3331 = vadd.f32 %v3188, %v3330
        %3332 = vmatprep.mubr.f32.mxu0 0.0
        %v3333 = vand.u32 %v2569, 4294901760
        %3334 = vmatmul.mubr.f32.gmra.mrb[0].mxu0 %v3333
        %v3335 = vpop.f32.mrb[0].mxu0
        %v3336 = vadd.f32 %v3195, %v3335
        %v3337 = vpop.f32.mrb[0].mxu0
        %v3338 = vadd.f32 %v3197, %v3337
        %3339 = vdwg.mxu0
        %v3340 = vand.u32 %v2540, 4294901760
        %3341 = vmatprep.subr.mxu0 %v3340
        %v3342 = vand.u32 %v2539, 4294901760
        %3343 = vmatpush1.msra.mxu0 %v3342
        %3344 = vmatprep.subr.mxu0 0.0
        %3345 = vmatpush1.msra.mxu0 0.0
        %3346 = vmatprep.subr.mxu0 0.0
        %3347 = vmatpush1.msra.mxu0 0.0
        %3348 = vmatprep.subr.mxu0 0.0
        %3349 = vmatpush1.msra.mxu0 0.0
        %3350 = vmatprep.subr.mxu0 0.0
        %3351 = vmatpush1.msra.mxu0 0.0
        %3352 = vmatprep.subr.mxu0 0.0
        %3353 = vmatpush1.msra.mxu0 0.0
        %3354 = vmatprep.subr.mxu0 0.0
        %3355 = vmatpush1.msra.mxu0 0.0
        %3356 = vmatprep.subr.mxu0 0.0
        %3357 = vmatpush1.msra.mxu0 0.0
        %3358 = vmatprep.subr.mxu0 0.0
        %3359 = vmatpush1.msra.mxu0 0.0
        %3360 = vmatprep.subr.mxu0 0.0
        %3361 = vmatpush1.msra.mxu0 0.0
        %3362 = vmatprep.subr.mxu0 0.0
        %3363 = vmatpush1.msra.mxu0 0.0
        %3364 = vmatprep.subr.mxu0 0.0
        %3365 = vmatpush1.msra.mxu0 0.0
        %3366 = vmatprep.subr.mxu0 0.0
        %3367 = vmatpush1.msra.mxu0 0.0
        %3368 = vmatprep.subr.mxu0 0.0
        %3369 = vmatpush1.msra.mxu0 0.0
        %3370 = vmatprep.subr.mxu0 0.0
        %3371 = vmatpush1.msra.mxu0 0.0
        %3372 = vmatprep.subr.mxu0 0.0
        %3373 = vmatpush1.msra.mxu0 0.0
        %3374 = vmatprep.subr.mxu0 0.0
        %3375 = vmatpush1.msra.mxu0 0.0
        %3376 = vmatprep.subr.mxu0 0.0
        %3377 = vmatpush1.msra.mxu0 0.0
        %3378 = vmatprep.subr.mxu0 0.0
        %3379 = vmatpush1.msra.mxu0 0.0
        %3380 = vmatprep.subr.mxu0 0.0
        %3381 = vmatpush1.msra.mxu0 0.0
        %3382 = vmatprep.subr.mxu0 0.0
        %3383 = vmatpush1.msra.mxu0 0.0
        %3384 = vmatprep.subr.mxu0 0.0
        %3385 = vmatpush1.msra.mxu0 0.0
        %3386 = vmatprep.subr.mxu0 0.0
        %3387 = vmatpush1.msra.mxu0 0.0
        %3388 = vmatprep.subr.mxu0 0.0
        %3389 = vmatpush1.msra.mxu0 0.0
        %3390 = vmatprep.subr.mxu0 0.0
        %3391 = vmatpush1.msra.mxu0 0.0
        %3392 = vmatprep.subr.mxu0 0.0
        %3393 = vmatpush1.msra.mxu0 0.0
        %3394 = vmatprep.subr.mxu0 0.0
        %3395 = vmatpush1.msra.mxu0 0.0
        %3396 = vmatprep.subr.mxu0 0.0
        %3397 = vmatpush1.msra.mxu0 0.0
        %3398 = vmatprep.subr.mxu0 0.0
        %3399 = vmatpush1.msra.mxu0 0.0
        %3400 = vmatprep.subr.mxu0 0.0
        %3401 = vmatpush1.msra.mxu0 0.0
        %3402 = vmatprep.subr.mxu0 0.0
        %3403 = vmatpush1.msra.mxu0 0.0
        %3404 = vmatprep.subr.mxu0 0.0
        %3405 = vmatpush1.msra.mxu0 0.0
        %3406 = vmatprep.mubr.f32.mxu0 0.0
        %v3407 = vand.u32 %v2542, 4294901760
        %3408 = vmatmul.mubr.f32.gmra.mrb[0].mxu0 %v3407
        %v3409 = vpop.f32.mrb[0].mxu0
        %v3410 = vadd.f32 %v3273, %v3409
        %v3411 = vpop.f32.mrb[0].mxu0
        %v3412 = vadd.f32 %v3275, %v3411
        %3413 = vmatprep.mubr.f32.mxu0 0.0
        %v3414 = vand.u32 %v2545, 4294901760
        %3415 = vmatmul.mubr.f32.gmra.mrb[0].mxu0 %v3414
        %v3416 = vpop.f32.mrb[0].mxu0
        %v3417 = vadd.f32 %v3280, %v3416
        %v3418 = vpop.f32.mrb[0].mxu0
        %v3419 = vadd.f32 %v3282, %v3418
        %3420 = vmatprep.mubr.f32.mxu0 0.0
        %v3421 = vand.u32 %v2548, 4294901760
        %3422 = vmatmul.mubr.f32.gmra.mrb[0].mxu0 %v3421
        %v3423 = vpop.f32.mrb[0].mxu0
        %v3424 = vadd.f32 %v3287, %v3423
        %v3425 = vpop.f32.mrb[0].mxu0
        %v3426 = vadd.f32 %v3289, %v3425
        %3427 = vmatprep.mubr.f32.mxu0 0.0
        %v3428 = vand.u32 %v2551, 4294901760
        %3429 = vmatmul.mubr.f32.gmra.mrb[0].mxu0 %v3428
        %v3430 = vpop.f32.mrb[0].mxu0
        %v3431 = vadd.f32 %v3294, %v3430
        %v3432 = vpop.f32.mrb[0].mxu0
        %v3433 = vadd.f32 %v3296, %v3432
        %3434 = vmatprep.mubr.f32.mxu0 0.0
        %v3435 = vand.u32 %v2554, 4294901760
        %3436 = vmatmul.mubr.f32.gmra.mrb[0].mxu0 %v3435
        %v3437 = vpop.f32.mrb[0].mxu0
        %v3438 = vadd.f32 %v3301, %v3437
        %v3439 = vpop.f32.mrb[0].mxu0
        %v3440 = vadd.f32 %v3303, %v3439
        %3441 = vmatprep.mubr.f32.mxu0 0.0
        %v3442 = vand.u32 %v2557, 4294901760
        %3443 = vmatmul.mubr.f32.gmra.mrb[0].mxu0 %v3442
        %v3444 = vpop.f32.mrb[0].mxu0
        %v3445 = vadd.f32 %v3308, %v3444
        %v3446 = vpop.f32.mrb[0].mxu0
        %v3447 = vadd.f32 %v3310, %v3446
        %3448 = vmatprep.mubr.f32.mxu0 0.0
        %v3449 = vand.u32 %v2560, 4294901760
        %3450 = vmatmul.mubr.f32.gmra.mrb[0].mxu0 %v3449
        %v3451 = vpop.f32.mrb[0].mxu0
        %v3452 = vadd.f32 %v3315, %v3451
        %v3453 = vpop.f32.mrb[0].mxu0
        %v3454 = vadd.f32 %v3317, %v3453
        %3455 = vmatprep.mubr.f32.mxu0 0.0
        %v3456 = vand.u32 %v2563, 4294901760
        %3457 = vmatmul.mubr.f32.gmra.mrb[0].mxu0 %v3456
        %v3458 = vpop.f32.mrb[0].mxu0
        %v3459 = vadd.f32 %v3322, %v3458
        %v3460 = vpop.f32.mrb[0].mxu0
        %v3461 = vadd.f32 %v3324, %v3460
        %3462 = vmatprep.mubr.f32.mxu0 0.0
        %v3463 = vand.u32 %v2566, 4294901760
        %3464 = vmatmul.mubr.f32.gmra.mrb[0].mxu0 %v3463
        %v3465 = vpop.f32.mrb[0].mxu0
        %v3466 = vadd.f32 %v3329, %v3465
        %v3467 = vpop.f32.mrb[0].mxu0
        %v3468 = vadd.f32 %v3331, %v3467
        %3469 = vmatprep.mubr.f32.mxu0 0.0
        %v3470 = vand.u32 %v2569, 4294901760
        %3471 = vmatmul.mubr.f32.gmra.mrb[0].mxu0 %v3470
        %v3472 = vpop.f32.mrb[0].mxu0
        %v3473 = vadd.f32 %v3336, %v3472
        %v3474 = vpop.f32.mrb[0].mxu0
        %v3475 = vadd.f32 %v3338, %v3474
        %3476 = vdwg.mxu0
        %v3477 = vcombine.high %v2489, %v2490
        %v3479 = vunpack.c.l.s4 1966171168
        %v3480 = vunpack.c.0.s8 %v3479
        %v3481 = vlaneseq
        %v3482 = vshrl.u32 %v3481, 7
        %v3483 = vsub.s32 %v3480, %v3482
        %v3484 = vrot.slane %v3477, %v3483
        %v3486 = vunpack.c.l.s4 1966171168
        %v3487 = vunpack.c.0.s8 %v3486
        %v3488 = vlaneseq
        %v3489 = vshrl.u32 %v3488, 7
        %v3490 = vsub.s32 %v3487, %v3489
        %v3491 = vrot.slane %v3484, %v3490
        %v3492 = vlaneseq
        %vm3493 = vcmp.ge.s32.totalorder %v3492, 0
        %vm3494 = vcmp.lt.s32.totalorder %v3492, 256
        %vm3495 = vmand %vm3493, %vm3494
        %3496 = vst.msk [vmem:[%s424] sm:$0x3] %vm3495, %v3491
        %v3499 = vcombine.low %v2483, %v2485
        %3501 = vst [vmem:[%s431] sm:$0xff] %v3499
        %3502 = vst [vmem:[%s438] sm:$0xff] %v3410
        %3503 = vst [vmem:[%s438 + $0x8] sm:$0xff] %v3412
        %3504 = vst [vmem:[%s438 + $0x10] sm:$0xff] %v3417
        %3505 = vst [vmem:[%s438 + $0x18] sm:$0xff] %v3419
        %3506 = vst [vmem:[%s438 + $0x20] sm:$0xff] %v3424
        %3507 = vst [vmem:[%s438 + $0x28] sm:$0xff] %v3426
        %3508 = vst [vmem:[%s438 + $0x30] sm:$0xff] %v3431
        %3509 = vst [vmem:[%s438 + $0x38] sm:$0xff] %v3433
        %3510 = vst [vmem:[%s438 + $0x40] sm:$0xff] %v3438
        %3511 = vst [vmem:[%s438 + $0x48] sm:$0xff] %v3440
        %3512 = vst [vmem:[%s438 + $0x50] sm:$0xff] %v3445
        %3513 = vst [vmem:[%s438 + $0x58] sm:$0xff] %v3447
        %3514 = vst [vmem:[%s438 + $0x60] sm:$0xff] %v3452
        %3515 = vst [vmem:[%s438 + $0x68] sm:$0xff] %v3454
        %3516 = vst [vmem:[%s438 + $0x70] sm:$0xff] %v3459
        %3517 = vst [vmem:[%s438 + $0x78] sm:$0xff] %v3461
        %3518 = vst [vmem:[%s438 + $0x80] sm:$0xff] %v3466
        %3519 = vst [vmem:[%s438 + $0x88] sm:$0xff] %v3468
        %3520 = vst [vmem:[%s438 + $0x90] sm:$0xff] %v3473
        %3521 = vst [vmem:[%s438 + $0x98] sm:$0xff] %v3475
        %v3522 = vcombine.low %v2535, %v2536
        %v3524 = vunpack.c.l.s4 1966171168
        %v3525 = vunpack.c.0.s8 %v3524
        %v3526 = vlaneseq
        %v3527 = vshrl.u32 %v3526, 7
        %v3528 = vsub.s32 %v3525, %v3527
        %v3529 = vrot.slane %v3522, %v3528
        %v3531 = vunpack.c.l.s4 1966171168
        %v3532 = vunpack.c.0.s8 %v3531
        %v3533 = vlaneseq
        %v3534 = vshrl.u32 %v3533, 7
        %v3535 = vsub.s32 %v3532, %v3534
        %v3536 = vrot.slane %v3529, %v3535
        %3537 = vst.msk [vmem:[%s445] sm:$0x3] %vm3495, %v3536
        %s3538 = sand.u32 %s197, 1
        %s3539 = scalar_lea.sflag [#allocation4], %s3538
        %s3540 = sand.u32 %s197, 1
        %s3541 = smul.addr %s3540, 2
        %s3542 = scalar_lea.vmem [#allocation5], %s3541
        %s3543 = sand.u32 %s33, 1
        %s3544 = scalar_lea.sflag [#allocation7], %s3543
        %s3545 = sand.u32 %s223, 1
        %s3546 = smul.addr %s3545, 8
        %s3547 = scalar_lea.vmem [#allocation6], %s3546
        %s3548 = sand.u32 %s33, 1
        %s3549 = scalar_lea.sflag [#allocation7], %s3548
        %s3550 = sand.u32 %s249, 1
        %s3551 = smul.addr %s3550, 160
        %s3552 = scalar_lea.vmem [#allocation8], %s3551
        %s3553 = sand.u32 %s275, 1
        %s3554 = scalar_lea.sflag [#allocation10], %s3553
        %s3555 = sand.u32 %s275, 1
        %s3556 = smul.addr %s3555, 2
        %s3557 = scalar_lea.vmem [#allocation9], %s3556
        // Predicated region
        $region49: #{tpu_custom_call.1} parent=43 // pred_check
          %p3558 = pneg %p207
        $region50: #{tpu_custom_call.1} parent=43 // pred_check_branch
          %3560 = sbr.rel (%p3558) target = $region52
        $region51: #{tpu_custom_call.1} parent=43 // pred_region
          %s3562 = ssub.s32 32, 32
          %3563 = vsyncadd %s3539, %s3562
          %s3564 = smul.addr %s33, 2
          %s3565 = smul.addr %s3564, 16
          %s3566 = scalar_lea.hbm %s6, %s3565
          %s3568 = sshll.u32 %s3542, 4
          %s3569 = int_to_ptr.vmem [resolvable:$true] %s3568
          %3571 = dma.vmem_to_hbm [thread:$0]  %s3569, 32, %s3566, %s3539
        $region52: #{tpu_custom_call.1} parent=43 // pred_fallthru
          _
        // Predicated region
        $region53: #{tpu_custom_call.1} parent=43 // pred_check
          %p3572 = pneg %p233
        $region54: #{tpu_custom_call.1} parent=43 // pred_check_branch
          %3574 = sbr.rel (%p3572) target = $region56
        $region55: #{tpu_custom_call.1} parent=43 // pred_region
          %s3576 = ssub.s32 128, 128
          %3577 = vsyncadd %s3544, %s3576
          %s3578 = smul.addr %s33, 2
          %s3579 = smul.addr %s3578, 64
          %s3580 = scalar_lea.hbm %s7, %s3579
          %s3582 = sshll.u32 %s3547, 4
          %s3583 = int_to_ptr.vmem [resolvable:$true] %s3582
          %3585 = dma.vmem_to_hbm [thread:$0]  %s3583, 128, %s3580, %s3544
        $region56: #{tpu_custom_call.1} parent=43 // pred_fallthru
          _
        // Predicated region
        $region57: #{tpu_custom_call.1} parent=43 // pred_check
          %p3586 = pneg %p259
        $region58: #{tpu_custom_call.1} parent=43 // pred_check_branch
          %3588 = sbr.rel (%p3586) target = $region60
        $region59: #{tpu_custom_call.1} parent=43 // pred_region
          %s3590 = ssub.s32 2560, 2560
          %3591 = vsyncadd %s3549, %s3590
          %s3592 = smul.addr %s33, 20
          %s3593 = smul.addr %s3592, 128
          %s3594 = scalar_lea.hbm %s8, %s3593
          %s3595 = sshll.u32 %s3552, 4
          %s3596 = int_to_ptr.vmem [resolvable:$true] %s3595
          %3601 = dma.vmem_to_hbm [thread:$0]  %s3596, 2560, %s3594, %s3549, 256, 256, 16
        $region60: #{tpu_custom_call.1} parent=43 // pred_fallthru
          _
        // Predicated region
        $region61: #{tpu_custom_call.1} parent=43 // pred_check
          %p3602 = pneg %p285
        $region62: #{tpu_custom_call.1} parent=43 // pred_check_branch
          %3604 = sbr.rel (%p3602) target = $region64
        $region63: #{tpu_custom_call.1} parent=43 // pred_region
          %s3606 = ssub.s32 32, 32
          %3607 = vsyncadd %s3554, %s3606
          %s3608 = smul.addr %s33, 2
          %s3609 = smul.addr %s3608, 16
          %s3610 = scalar_lea.hbm %s9, %s3609
          %s3612 = sshll.u32 %s3557, 4
          %s3613 = int_to_ptr.vmem [resolvable:$true] %s3612
          %3615 = dma.vmem_to_hbm [thread:$0]  %s3613, 32, %s3610, %s3554
        $region64: #{tpu_custom_call.1} parent=43 // pred_fallthru
          _
      $region44: #{tpu_custom_call.1} parent=5 // pred_fallthru
        _
      %p3616 = scmp.le.s32.totalorder 2, %s28
      // Predicated region
      $region65: #{tpu_custom_call.1} parent=5 // pred_check
        %p3617 = pneg %p3616
      $region66: #{tpu_custom_call.1} parent=5 // pred_check_branch
        %3619 = sbr.rel (%p3617) target = $region68
      $region67: #{tpu_custom_call.1} parent=5 // pred_region
        %s3620 = ssub.s32 %s28, 2
        // Predicated region
        $region69: #{tpu_custom_call.1} parent=67 // pred_check
          %p3621 = pneg %p213
        $region70: #{tpu_custom_call.1} parent=67 // pred_check_branch
          %3623 = sbr.rel (%p3621) target = $region72
        $region71: #{tpu_custom_call.1} parent=67 // pred_region
          %s3624 = sand.u32 %s198, 1
          %s3625 = scalar_lea.sflag [#allocation4], %s3624
          %s3626 = sand.u32 %s198, 1
          %s3627 = smul.addr %s3626, 2
          %s3628 = scalar_lea.vmem [#allocation5], %s3627
          %3629 = dma.done %s3625, 32
        $region72: #{tpu_custom_call.1} parent=67 // pred_fallthru
          _
        // Predicated region
        $region73: #{tpu_custom_call.1} parent=67 // pred_check
          %p3630 = pneg %p239
        $region74: #{tpu_custom_call.1} parent=67 // pred_check_branch
          %3632 = sbr.rel (%p3630) target = $region76
        $region75: #{tpu_custom_call.1} parent=67 // pred_region
          %s3633 = sand.u32 %s34, 1
          %s3634 = scalar_lea.sflag [#allocation7], %s3633
          %s3635 = sand.u32 %s224, 1
          %s3636 = smul.addr %s3635, 8
          %s3637 = scalar_lea.vmem [#allocation6], %s3636
          %3638 = dma.done %s3634, 128
        $region76: #{tpu_custom_call.1} parent=67 // pred_fallthru
          _
        // Predicated region
        $region77: #{tpu_custom_call.1} parent=67 // pred_check
          %p3639 = pneg %p265
        $region78: #{tpu_custom_call.1} parent=67 // pred_check_branch
          %3641 = sbr.rel (%p3639) target = $region80
        $region79: #{tpu_custom_call.1} parent=67 // pred_region
          %s3642 = sand.u32 %s34, 1
          %s3643 = scalar_lea.sflag [#allocation7], %s3642
          %s3644 = sand.u32 %s250, 1
          %s3645 = smul.addr %s3644, 160
          %s3646 = scalar_lea.vmem [#allocation8], %s3645
          %3647 = dma.done %s3643, 2560
        $region80: #{tpu_custom_call.1} parent=67 // pred_fallthru
          _
        // Predicated region
        $region81: #{tpu_custom_call.1} parent=67 // pred_check
          %p3648 = pneg %p291
        $region82: #{tpu_custom_call.1} parent=67 // pred_check_branch
          %3650 = sbr.rel (%p3648) target = $region84
        $region83: #{tpu_custom_call.1} parent=67 // pred_region
          %s3651 = sand.u32 %s276, 1
          %s3652 = scalar_lea.sflag [#allocation10], %s3651
          %s3653 = sand.u32 %s276, 1
          %s3654 = smul.addr %s3653, 2
          %s3655 = scalar_lea.vmem [#allocation9], %s3654
          %3656 = dma.done %s3652, 32
        $region84: #{tpu_custom_call.1} parent=67 // pred_fallthru
          _
      $region68: #{tpu_custom_call.1} parent=5 // pred_fallthru
        _
    $region6: #{tpu_custom_call.1} parent=1 // loop_footer
      %s32 = sadd.s32 1, %s28
    $region7: #{tpu_custom_call.1} parent=1 // loop_footer_branch
      %27 = sbr.rel target = $region3
    $region8: #{tpu_custom_call.1} parent=1 // loop_exit
      _
    %3657 = vsyncpa [#allocation3], 1
    %s3658 = scalar_lea.sflag [#allocation3], 1
    %3659 = vsyncpa %s3658, 1
    %3660 = vsyncpa [#allocation4], 1
    %s3661 = scalar_lea.sflag [#allocation4], 1
    %3662 = vsyncpa %s3661, 1
    %3663 = vsyncpa [#allocation7], 1
    %s3664 = scalar_lea.sflag [#allocation7], 1
    %3665 = vsyncpa %s3664, 1
    %3666 = vsyncpa [#allocation10], 1
    %s3667 = scalar_lea.sflag [#allocation10], 1
    %3668 = vsyncpa %s3667, 1

</llo_original>
